<compile_context>
chip_gen: v7x
topology: tpu7x:2x2x1
jax: 0.10.0
libtpu: 0.0.40
codegen_flags: <defaults>
</compile_context>

<pallas_src>
import functools

import jax
import jax.numpy as jnp
from jax import lax
from jax.experimental import pallas as pl
from jax.experimental.pallas import tpu as pltpu

EPS = 1e-5      # nn.BatchNorm2d default eps
LANE = 128      # TPU lane width: keep channel axes lane-dense


def _round_up(x, m):
    return (x + m - 1) // m * m


def _vmem_limit_bytes():
    """~3/4 of the per-core VMEM capacity (48 MiB on v7x, 96 MiB on v5e/v6e)."""
    try:
        cap = pltpu.get_tpu_info().vmem_capacity_bytes
    except Exception:
        cap = 64 * 1024 * 1024  # conservative fallback (safe on every chip)
    return int(min(100 * 1024 * 1024, cap * 3 // 4))


def _pick_row_tile(nhw, max_tile):
    """Largest sublane-aligned (multiple-of-8) divisor of NHW that is <= max_tile."""
    t = min(max_tile, nhw)
    t -= t % 8
    for cand in range(t, 0, -8):
        if nhw % cand == 0:
            return cand
    # TODO(synk): for awkward N*H*W values, pad the row axis to a tile multiple
    # and mask pad rows out of the BN statistics instead of one giant block.
    return nhw


def _partial_moments(t):
    """Per-channel (sum, sum-of-squares) of an (rows, C) f32 tile -> (2, C)."""
    return jnp.concatenate(
        [jnp.sum(t, axis=0, keepdims=True),
         jnp.sum(t * t, axis=0, keepdims=True)], axis=0)


# ---------------- stage 1: conv1 (1x1) + BN1 partial stats ----------------
def _conv1x1_stats_kernel(x_ref, w_ref, t_ref, stats_ref):
    # x is already in compute dtype (cast+pad fused in the wrapper) -> no VPU cast.
    t = jnp.dot(x_ref[...], w_ref[...], preferred_element_type=jnp.float32)
    tr = t.astype(t_ref.dtype)
    t_ref[...] = tr
    # stats from the rounded/stored values so the BN fold matches the data read
    # by the next stage exactly.
    stats_ref[0] = _partial_moments(tr.astype(jnp.float32))


# ------- stage 2: BN1 apply + ReLU + conv2 (3x3, pad=1) + BN2 stats -------
def _bn_relu_conv3x3_stats_kernel(H, W, t1_ref, s_ref, b_ref, w2_ref,
                                  t2_ref, stats_ref, pad_ref, col_ref):
    C = pad_ref.shape[-1]
    cd = pad_ref.dtype
    # folded BN1 (per-channel scale/shift) + ReLU in f32, rounded once.
    a = jnp.maximum(t1_ref[0].astype(jnp.float32) * s_ref[...] + b_ref[...], 0.0)
    a = a.astype(cd).reshape(H, W, C)

    # Zero only the 1-pixel border of the padded scratch (the centre is fully
    # overwritten every step, and re-writing the border each step keeps the
    # kernel safe under megacore grid sharding).
    zrow = jnp.zeros((1, W + 2, C), cd)
    pad_ref[0:1, :, :] = zrow
    pad_ref[H + 1:H + 2, :, :] = zrow
    zcol = jnp.zeros((H, 1, C), cd)
    pad_ref[1:H + 1, 0:1, :] = zcol
    pad_ref[1:H + 1, W + 1:W + 2, :] = zcol
    pad_ref[1:H + 1, 1:W + 1, :] = a

    # im2col: 9 shifted taps written lane-concatenated (lane-aligned stores at
    # multiples of 128), then ONE K=9*C matmul keeps the MXU fed and removes
    # the 8 VPU accumulation adds of the previous 9-dot formulation.
    for ky in range(3):
        for kx in range(3):
            t = ky * 3 + kx
            col_ref[:, :, t * C:(t + 1) * C] = pad_ref[ky:ky + H, kx:kx + W, :]
    acc = jnp.dot(col_ref[...].reshape(H * W, 9 * C), w2_ref[...],
                  preferred_element_type=jnp.float32)

    t2 = acc.astype(t2_ref.dtype)
    t2_ref[0] = t2
    stats_ref[0] = _partial_moments(t2.astype(jnp.float32))


# ---------- stage 3: BN2 apply + ReLU + conv3 (1x1) + BN3 stats -----------
def _bn_relu_conv1x1_stats_kernel(x_ref, s_ref, b_ref, w_ref, t_ref, stats_ref):
    a = jnp.maximum(x_ref[...].astype(jnp.float32) * s_ref[...] + b_ref[...], 0.0)
    t = jnp.dot(a.astype(w_ref.dtype), w_ref[...],
                preferred_element_type=jnp.float32)
    tr = t.astype(t_ref.dtype)
    t_ref[...] = tr
    stats_ref[0] = _partial_moments(tr.astype(jnp.float32))


# --------------- stage 4: BN3 apply + residual add + ReLU -----------------
def _bn_add_relu_kernel(t_ref, x_ref, s_ref, b_ref, o_ref):
    y = (t_ref[...].astype(jnp.float32) * s_ref[...] + b_ref[...]
         + x_ref[...].astype(jnp.float32))
    o_ref[...] = jnp.maximum(y, 0.0).astype(o_ref.dtype)


def _fold_bn(partial_stats, gamma, beta, count):
    """Fold BN into y*scale + shift == gamma*(y - mu)*rsqrt(var + eps) + beta."""
    s = jnp.sum(partial_stats, axis=0)                  # (2, C): sum, sumsq
    mean = s[0] / count
    var = jnp.maximum(s[1] / count - mean * mean, 0.0)  # biased batch variance
    scale = gamma * lax.rsqrt(var + EPS)
    shift = beta - mean * scale
    return scale.reshape(1, -1), shift.reshape(1, -1)


def bottleneck_forward(x_nchw, params, *, compute_dtype=jnp.bfloat16,
                       max_row_tile=512):
    """Bottleneck forward (stride=1, downsample=None). NCHW in / NCHW out."""
    w1, w2, w3, g1, b1, g2, b2, g3, b3 = params
    N, Cin, H, W = x_nchw.shape
    Cmid = w1.shape[0]
    Cout = w3.shape[0]
    assert Cout == Cin, "expansion=1, stride=1, downsample=None requires Cin == Cout"
    # TODO(synk): optional `downsample` submodule path not implemented (None here).

    f32 = jnp.float32
    Cip, Cmp, Cop = (_round_up(c, LANE) for c in (Cin, Cmid, Cout))
    NHW = N * H * W
    TM = _pick_row_tile(NHW, max_row_tile)
    n_tiles = NHW // TM
    count = jnp.asarray(NHW, f32)

    # ---- layout glue (plain JAX): NCHW -> flattened NHWC, lane-pad, cast ----
    # TODO(synk): the NCHW<->NHWC transposes and channel pad/slice are extra
    # HBM round trips imposed by the NCHW module interface; keep the surrounding
    # model in lane-padded NHWC (or fuse into producer/consumer) to drop them.
    x_cd = jnp.transpose(x_nchw, (0, 2, 3, 1)).reshape(NHW, Cin)
    x_cd = jnp.pad(x_cd, ((0, 0), (0, Cip - Cin))).astype(compute_dtype)
    w1k = jnp.pad(jnp.transpose(w1[:, :, 0, 0]),
                  ((0, Cip - Cin), (0, Cmp - Cmid))).astype(compute_dtype)
    w2k = jnp.pad(jnp.transpose(w2, (2, 3, 1, 0)).reshape(9, Cmid, Cmid),
                  ((0, 0), (0, Cmp - Cmid), (0, Cmp - Cmid))
                  ).reshape(9 * Cmp, Cmp).astype(compute_dtype)
    w3k = jnp.pad(jnp.transpose(w3[:, :, 0, 0]),
                  ((0, Cmp - Cmid), (0, Cop - Cout))).astype(compute_dtype)
    g1p, b1p = (jnp.pad(v.astype(f32), (0, Cmp - Cmid)) for v in (g1, b1))
    g2p, b2p = (jnp.pad(v.astype(f32), (0, Cmp - Cmid)) for v in (g2, b2))
    g3p, b3p = (jnp.pad(v.astype(f32), (0, Cop - Cout)) for v in (g3, b3))

    cparams = pltpu.CompilerParams(dimension_semantics=("parallel",),
                                   vmem_limit_bytes=_vmem_limit_bytes())

    # ---- stage 1: conv1 + BN1 partial stats (grid over row tiles) ----
    t1, p1 = pl.pallas_call(
        _conv1x1_stats_kernel,
        grid=(n_tiles,),
        in_specs=[pl.BlockSpec((TM, Cip), lambda i: (i, 0)),
                  pl.BlockSpec((Cip, Cmp), lambda i: (0, 0))],
        out_specs=(pl.BlockSpec((TM, Cmp), lambda i: (i, 0)),
                   pl.BlockSpec((1, 2, Cmp), lambda i: (i, 0, 0))),
        out_shape=(jax.ShapeDtypeStruct((NHW, Cmp), compute_dtype),
                   jax.ShapeDtypeStruct((n_tiles, 2, Cmp), f32)),
        compiler_params=cparams,
    )(x_cd, w1k)
    scale1, shift1 = _fold_bn(p1, g1p, b1p, count)

    # ---- stage 2: BN1 + ReLU + 3x3 conv (im2col) + BN2 stats (grid over images) ----
    # TODO(synk): for very large H*W (ResNet 56x56+ on v7x's 64 MiB VMEM) tile H
    # with a +/-1-row halo via manual DMA instead of whole-image blocks.
    # TODO(synk): mark the resident w2k / scale / shift blocks with
    # pipeline_mode=pl.Buffered(1) to drop their second DMA buffer on v7x.
    t2, p2 = pl.pallas_call(
        functools.partial(_bn_relu_conv3x3_stats_kernel, H, W),
        grid=(N,),
        in_specs=[pl.BlockSpec((1, H * W, Cmp), lambda n: (n, 0, 0)),
                  pl.BlockSpec((1, Cmp), lambda n: (0, 0)),
                  pl.BlockSpec((1, Cmp), lambda n: (0, 0)),
                  pl.BlockSpec((9 * Cmp, Cmp), lambda n: (0, 0))],
        out_specs=(pl.BlockSpec((1, H * W, Cmp), lambda n: (n, 0, 0)),
                   pl.BlockSpec((1, 2, Cmp), lambda n: (n, 0, 0))),
        out_shape=(jax.ShapeDtypeStruct((N, H * W, Cmp), compute_dtype),
                   jax.ShapeDtypeStruct((N, 2, Cmp), f32)),
        scratch_shapes=[pltpu.VMEM((H + 2, W + 2, Cmp), compute_dtype),
                        pltpu.VMEM((H, W, 9 * Cmp), compute_dtype)],
        compiler_params=cparams,
    )(t1.reshape(N, H * W, Cmp), scale1, shift1, w2k)
    scale2, shift2 = _fold_bn(p2, g2p, b2p, count)

    # ---- stage 3: BN2 + ReLU + conv3 + BN3 partial stats (grid over row tiles) ----
    t3, p3 = pl.pallas_call(
        _bn_relu_conv1x1_stats_kernel,
        grid=(n_tiles,),
        in_specs=[pl.BlockSpec((TM, Cmp), lambda i: (i, 0)),
                  pl.BlockSpec((1, Cmp), lambda i: (0, 0)),
                  pl.BlockSpec((1, Cmp), lambda i: (0, 0)),
                  pl.BlockSpec((Cmp, Cop), lambda i: (0, 0))],
        out_specs=(pl.BlockSpec((TM, Cop), lambda i: (i, 0)),
                   pl.BlockSpec((1, 2, Cop), lambda i: (i, 0, 0))),
        out_shape=(jax.ShapeDtypeStruct((NHW, Cop), compute_dtype),
                   jax.ShapeDtypeStruct((n_tiles, 2, Cop), f32)),
        compiler_params=cparams,
    )(t2.reshape(NHW, Cmp), scale2, shift2, w3k)
    scale3, shift3 = _fold_bn(p3, g3p, b3p, count)

    # ---- stage 4: BN3 + residual add + ReLU (grid over row tiles) ----
    out2d = pl.pallas_call(
        _bn_add_relu_kernel,
        grid=(n_tiles,),
        in_specs=[pl.BlockSpec((TM, Cop), lambda i: (i, 0)),
                  pl.BlockSpec((TM, Cip), lambda i: (i, 0)),
                  pl.BlockSpec((1, Cop), lambda i: (0, 0)),
                  pl.BlockSpec((1, Cop), lambda i: (0, 0))],
        out_specs=pl.BlockSpec((TM, Cop), lambda i: (i, 0)),
        out_shape=jax.ShapeDtypeStruct((NHW, Cop), x_nchw.dtype),
        compiler_params=cparams,
    )(t3, x_cd, scale3, shift3)

    out = out2d[:, :Cout].reshape(N, H, W, Cout)
    return jnp.transpose(out, (0, 3, 1, 2))


def reference_forward(x, params):
    """Pure-JAX reference replicating the PyTorch forward (NCHW, f32)."""
    w1, w2, w3, g1, b1, g2, b2, g3, b3 = params

    def bn(y, g, b):
        mu = y.mean(axis=(0, 2, 3), keepdims=True)
        var = ((y - mu) ** 2).mean(axis=(0, 2, 3), keepdims=True)
        return (y - mu) / jnp.sqrt(var + EPS) * g.reshape(1, -1, 1, 1) + b.reshape(1, -1, 1, 1)

    conv = lambda y, w, pad: lax.conv_general_dilated(
        y, w, (1, 1), pad, dimension_numbers=('NCHW', 'OIHW', 'NCHW'))

    h = jnp.maximum(bn(conv(x, w1, 'VALID'), g1, b1), 0.0)
    h = jnp.maximum(bn(conv(h, w2, [(1, 1), (1, 1)]), g2, b2), 0.0)
    h = bn(conv(h, w3, 'VALID'), g3, b3)
    return jnp.maximum(h + x, 0.0)


if __name__ == "__main__":
    key = jax.random.PRNGKey(0)
    N, C, H, W = 2, 4, 16, 16   # in_channels == out_channels, stride=1, downsample=None
    ks = jax.random.split(key, 10)

    x = jax.random.normal(ks[0], (N, C, H, W), jnp.float32)
    # conv weights in PyTorch layout (O, I, kH, kW), deterministic init
    w1 = 0.3 * jax.random.normal(ks[1], (C, C, 1, 1), jnp.float32)
    w2 = 0.1 * jax.random.normal(ks[2], (C, C, 3, 3), jnp.float32)
    w3 = 0.3 * jax.random.normal(ks[3], (C, C, 1, 1), jnp.float32)
    # batchnorm affine params
    g1 = 1.0 + 0.1 * jax.random.normal(ks[4], (C,), jnp.float32)
    b1 = 0.1 * jax.random.normal(ks[5], (C,), jnp.float32)
    g2 = 1.0 + 0.1 * jax.random.normal(ks[6], (C,), jnp.float32)
    b2 = 0.1 * jax.random.normal(ks[7], (C,), jnp.float32)
    g3 = 1.0 + 0.1 * jax.random.normal(ks[8], (C,), jnp.float32)
    b3 = 0.1 * jax.random.normal(ks[9], (C,), jnp.float32)
    params = (w1, w2, w3, g1, b1, g2, b2, g3, b3)

    ref = reference_forward(x, params)

    # 1) f32 MXU path: tight-tolerance semantics check against the reference.
    fwd_f32 = jax.jit(functools.partial(bottleneck_forward, compute_dtype=jnp.float32))
    out_f32 = jax.block_until_ready(fwd_f32(x, params))
    assert out_f32.shape == x.shape, (out_f32.shape, x.shape)
    err_f32 = float(jnp.max(jnp.abs(out_f32 - ref)))
    assert jnp.allclose(out_f32, ref, atol=5e-4, rtol=5e-4), f"f32 max abs err = {err_f32}"

    # 2) bf16 MXU path (default / fast): three chained conv+BN stages plus
    #    bf16-stored intermediates accumulate ~1e-2-scale absolute deviations
    #    from the f32 reference, so the tolerance here is correspondingly loose.
    out_bf16 = jax.block_until_ready(jax.jit(bottleneck_forward)(x, params))
    mean_err = float(jnp.mean(jnp.abs(out_bf16.astype(jnp.float32) - ref)))
    max_err = float(jnp.max(jnp.abs(out_bf16.astype(jnp.float32) - ref)))
    assert mean_err < 2e-2 and max_err < 1.2e-1, (mean_err, max_err)

    print("KERNEL_OK")
</pallas_src>

<mosaic_0001>
module attributes {stable_mosaic.version = 11 : i64} {
  func.func @_conv1x1_stats_kernel(%arg0: i32, %arg1: memref<512x128xf32, #tpu.memory_space<vmem>>, %arg2: memref<128x128xf32, #tpu.memory_space<vmem>>, %arg3: memref<512x128xf32, #tpu.memory_space<vmem>>, %arg4: memref<1x2x128xf32, #tpu.memory_space<vmem>>) attributes {dimension_semantics = [#tpu.dimension_semantics<parallel>], iteration_bounds = array<i64: 1>, scalar_prefetch = 0 : i64, scratch_operands = 0 : i64, tpu.core_type = #tpu.core_type<tc>, window_params = [{transform_indices = @transform_0, window_bounds = array<i64: 512, 128>}, {pipeline_mode = #tpu.pipeline_mode<synchronous>, transform_indices = @transform_1, window_bounds = array<i64: 128, 128>}, {transform_indices = @transform_2, window_bounds = array<i64: 512, 128>}, {transform_indices = @transform_3, window_bounds = array<i64: 1, 2, 128>}]} {
    %c0 = arith.constant 0 : index
    %c0_0 = arith.constant 0 : index
    %0 = vector.load %arg1[%c0, %c0_0] : memref<512x128xf32, #tpu.memory_space<vmem>>, vector<512x128xf32>
    %c0_1 = arith.constant 0 : index
    %c0_2 = arith.constant 0 : index
    %1 = vector.load %arg2[%c0_1, %c0_2] : memref<128x128xf32, #tpu.memory_space<vmem>>, vector<128x128xf32>
    %cst = arith.constant dense<0.000000e+00> : vector<512x128xf32>
    %2 = tpu.matmul %0, %1, %cst {dimension_numbers = #tpu.dot_dimension_numbers<[1], [0], [0], [1], [0, 0, 1, 1], [], []>} : vector<512x128xf32>, vector<128x128xf32>, vector<512x128xf32> -> vector<512x128xf32>
    %c0_3 = arith.constant 0 : index
    %c0_4 = arith.constant 0 : index
    %3 = vector.load %arg3[%c0_3, %c0_4] : memref<512x128xf32, #tpu.memory_space<vmem>>, vector<512x128xf32>
    tpu.vector_store %arg3[%c0_3, %c0_4], %2 {strides = array<i32>} : memref<512x128xf32, #tpu.memory_space<vmem>>, vector<512x128xf32>,
    %cst_5 = arith.constant dense<0.000000e+00> : vector<128xf32>
    %4 = vector.multi_reduction <add>, %2, %cst_5 [0] : vector<512x128xf32> to vector<128xf32>
    %5 = vector.shape_cast %4 : vector<128xf32> to vector<1x128xf32>
    %6 = arith.mulf %2, %2 : vector<512x128xf32>
    %cst_6 = arith.constant dense<0.000000e+00> : vector<128xf32>
    %7 = vector.multi_reduction <add>, %6, %cst_6 [0] : vector<512x128xf32> to vector<128xf32>
    %8 = vector.shape_cast %7 : vector<128xf32> to vector<1x128xf32>
    %9 = tpu.concatenate %5, %8 in 0 : vector<1x128xf32>, vector<1x128xf32> -> vector<2x128xf32>
    %c0_7 = arith.constant 0 : index
    %c0_8 = arith.constant 0 : index
    %c0_9 = arith.constant 0 : index
    %10 = vector.load %arg4[%c0_7, %c0_8, %c0_9] : memref<1x2x128xf32, #tpu.memory_space<vmem>>, vector<1x2x128xf32>
    %11 = vector.shape_cast %10 : vector<1x2x128xf32> to vector<2x128xf32>
    %12 = vector.shape_cast %9 : vector<2x128xf32> to vector<1x2x128xf32>
    tpu.vector_store %arg4[%c0_7, %c0_8, %c0_9], %12 {strides = array<i32>} : memref<1x2x128xf32, #tpu.memory_space<vmem>>, vector<1x2x128xf32>,
    return
  }
  func.func @transform_0(%arg0: i32) -> (i32, i32) {
    %c0_i32 = arith.constant 0 : i32
    %c0_i32_0 = arith.constant 0 : i32
    return %arg0, %c0_i32 : i32, i32
  }
  func.func @transform_1(%arg0: i32) -> (i32, i32) {
    %c0_i32 = arith.constant 0 : i32
    %c0_i32_0 = arith.constant 0 : i32
    %c0_i32_1 = arith.constant 0 : i32
    return %c0_i32, %c0_i32_0 : i32, i32
  }
  func.func @transform_2(%arg0: i32) -> (i32, i32) {
    %c0_i32 = arith.constant 0 : i32
    %c0_i32_0 = arith.constant 0 : i32
    return %arg0, %c0_i32 : i32, i32
  }
  func.func @transform_3(%arg0: i32) -> (i32, i32, i32) {
    %c0_i32 = arith.constant 0 : i32
    %c0_i32_0 = arith.constant 0 : i32
    %c0_i32_1 = arith.constant 0 : i32
    return %arg0, %c0_i32, %c0_i32_0 : i32, i32, i32
  }
}

module attributes {stable_mosaic.version = 11 : i64} {
  func.func @_bn_relu_conv3x3_stats_kernel(%arg0: i32, %arg1: memref<1x256x128xf32, #tpu.memory_space<vmem>>, %arg2: memref<1x128xf32, #tpu.memory_space<vmem>>, %arg3: memref<1x128xf32, #tpu.memory_space<vmem>>, %arg4: memref<1152x128xf32, #tpu.memory_space<vmem>>, %arg5: memref<1x256x128xf32, #tpu.memory_space<vmem>>, %arg6: memref<1x2x128xf32, #tpu.memory_space<vmem>>, %arg7: memref<18x18x128xf32, #tpu.memory_space<vmem>>, %arg8: memref<16x16x1152xf32, #tpu.memory_space<vmem>>) attributes {dimension_semantics = [#tpu.dimension_semantics<parallel>], iteration_bounds = array<i64: 2>, scalar_prefetch = 0 : i64, scratch_operands = 2 : i64, tpu.core_type = #tpu.core_type<tc>, window_params = [{transform_indices = @transform_0, window_bounds = array<i64: 1, 256, 128>}, {pipeline_mode = #tpu.pipeline_mode<synchronous>, transform_indices = @transform_1, window_bounds = array<i64: 1, 128>}, {pipeline_mode = #tpu.pipeline_mode<synchronous>, transform_indices = @transform_2, window_bounds = array<i64: 1, 128>}, {pipeline_mode = #tpu.pipeline_mode<synchronous>, transform_indices = @transform_3, window_bounds = array<i64: 1152, 128>}, {transform_indices = @transform_4, window_bounds = array<i64: 1, 256, 128>}, {transform_indices = @transform_5, window_bounds = array<i64: 1, 2, 128>}]} {
    %c0 = arith.constant 0 : index
    %c0_0 = arith.constant 0 : index
    %c0_1 = arith.constant 0 : index
    %0 = vector.load %arg1[%c0, %c0_0, %c0_1] : memref<1x256x128xf32, #tpu.memory_space<vmem>>, vector<1x256x128xf32>
    %1 = vector.shape_cast %0 : vector<1x256x128xf32> to vector<256x128xf32>
    %c0_2 = arith.constant 0 : index
    %c0_3 = arith.constant 0 : index
    %2 = vector.load %arg2[%c0_2, %c0_3] : memref<1x128xf32, #tpu.memory_space<vmem>>, vector<1x128xf32>
    %3 = vector.broadcast %2 : vector<1x128xf32> to vector<256x128xf32>
    %4 = arith.mulf %1, %3 : vector<256x128xf32>
    %c0_4 = arith.constant 0 : index
    %c0_5 = arith.constant 0 : index
    %5 = vector.load %arg3[%c0_4, %c0_5] : memref<1x128xf32, #tpu.memory_space<vmem>>, vector<1x128xf32>
    %6 = vector.broadcast %5 : vector<1x128xf32> to vector<256x128xf32>
    %7 = arith.addf %4, %6 : vector<256x128xf32>
    %cst = arith.constant 0.000000e+00 : f32
    %8 = vector.broadcast %cst : f32 to vector<256x128xf32>
    %9 = arith.maximumf %7, %8 : vector<256x128xf32>
    %10 = vector.shape_cast %9 : vector<256x128xf32> to vector<16x16x128xf32>
    %cst_6 = arith.constant 0.000000e+00 : f32
    %11 = vector.broadcast %cst_6 : f32 to vector<1x18x128xf32>
    %c0_7 = arith.constant 0 : index
    %c0_8 = arith.constant 0 : index
    %c0_9 = arith.constant 0 : index
    %12 = vector.load %arg7[%c0_7, %c0_8, %c0_9] : memref<18x18x128xf32, #tpu.memory_space<vmem>>, vector<1x18x128xf32>
    tpu.vector_store %arg7[%c0_7, %c0_8, %c0_9], %11 {strides = array<i32>} : memref<18x18x128xf32, #tpu.memory_space<vmem>>, vector<1x18x128xf32>,
    %c17 = arith.constant 17 : index
    %c0_10 = arith.constant 0 : index
    %c0_11 = arith.constant 0 : index
    %13 = vector.load %arg7[%c17, %c0_10, %c0_11] : memref<18x18x128xf32, #tpu.memory_space<vmem>>, vector<1x18x128xf32>
    tpu.vector_store %arg7[%c17, %c0_10, %c0_11], %11 {strides = array<i32>} : memref<18x18x128xf32, #tpu.memory_space<vmem>>, vector<1x18x128xf32>,
    %cst_12 = arith.constant 0.000000e+00 : f32
    %14 = vector.broadcast %cst_12 : f32 to vector<16x1x128xf32>
    %c1 = arith.constant 1 : index
    %c0_13 = arith.constant 0 : index
    %c0_14 = arith.constant 0 : index
    %15 = vector.load %arg7[%c1, %c0_13, %c0_14] : memref<18x18x128xf32, #tpu.memory_space<vmem>>, vector<16x1x128xf32>
    tpu.vector_store %arg7[%c1, %c0_13, %c0_14], %14 {strides = array<i32>} : memref<18x18x128xf32, #tpu.memory_space<vmem>>, vector<16x1x128xf32>,
    %c1_15 = arith.constant 1 : index
    %c17_16 = arith.constant 17 : index
    %c0_17 = arith.constant 0 : index
    %16 = vector.load %arg7[%c1_15, %c17_16, %c0_17] : memref<18x18x128xf32, #tpu.memory_space<vmem>>, vector<16x1x128xf32>
    tpu.vector_store %arg7[%c1_15, %c17_16, %c0_17], %14 {strides = array<i32>} : memref<18x18x128xf32, #tpu.memory_space<vmem>>, vector<16x1x128xf32>,
    %c1_18 = arith.constant 1 : index
    %c1_19 = arith.constant 1 : index
    %c0_20 = arith.constant 0 : index
    %17 = vector.load %arg7[%c1_18, %c1_19, %c0_20] : memref<18x18x128xf32, #tpu.memory_space<vmem>>, vector<16x16x128xf32>
    tpu.vector_store %arg7[%c1_18, %c1_19, %c0_20], %10 {strides = array<i32>} : memref<18x18x128xf32, #tpu.memory_space<vmem>>, vector<16x16x128xf32>,
    %c0_21 = arith.constant 0 : index
    %c0_22 = arith.constant 0 : index
    %c0_23 = arith.constant 0 : index
    %18 = vector.load %arg7[%c0_21, %c0_22, %c0_23] : memref<18x18x128xf32, #tpu.memory_space<vmem>>, vector<16x16x128xf32>
    %c0_24 = arith.constant 0 : index
    %c0_25 = arith.constant 0 : index
    %c0_26 = arith.constant 0 : index
    %19 = vector.load %arg8[%c0_24, %c0_25, %c0_26] : memref<16x16x1152xf32, #tpu.memory_space<vmem>>, vector<16x16x128xf32>
    tpu.vector_store %arg8[%c0_24, %c0_25, %c0_26], %18 {strides = array<i32>} : memref<16x16x1152xf32, #tpu.memory_space<vmem>>, vector<16x16x128xf32>,
    %c0_27 = arith.constant 0 : index
    %c1_28 = arith.constant 1 : index
    %c0_29 = arith.constant 0 : index
    %20 = vector.load %arg7[%c0_27, %c1_28, %c0_29] : memref<18x18x128xf32, #tpu.memory_space<vmem>>, vector<16x16x128xf32>
    %c0_30 = arith.constant 0 : index
    %c0_31 = arith.constant 0 : index
    %c128 = arith.constant 128 : index
    %21 = vector.load %arg8[%c0_30, %c0_31, %c128] : memref<16x16x1152xf32, #tpu.memory_space<vmem>>, vector<16x16x128xf32>
    tpu.vector_store %arg8[%c0_30, %c0_31, %c128], %20 {strides = array<i32>} : memref<16x16x1152xf32, #tpu.memory_space<vmem>>, vector<16x16x128xf32>,
    %c0_32 = arith.constant 0 : index
    %c2 = arith.constant 2 : index
    %c0_33 = arith.constant 0 : index
    %22 = vector.load %arg7[%c0_32, %c2, %c0_33] : memref<18x18x128xf32, #tpu.memory_space<vmem>>, vector<16x16x128xf32>
    %c0_34 = arith.constant 0 : index
    %c0_35 = arith.constant 0 : index
    %c256 = arith.constant 256 : index
    %23 = vector.load %arg8[%c0_34, %c0_35, %c256] : memref<16x16x1152xf32, #tpu.memory_space<vmem>>, vector<16x16x128xf32>
    tpu.vector_store %arg8[%c0_34, %c0_35, %c256], %22 {strides = array<i32>} : memref<16x16x1152xf32, #tpu.memory_space<vmem>>, vector<16x16x128xf32>,
    %c1_36 = arith.constant 1 : index
    %c0_37 = arith.constant 0 : index
    %c0_38 = arith.constant 0 : index
    %24 = vector.load %arg7[%c1_36, %c0_37, %c0_38] : memref<18x18x128xf32, #tpu.memory_space<vmem>>, vector<16x16x128xf32>
    %c0_39 = arith.constant 0 : index
    %c0_40 = arith.constant 0 : index
    %c384 = arith.constant 384 : index
    %25 = vector.load %arg8[%c0_39, %c0_40, %c384] : memref<16x16x1152xf32, #tpu.memory_space<vmem>>, vector<16x16x128xf32>
    tpu.vector_store %arg8[%c0_39, %c0_40, %c384], %24 {strides = array<i32>} : memref<16x16x1152xf32, #tpu.memory_space<vmem>>, vector<16x16x128xf32>,
    %c1_41 = arith.constant 1 : index
    %c1_42 = arith.constant 1 : index
    %c0_43 = arith.constant 0 : index
    %26 = vector.load %arg7[%c1_41, %c1_42, %c0_43] : memref<18x18x128xf32, #tpu.memory_space<vmem>>, vector<16x16x128xf32>
    %c0_44 = arith.constant 0 : index
    %c0_45 = arith.constant 0 : index
    %c512 = arith.constant 512 : index
    %27 = vector.load %arg8[%c0_44, %c0_45, %c512] : memref<16x16x1152xf32, #tpu.memory_space<vmem>>, vector<16x16x128xf32>
    tpu.vector_store %arg8[%c0_44, %c0_45, %c512], %26 {strides = array<i32>} : memref<16x16x1152xf32, #tpu.memory_space<vmem>>, vector<16x16x128xf32>,
    %c1_46 = arith.constant 1 : index
    %c2_47 = arith.constant 2 : index
    %c0_48 = arith.constant 0 : index
    %28 = vector.load %arg7[%c1_46, %c2_47, %c0_48] : memref<18x18x128xf32, #tpu.memory_space<vmem>>, vector<16x16x128xf32>
    %c0_49 = arith.constant 0 : index
    %c0_50 = arith.constant 0 : index
    %c640 = arith.constant 640 : index
    %29 = vector.load %arg8[%c0_49, %c0_50, %c640] : memref<16x16x1152xf32, #tpu.memory_space<vmem>>, vector<16x16x128xf32>
    tpu.vector_store %arg8[%c0_49, %c0_50, %c640], %28 {strides = array<i32>} : memref<16x16x1152xf32, #tpu.memory_space<vmem>>, vector<16x16x128xf32>,
    %c2_51 = arith.constant 2 : index
    %c0_52 = arith.constant 0 : index
    %c0_53 = arith.constant 0 : index
    %30 = vector.load %arg7[%c2_51, %c0_52, %c0_53] : memref<18x18x128xf32, #tpu.memory_space<vmem>>, vector<16x16x128xf32>
    %c0_54 = arith.constant 0 : index
    %c0_55 = arith.constant 0 : index
    %c768 = arith.constant 768 : index
    %31 = vector.load %arg8[%c0_54, %c0_55, %c768] : memref<16x16x1152xf32, #tpu.memory_space<vmem>>, vector<16x16x128xf32>
    tpu.vector_store %arg8[%c0_54, %c0_55, %c768], %30 {strides = array<i32>} : memref<16x16x1152xf32, #tpu.memory_space<vmem>>, vector<16x16x128xf32>,
    %c2_56 = arith.constant 2 : index
    %c1_57 = arith.constant 1 : index
    %c0_58 = arith.constant 0 : index
    %32 = vector.load %arg7[%c2_56, %c1_57, %c0_58] : memref<18x18x128xf32, #tpu.memory_space<vmem>>, vector<16x16x128xf32>
    %c0_59 = arith.constant 0 : index
    %c0_60 = arith.constant 0 : index
    %c896 = arith.constant 896 : index
    %33 = vector.load %arg8[%c0_59, %c0_60, %c896] : memref<16x16x1152xf32, #tpu.memory_space<vmem>>, vector<16x16x128xf32>
    tpu.vector_store %arg8[%c0_59, %c0_60, %c896], %32 {strides = array<i32>} : memref<16x16x1152xf32, #tpu.memory_space<vmem>>, vector<16x16x128xf32>,
    %c2_61 = arith.constant 2 : index
    %c2_62 = arith.constant 2 : index
    %c0_63 = arith.constant 0 : index
    %34 = vector.load %arg7[%c2_61, %c2_62, %c0_63] : memref<18x18x128xf32, #tpu.memory_space<vmem>>, vector<16x16x128xf32>
    %c0_64 = arith.constant 0 : index
    %c0_65 = arith.constant 0 : index
    %c1024 = arith.constant 1024 : index
    %35 = vector.load %arg8[%c0_64, %c0_65, %c1024] : memref<16x16x1152xf32, #tpu.memory_space<vmem>>, vector<16x16x128xf32>
    tpu.vector_store %arg8[%c0_64, %c0_65, %c1024], %34 {strides = array<i32>} : memref<16x16x1152xf32, #tpu.memory_space<vmem>>, vector<16x16x128xf32>,
    %c0_66 = arith.constant 0 : index
    %c0_67 = arith.constant 0 : index
    %c0_68 = arith.constant 0 : index
    %36 = vector.load %arg8[%c0_66, %c0_67, %c0_68] : memref<16x16x1152xf32, #tpu.memory_space<vmem>>, vector<16x16x1152xf32>
    %37 = vector.shape_cast %36 : vector<16x16x1152xf32> to vector<256x1152xf32>
    %c0_69 = arith.constant 0 : index
    %c0_70 = arith.constant 0 : index
    %38 = vector.load %arg4[%c0_69, %c0_70] : memref<1152x128xf32, #tpu.memory_space<vmem>>, vector<1152x128xf32>
    %cst_71 = arith.constant dense<0.000000e+00> : vector<256x128xf32>
    %39 = tpu.matmul %37, %38, %cst_71 {dimension_numbers = #tpu.dot_dimension_numbers<[1], [0], [0], [1], [0, 0, 1, 1], [], []>} : vector<256x1152xf32>, vector<1152x128xf32>, vector<256x128xf32> -> vector<256x128xf32>
    %c0_72 = arith.constant 0 : index
    %c0_73 = arith.constant 0 : index
    %c0_74 = arith.constant 0 : index
    %40 = vector.load %arg5[%c0_72, %c0_73, %c0_74] : memref<1x256x128xf32, #tpu.memory_space<vmem>>, vector<1x256x128xf32>
    %41 = vector.shape_cast %40 : vector<1x256x128xf32> to vector<256x128xf32>
    %42 = vector.shape_cast %39 : vector<256x128xf32> to vector<1x256x128xf32>
    tpu.vector_store %arg5[%c0_72, %c0_73, %c0_74], %42 {strides = array<i32>} : memref<1x256x128xf32, #tpu.memory_space<vmem>>, vector<1x256x128xf32>,
    %cst_75 = arith.constant dense<0.000000e+00> : vector<128xf32>
    %43 = vector.multi_reduction <add>, %39, %cst_75 [0] : vector<256x128xf32> to vector<128xf32>
    %44 = vector.shape_cast %43 : vector<128xf32> to vector<1x128xf32>
    %45 = arith.mulf %39, %39 : vector<256x128xf32>
    %cst_76 = arith.constant dense<0.000000e+00> : vector<128xf32>
    %46 = vector.multi_reduction <add>, %45, %cst_76 [0] : vector<256x128xf32> to vector<128xf32>
    %47 = vector.shape_cast %46 : vector<128xf32> to vector<1x128xf32>
    %48 = tpu.concatenate %44, %47 in 0 : vector<1x128xf32>, vector<1x128xf32> -> vector<2x128xf32>
    %c0_77 = arith.constant 0 : index
    %c0_78 = arith.constant 0 : index
    %c0_79 = arith.constant 0 : index
    %49 = vector.load %arg6[%c0_77, %c0_78, %c0_79] : memref<1x2x128xf32, #tpu.memory_space<vmem>>, vector<1x2x128xf32>
    %50 = vector.shape_cast %49 : vector<1x2x128xf32> to vector<2x128xf32>
    %51 = vector.shape_cast %48 : vector<2x128xf32> to vector<1x2x128xf32>
    tpu.vector_store %arg6[%c0_77, %c0_78, %c0_79], %51 {strides = array<i32>} : memref<1x2x128xf32, #tpu.memory_space<vmem>>, vector<1x2x128xf32>,
    return
  }
  func.func @transform_0(%arg0: i32) -> (i32, i32, i32) {
    %c0_i32 = arith.constant 0 : i32
    %c0_i32_0 = arith.constant 0 : i32
    %c0_i32_1 = arith.constant 0 : i32
    return %arg0, %c0_i32, %c0_i32_0 : i32, i32, i32
  }
  func.func @transform_1(%arg0: i32) -> (i32, i32) {
    %c0_i32 = arith.constant 0 : i32
    %c0_i32_0 = arith.constant 0 : i32
    %c0_i32_1 = arith.constant 0 : i32
    return %c0_i32, %c0_i32_0 : i32, i32
  }
  func.func @transform_2(%arg0: i32) -> (i32, i32) {
    %c0_i32 = arith.constant 0 : i32
    %c0_i32_0 = arith.constant 0 : i32
    %c0_i32_1 = arith.constant 0 : i32
    return %c0_i32, %c0_i32_0 : i32, i32
  }
  func.func @transform_3(%arg0: i32) -> (i32, i32) {
    %c0_i32 = arith.constant 0 : i32
    %c0_i32_0 = arith.constant 0 : i32
    %c0_i32_1 = arith.constant 0 : i32
    return %c0_i32, %c0_i32_0 : i32, i32
  }
  func.func @transform_4(%arg0: i32) -> (i32, i32, i32) {
    %c0_i32 = arith.constant 0 : i32
    %c0_i32_0 = arith.constant 0 : i32
    %c0_i32_1 = arith.constant 0 : i32
    return %arg0, %c0_i32, %c0_i32_0 : i32, i32, i32
  }
  func.func @transform_5(%arg0: i32) -> (i32, i32, i32) {
    %c0_i32 = arith.constant 0 : i32
    %c0_i32_0 = arith.constant 0 : i32
    %c0_i32_1 = arith.constant 0 : i32
    return %arg0, %c0_i32, %c0_i32_0 : i32, i32, i32
  }
}

module attributes {stable_mosaic.version = 11 : i64} {
  func.func @_bn_add_relu_kernel(%arg0: i32, %arg1: memref<512x128xf32, #tpu.memory_space<vmem>>, %arg2: memref<512x128xf32, #tpu.memory_space<vmem>>, %arg3: memref<1x128xf32, #tpu.memory_space<vmem>>, %arg4: memref<1x128xf32, #tpu.memory_space<vmem>>, %arg5: memref<512x128xf32, #tpu.memory_space<vmem>>) attributes {dimension_semantics = [#tpu.dimension_semantics<parallel>], iteration_bounds = array<i64: 1>, scalar_prefetch = 0 : i64, scratch_operands = 0 : i64, tpu.core_type = #tpu.core_type<tc>, window_params = [{transform_indices = @transform_0, window_bounds = array<i64: 512, 128>}, {transform_indices = @transform_1, window_bounds = array<i64: 512, 128>}, {pipeline_mode = #tpu.pipeline_mode<synchronous>, transform_indices = @transform_2, window_bounds = array<i64: 1, 128>}, {pipeline_mode = #tpu.pipeline_mode<synchronous>, transform_indices = @transform_3, window_bounds = array<i64: 1, 128>}, {transform_indices = @transform_4, window_bounds = array<i64: 512, 128>}]} {
    %c0 = arith.constant 0 : index
    %c0_0 = arith.constant 0 : index
    %0 = vector.load %arg1[%c0, %c0_0] : memref<512x128xf32, #tpu.memory_space<vmem>>, vector<512x128xf32>
    %c0_1 = arith.constant 0 : index
    %c0_2 = arith.constant 0 : index
    %1 = vector.load %arg3[%c0_1, %c0_2] : memref<1x128xf32, #tpu.memory_space<vmem>>, vector<1x128xf32>
    %2 = vector.broadcast %1 : vector<1x128xf32> to vector<512x128xf32>
    %3 = arith.mulf %0, %2 : vector<512x128xf32>
    %c0_3 = arith.constant 0 : index
    %c0_4 = arith.constant 0 : index
    %4 = vector.load %arg4[%c0_3, %c0_4] : memref<1x128xf32, #tpu.memory_space<vmem>>, vector<1x128xf32>
    %5 = vector.broadcast %4 : vector<1x128xf32> to vector<512x128xf32>
    %6 = arith.addf %3, %5 : vector<512x128xf32>
    %c0_5 = arith.constant 0 : index
    %c0_6 = arith.constant 0 : index
    %7 = vector.load %arg2[%c0_5, %c0_6] : memref<512x128xf32, #tpu.memory_space<vmem>>, vector<512x128xf32>
    %8 = arith.addf %6, %7 : vector<512x128xf32>
    %cst = arith.constant 0.000000e+00 : f32
    %9 = vector.broadcast %cst : f32 to vector<512x128xf32>
    %10 = arith.maximumf %8, %9 : vector<512x128xf32>
    %c0_7 = arith.constant 0 : index
    %c0_8 = arith.constant 0 : index
    %11 = vector.load %arg5[%c0_7, %c0_8] : memref<512x128xf32, #tpu.memory_space<vmem>>, vector<512x128xf32>
    tpu.vector_store %arg5[%c0_7, %c0_8], %10 {strides = array<i32>} : memref<512x128xf32, #tpu.memory_space<vmem>>, vector<512x128xf32>,
    return
  }
  func.func @transform_0(%arg0: i32) -> (i32, i32) {
    %c0_i32 = arith.constant 0 : i32
    %c0_i32_0 = arith.constant 0 : i32
    return %arg0, %c0_i32 : i32, i32
  }
  func.func @transform_1(%arg0: i32) -> (i32, i32) {
    %c0_i32 = arith.constant 0 : i32
    %c0_i32_0 = arith.constant 0 : i32
    return %arg0, %c0_i32 : i32, i32
  }
  func.func @transform_2(%arg0: i32) -> (i32, i32) {
    %c0_i32 = arith.constant 0 : i32
    %c0_i32_0 = arith.constant 0 : i32
    %c0_i32_1 = arith.constant 0 : i32
    return %c0_i32, %c0_i32_0 : i32, i32
  }
  func.func @transform_3(%arg0: i32) -> (i32, i32) {
    %c0_i32 = arith.constant 0 : i32
    %c0_i32_0 = arith.constant 0 : i32
    %c0_i32_1 = arith.constant 0 : i32
    return %c0_i32, %c0_i32_0 : i32, i32
  }
  func.func @transform_4(%arg0: i32) -> (i32, i32) {
    %c0_i32 = arith.constant 0 : i32
    %c0_i32_0 = arith.constant 0 : i32
    return %arg0, %c0_i32 : i32, i32
  }
}

module attributes {stable_mosaic.version = 11 : i64} {
  func.func @_bn_relu_conv1x1_stats_kernel(%arg0: i32, %arg1: memref<512x128xf32, #tpu.memory_space<vmem>>, %arg2: memref<1x128xf32, #tpu.memory_space<vmem>>, %arg3: memref<1x128xf32, #tpu.memory_space<vmem>>, %arg4: memref<128x128xf32, #tpu.memory_space<vmem>>, %arg5: memref<512x128xf32, #tpu.memory_space<vmem>>, %arg6: memref<1x2x128xf32, #tpu.memory_space<vmem>>) attributes {dimension_semantics = [#tpu.dimension_semantics<parallel>], iteration_bounds = array<i64: 1>, scalar_prefetch = 0 : i64, scratch_operands = 0 : i64, tpu.core_type = #tpu.core_type<tc>, window_params = [{transform_indices = @transform_0, window_bounds = array<i64: 512, 128>}, {pipeline_mode = #tpu.pipeline_mode<synchronous>, transform_indices = @transform_1, window_bounds = array<i64: 1, 128>}, {pipeline_mode = #tpu.pipeline_mode<synchronous>, transform_indices = @transform_2, window_bounds = array<i64: 1, 128>}, {pipeline_mode = #tpu.pipeline_mode<synchronous>, transform_indices = @transform_3, window_bounds = array<i64: 128, 128>}, {transform_indices = @transform_4, window_bounds = array<i64: 512, 128>}, {transform_indices = @transform_5, window_bounds = array<i64: 1, 2, 128>}]} {
    %c0 = arith.constant 0 : index
    %c0_0 = arith.constant 0 : index
    %0 = vector.load %arg1[%c0, %c0_0] : memref<512x128xf32, #tpu.memory_space<vmem>>, vector<512x128xf32>
    %c0_1 = arith.constant 0 : index
    %c0_2 = arith.constant 0 : index
    %1 = vector.load %arg2[%c0_1, %c0_2] : memref<1x128xf32, #tpu.memory_space<vmem>>, vector<1x128xf32>
    %2 = vector.broadcast %1 : vector<1x128xf32> to vector<512x128xf32>
    %3 = arith.mulf %0, %2 : vector<512x128xf32>
    %c0_3 = arith.constant 0 : index
    %c0_4 = arith.constant 0 : index
    %4 = vector.load %arg3[%c0_3, %c0_4] : memref<1x128xf32, #tpu.memory_space<vmem>>, vector<1x128xf32>
    %5 = vector.broadcast %4 : vector<1x128xf32> to vector<512x128xf32>
    %6 = arith.addf %3, %5 : vector<512x128xf32>
    %cst = arith.constant 0.000000e+00 : f32
    %7 = vector.broadcast %cst : f32 to vector<512x128xf32>
    %8 = arith.maximumf %6, %7 : vector<512x128xf32>
    %c0_5 = arith.constant 0 : index
    %c0_6 = arith.constant 0 : index
    %9 = vector.load %arg4[%c0_5, %c0_6] : memref<128x128xf32, #tpu.memory_space<vmem>>, vector<128x128xf32>
    %cst_7 = arith.constant dense<0.000000e+00> : vector<512x128xf32>
    %10 = tpu.matmul %8, %9, %cst_7 {dimension_numbers = #tpu.dot_dimension_numbers<[1], [0], [0], [1], [0, 0, 1, 1], [], []>} : vector<512x128xf32>, vector<128x128xf32>, vector<512x128xf32> -> vector<512x128xf32>
    %c0_8 = arith.constant 0 : index
    %c0_9 = arith.constant 0 : index
    %11 = vector.load %arg5[%c0_8, %c0_9] : memref<512x128xf32, #tpu.memory_space<vmem>>, vector<512x128xf32>
    tpu.vector_store %arg5[%c0_8, %c0_9], %10 {strides = array<i32>} : memref<512x128xf32, #tpu.memory_space<vmem>>, vector<512x128xf32>,
    %cst_10 = arith.constant dense<0.000000e+00> : vector<128xf32>
    %12 = vector.multi_reduction <add>, %10, %cst_10 [0] : vector<512x128xf32> to vector<128xf32>
    %13 = vector.shape_cast %12 : vector<128xf32> to vector<1x128xf32>
    %14 = arith.mulf %10, %10 : vector<512x128xf32>
    %cst_11 = arith.constant dense<0.000000e+00> : vector<128xf32>
    %15 = vector.multi_reduction <add>, %14, %cst_11 [0] : vector<512x128xf32> to vector<128xf32>
    %16 = vector.shape_cast %15 : vector<128xf32> to vector<1x128xf32>
    %17 = tpu.concatenate %13, %16 in 0 : vector<1x128xf32>, vector<1x128xf32> -> vector<2x128xf32>
    %c0_12 = arith.constant 0 : index
    %c0_13 = arith.constant 0 : index
    %c0_14 = arith.constant 0 : index
    %18 = vector.load %arg6[%c0_12, %c0_13, %c0_14] : memref<1x2x128xf32, #tpu.memory_space<vmem>>, vector<1x2x128xf32>
    %19 = vector.shape_cast %18 : vector<1x2x128xf32> to vector<2x128xf32>
    %20 = vector.shape_cast %17 : vector<2x128xf32> to vector<1x2x128xf32>
    tpu.vector_store %arg6[%c0_12, %c0_13, %c0_14], %20 {strides = array<i32>} : memref<1x2x128xf32, #tpu.memory_space<vmem>>, vector<1x2x128xf32>,
    return
  }
  func.func @transform_0(%arg0: i32) -> (i32, i32) {
    %c0_i32 = arith.constant 0 : i32
    %c0_i32_0 = arith.constant 0 : i32
    return %arg0, %c0_i32 : i32, i32
  }
  func.func @transform_1(%arg0: i32) -> (i32, i32) {
    %c0_i32 = arith.constant 0 : i32
    %c0_i32_0 = arith.constant 0 : i32
    %c0_i32_1 = arith.constant 0 : i32
    return %c0_i32, %c0_i32_0 : i32, i32
  }
  func.func @transform_2(%arg0: i32) -> (i32, i32) {
    %c0_i32 = arith.constant 0 : i32
    %c0_i32_0 = arith.constant 0 : i32
    %c0_i32_1 = arith.constant 0 : i32
    return %c0_i32, %c0_i32_0 : i32, i32
  }
  func.func @transform_3(%arg0: i32) -> (i32, i32) {
    %c0_i32 = arith.constant 0 : i32
    %c0_i32_0 = arith.constant 0 : i32
    %c0_i32_1 = arith.constant 0 : i32
    return %c0_i32, %c0_i32_0 : i32, i32
  }
  func.func @transform_4(%arg0: i32) -> (i32, i32) {
    %c0_i32 = arith.constant 0 : i32
    %c0_i32_0 = arith.constant 0 : i32
    return %arg0, %c0_i32 : i32, i32
  }
  func.func @transform_5(%arg0: i32) -> (i32, i32, i32) {
    %c0_i32 = arith.constant 0 : i32
    %c0_i32_0 = arith.constant 0 : i32
    %c0_i32_1 = arith.constant 0 : i32
    return %arg0, %c0_i32, %c0_i32_0 : i32, i32, i32
  }
}

</mosaic_0001>

<llo_original>
// kernel: bottleneck_forward.7
$region0: #{bottleneck_forward.7}
  #allocation0 [shape = 'u32[]', space=smem, size = 0x4, offset = 0x4, fixed_abs, tag = 'smem constant byte address 0x4 - core index']
  #allocation1 [shape = 'u32[144,128]{1,0:T(1,128)}', space=vmem, size = 0x12000, scoped, tag = 'internal scratch']
  %s0 = inlined_call_operand.vmem [shape: f32[512,128], index: 0, kind: input, shape index: {}]
  %s1 = inlined_call_operand.vmem [shape: f32[512,128], index: 1, kind: input, shape index: {}]
  %s2 = inlined_call_operand.vmem [shape: f32[1,128], index: 2, kind: input, shape index: {}]
  %s3 = inlined_call_operand.vmem [shape: f32[1,128], index: 3, kind: input, shape index: {}]
  %s4 = inlined_call_operand.vmem [shape: f32[512,128], index: 4, kind: output, shape index: {}]
  %s5 = sld [smem:[#allocation0]]
  $region26: #{bottleneck_forward.7} parent=0
    _
  %s7 = ssub.s32 1, %s5
  %s8 = scalar_select 0, %s7, %s5
  // Predicated region
  $region2: #{bottleneck_forward.7} parent=0 // pred_check
    _
  $region3: #{bottleneck_forward.7} parent=0 // pred_check_branch
    %10 = sbr.rel (0) target = $region5
  $region4: #{bottleneck_forward.7} parent=0 // pred_region
    _
  $region5: #{bottleneck_forward.7} parent=0 // pred_fallthru
    _
  // Predicated region
  $region6: #{bottleneck_forward.7} parent=0 // pred_check
    _
  $region7: #{bottleneck_forward.7} parent=0 // pred_check_branch
    %12 = sbr.rel (0) target = $region9
  $region8: #{bottleneck_forward.7} parent=0 // pred_region
    _
  $region9: #{bottleneck_forward.7} parent=0 // pred_fallthru
    _
  // Predicated region
  $region10: #{bottleneck_forward.7} parent=0 // pred_check
    _
  $region11: #{bottleneck_forward.7} parent=0 // pred_check_branch
    %14 = sbr.rel (0) target = $region13
  $region12: #{bottleneck_forward.7} parent=0 // pred_region
    _
  $region13: #{bottleneck_forward.7} parent=0 // pred_fallthru
    _
  // Predicated region
  $region14: #{bottleneck_forward.7} parent=0 // pred_check
    _
  $region15: #{bottleneck_forward.7} parent=0 // pred_check_branch
    %16 = sbr.rel (0) target = $region17
  $region16: #{bottleneck_forward.7} parent=0 // pred_region
    _
  $region17: #{bottleneck_forward.7} parent=0 // pred_fallthru
    _
  %v17 = vld [vmem:[%s0] sm:$0xff]
  %v18 = vld [vmem:[%s0 + $0x8] sm:$0xff]
  %v19 = vld [vmem:[%s0 + $0x10] sm:$0xff]
  %v20 = vld [vmem:[%s0 + $0x18] sm:$0xff]
  %v21 = vld [vmem:[%s0 + $0x20] sm:$0xff]
  %v22 = vld [vmem:[%s0 + $0x28] sm:$0xff]
  %v23 = vld [vmem:[%s0 + $0x30] sm:$0xff]
  %v24 = vld [vmem:[%s0 + $0x38] sm:$0xff]
  %v25 = vld [vmem:[%s0 + $0x40] sm:$0xff]
  %v26 = vld [vmem:[%s0 + $0x48] sm:$0xff]
  %v27 = vld [vmem:[%s0 + $0x50] sm:$0xff]
  %v28 = vld [vmem:[%s0 + $0x58] sm:$0xff]
  %v29 = vld [vmem:[%s0 + $0x60] sm:$0xff]
  %v30 = vld [vmem:[%s0 + $0x68] sm:$0xff]
  %v31 = vld [vmem:[%s0 + $0x70] sm:$0xff]
  %v32 = vld [vmem:[%s0 + $0x78] sm:$0xff]
  %v33 = vld [vmem:[%s0 + $0x80] sm:$0xff]
  %v34 = vld [vmem:[%s0 + $0x88] sm:$0xff]
  %v35 = vld [vmem:[%s0 + $0x90] sm:$0xff]
  %v36 = vld [vmem:[%s0 + $0x98] sm:$0xff]
  %v37 = vld [vmem:[%s0 + $0xa0] sm:$0xff]
  %v38 = vld [vmem:[%s0 + $0xa8] sm:$0xff]
  %v39 = vld [vmem:[%s0 + $0xb0] sm:$0xff]
  %v40 = vld [vmem:[%s0 + $0xb8] sm:$0xff]
  %v41 = vld [vmem:[%s0 + $0xc0] sm:$0xff]
  %v42 = vld [vmem:[%s0 + $0xc8] sm:$0xff]
  %v43 = vld [vmem:[%s0 + $0xd0] sm:$0xff]
  %v44 = vld [vmem:[%s0 + $0xd8] sm:$0xff]
  %v45 = vld [vmem:[%s0 + $0xe0] sm:$0xff]
  %v46 = vld [vmem:[%s0 + $0xe8] sm:$0xff]
  %v47 = vld [vmem:[%s0 + $0xf0] sm:$0xff]
  %v48 = vld [vmem:[%s0 + $0xf8] sm:$0xff]
  %v49 = vld [vmem:[%s0 + $0x100] sm:$0xff]
  %v50 = vld [vmem:[%s0 + $0x108] sm:$0xff]
  %v51 = vld [vmem:[%s0 + $0x110] sm:$0xff]
  %v52 = vld [vmem:[%s0 + $0x118] sm:$0xff]
  %v53 = vld [vmem:[%s0 + $0x120] sm:$0xff]
  %v54 = vld [vmem:[%s0 + $0x128] sm:$0xff]
  %v55 = vld [vmem:[%s0 + $0x130] sm:$0xff]
  %v56 = vld [vmem:[%s0 + $0x138] sm:$0xff]
  %v57 = vld [vmem:[%s0 + $0x140] sm:$0xff]
  %v58 = vld [vmem:[%s0 + $0x148] sm:$0xff]
  %v59 = vld [vmem:[%s0 + $0x150] sm:$0xff]
  %v60 = vld [vmem:[%s0 + $0x158] sm:$0xff]
  %v61 = vld [vmem:[%s0 + $0x160] sm:$0xff]
  %v62 = vld [vmem:[%s0 + $0x168] sm:$0xff]
  %v63 = vld [vmem:[%s0 + $0x170] sm:$0xff]
  %v64 = vld [vmem:[%s0 + $0x178] sm:$0xff]
  %v65 = vld [vmem:[%s0 + $0x180] sm:$0xff]
  %v66 = vld [vmem:[%s0 + $0x188] sm:$0xff]
  %v67 = vld [vmem:[%s0 + $0x190] sm:$0xff]
  %v68 = vld [vmem:[%s0 + $0x198] sm:$0xff]
  %v69 = vld [vmem:[%s0 + $0x1a0] sm:$0xff]
  %v70 = vld [vmem:[%s0 + $0x1a8] sm:$0xff]
  %v71 = vld [vmem:[%s0 + $0x1b0] sm:$0xff]
  %v72 = vld [vmem:[%s0 + $0x1b8] sm:$0xff]
  %v73 = vld [vmem:[%s0 + $0x1c0] sm:$0xff]
  %v74 = vld [vmem:[%s0 + $0x1c8] sm:$0xff]
  %v75 = vld [vmem:[%s0 + $0x1d0] sm:$0xff]
  %v76 = vld [vmem:[%s0 + $0x1d8] sm:$0xff]
  %v77 = vld [vmem:[%s0 + $0x1e0] sm:$0xff]
  %v78 = vld [vmem:[%s0 + $0x1e8] sm:$0xff]
  %v79 = vld [vmem:[%s0 + $0x1f0] sm:$0xff]
  %v80 = vld [vmem:[%s0 + $0x1f8] sm:$0xff]
  %v81 = vld [vmem:[%s2] sm:$0x1]
  %v83 = vlaneseq
  %v84 = vshrl.u32 %v83, 7
  %v85 = vsub.s32 0, %v84
  %v86 = vrot.slane %v81, %v85
  %v88 = vmul.f32 %v17, %v86
  %v89 = vmul.f32 %v18, %v86
  %v90 = vmul.f32 %v19, %v86
  %v91 = vmul.f32 %v20, %v86
  %v92 = vmul.f32 %v21, %v86
  %v93 = vmul.f32 %v22, %v86
  %v94 = vmul.f32 %v23, %v86
  %v95 = vmul.f32 %v24, %v86
  %v96 = vmul.f32 %v25, %v86
  %v97 = vmul.f32 %v26, %v86
  %v98 = vmul.f32 %v27, %v86
  %v99 = vmul.f32 %v28, %v86
  %v100 = vmul.f32 %v29, %v86
  %v101 = vmul.f32 %v30, %v86
  %v102 = vmul.f32 %v31, %v86
  %v103 = vmul.f32 %v32, %v86
  %v104 = vmul.f32 %v33, %v86
  %v105 = vmul.f32 %v34, %v86
  %v106 = vmul.f32 %v35, %v86
  %v107 = vmul.f32 %v36, %v86
  %v108 = vmul.f32 %v37, %v86
  %v109 = vmul.f32 %v38, %v86
  %v110 = vmul.f32 %v39, %v86
  %v111 = vmul.f32 %v40, %v86
  %v112 = vmul.f32 %v41, %v86
  %v113 = vmul.f32 %v42, %v86
  %v114 = vmul.f32 %v43, %v86
  %v115 = vmul.f32 %v44, %v86
  %v116 = vmul.f32 %v45, %v86
  %v117 = vmul.f32 %v46, %v86
  %v118 = vmul.f32 %v47, %v86
  %v119 = vmul.f32 %v48, %v86
  %v120 = vmul.f32 %v49, %v86
  %v121 = vmul.f32 %v50, %v86
  %v122 = vmul.f32 %v51, %v86
  %v123 = vmul.f32 %v52, %v86
  %v124 = vmul.f32 %v53, %v86
  %v125 = vmul.f32 %v54, %v86
  %v126 = vmul.f32 %v55, %v86
  %v127 = vmul.f32 %v56, %v86
  %v128 = vmul.f32 %v57, %v86
  %v129 = vmul.f32 %v58, %v86
  %v130 = vmul.f32 %v59, %v86
  %v131 = vmul.f32 %v60, %v86
  %v132 = vmul.f32 %v61, %v86
  %v133 = vmul.f32 %v62, %v86
  %v134 = vmul.f32 %v63, %v86
  %v135 = vmul.f32 %v64, %v86
  %v136 = vmul.f32 %v65, %v86
  %v137 = vmul.f32 %v66, %v86
  %v138 = vmul.f32 %v67, %v86
  %v139 = vmul.f32 %v68, %v86
  %v140 = vmul.f32 %v69, %v86
  %v141 = vmul.f32 %v70, %v86
  %v142 = vmul.f32 %v71, %v86
  %v143 = vmul.f32 %v72, %v86
  %v144 = vmul.f32 %v73, %v86
  %v145 = vmul.f32 %v74, %v86
  %v146 = vmul.f32 %v75, %v86
  %v147 = vmul.f32 %v76, %v86
  %v148 = vmul.f32 %v77, %v86
  %v149 = vmul.f32 %v78, %v86
  %v150 = vmul.f32 %v79, %v86
  %v151 = vmul.f32 %v80, %v86
  %v152 = vld [vmem:[%s3] sm:$0x1]
  %v154 = vlaneseq
  %v155 = vshrl.u32 %v154, 7
  %v156 = vsub.s32 0, %v155
  %v157 = vrot.slane %v152, %v156
  %v159 = vadd.f32 %v88, %v157
  %v160 = vadd.f32 %v89, %v157
  %v161 = vadd.f32 %v90, %v157
  %v162 = vadd.f32 %v91, %v157
  %v163 = vadd.f32 %v92, %v157
  %v164 = vadd.f32 %v93, %v157
  %v165 = vadd.f32 %v94, %v157
  %v166 = vadd.f32 %v95, %v157
  %v167 = vadd.f32 %v96, %v157
  %v168 = vadd.f32 %v97, %v157
  %v169 = vadd.f32 %v98, %v157
  %v170 = vadd.f32 %v99, %v157
  %v171 = vadd.f32 %v100, %v157
  %v172 = vadd.f32 %v101, %v157
  %v173 = vadd.f32 %v102, %v157
  %v174 = vadd.f32 %v103, %v157
  %v175 = vadd.f32 %v104, %v157
  %v176 = vadd.f32 %v105, %v157
  %v177 = vadd.f32 %v106, %v157
  %v178 = vadd.f32 %v107, %v157
  %v179 = vadd.f32 %v108, %v157
  %v180 = vadd.f32 %v109, %v157
  %v181 = vadd.f32 %v110, %v157
  %v182 = vadd.f32 %v111, %v157
  %v183 = vadd.f32 %v112, %v157
  %v184 = vadd.f32 %v113, %v157
  %v185 = vadd.f32 %v114, %v157
  %v186 = vadd.f32 %v115, %v157
  %v187 = vadd.f32 %v116, %v157
  %v188 = vadd.f32 %v117, %v157
  %v189 = vadd.f32 %v118, %v157
  %v190 = vadd.f32 %v119, %v157
  %v191 = vadd.f32 %v120, %v157
  %v192 = vadd.f32 %v121, %v157
  %v193 = vadd.f32 %v122, %v157
  %v194 = vadd.f32 %v123, %v157
  %v195 = vadd.f32 %v124, %v157
  %v196 = vadd.f32 %v125, %v157
  %v197 = vadd.f32 %v126, %v157
  %v198 = vadd.f32 %v127, %v157
  %v199 = vadd.f32 %v128, %v157
  %v200 = vadd.f32 %v129, %v157
  %v201 = vadd.f32 %v130, %v157
  %v202 = vadd.f32 %v131, %v157
  %v203 = vadd.f32 %v132, %v157
  %v204 = vadd.f32 %v133, %v157
  %v205 = vadd.f32 %v134, %v157
  %v206 = vadd.f32 %v135, %v157
  %v207 = vadd.f32 %v136, %v157
  %v208 = vadd.f32 %v137, %v157
  %v209 = vadd.f32 %v138, %v157
  %v210 = vadd.f32 %v139, %v157
  %v211 = vadd.f32 %v140, %v157
  %v212 = vadd.f32 %v141, %v157
  %v213 = vadd.f32 %v142, %v157
  %v214 = vadd.f32 %v143, %v157
  %v215 = vadd.f32 %v144, %v157
  %v216 = vadd.f32 %v145, %v157
  %v217 = vadd.f32 %v146, %v157
  %v218 = vadd.f32 %v147, %v157
  %v219 = vadd.f32 %v148, %v157
  %v220 = vadd.f32 %v149, %v157
  %v221 = vadd.f32 %v150, %v157
  %v222 = vadd.f32 %v151, %v157
  %v223 = vld [vmem:[%s1] sm:$0xff]
  %v224 = vld [vmem:[%s1 + $0x8] sm:$0xff]
  %v225 = vld [vmem:[%s1 + $0x10] sm:$0xff]
  %v226 = vld [vmem:[%s1 + $0x18] sm:$0xff]
  %v227 = vld [vmem:[%s1 + $0x20] sm:$0xff]
  %v228 = vld [vmem:[%s1 + $0x28] sm:$0xff]
  %v229 = vld [vmem:[%s1 + $0x30] sm:$0xff]
  %v230 = vld [vmem:[%s1 + $0x38] sm:$0xff]
  %v231 = vld [vmem:[%s1 + $0x40] sm:$0xff]
  %v232 = vld [vmem:[%s1 + $0x48] sm:$0xff]
  %v233 = vld [vmem:[%s1 + $0x50] sm:$0xff]
  %v234 = vld [vmem:[%s1 + $0x58] sm:$0xff]
  %v235 = vld [vmem:[%s1 + $0x60] sm:$0xff]
  %v236 = vld [vmem:[%s1 + $0x68] sm:$0xff]
  %v237 = vld [vmem:[%s1 + $0x70] sm:$0xff]
  %v238 = vld [vmem:[%s1 + $0x78] sm:$0xff]
  %v239 = vld [vmem:[%s1 + $0x80] sm:$0xff]
  %v240 = vld [vmem:[%s1 + $0x88] sm:$0xff]
  %v241 = vld [vmem:[%s1 + $0x90] sm:$0xff]
  %v242 = vld [vmem:[%s1 + $0x98] sm:$0xff]
  %v243 = vld [vmem:[%s1 + $0xa0] sm:$0xff]
  %v244 = vld [vmem:[%s1 + $0xa8] sm:$0xff]
  %v245 = vld [vmem:[%s1 + $0xb0] sm:$0xff]
  %v246 = vld [vmem:[%s1 + $0xb8] sm:$0xff]
  %v247 = vld [vmem:[%s1 + $0xc0] sm:$0xff]
  %v248 = vld [vmem:[%s1 + $0xc8] sm:$0xff]
  %v249 = vld [vmem:[%s1 + $0xd0] sm:$0xff]
  %v250 = vld [vmem:[%s1 + $0xd8] sm:$0xff]
  %v251 = vld [vmem:[%s1 + $0xe0] sm:$0xff]
  %v252 = vld [vmem:[%s1 + $0xe8] sm:$0xff]
  %v253 = vld [vmem:[%s1 + $0xf0] sm:$0xff]
  %v254 = vld [vmem:[%s1 + $0xf8] sm:$0xff]
  %v255 = vld [vmem:[%s1 + $0x100] sm:$0xff]
  %v256 = vld [vmem:[%s1 + $0x108] sm:$0xff]
  %v257 = vld [vmem:[%s1 + $0x110] sm:$0xff]
  %v258 = vld [vmem:[%s1 + $0x118] sm:$0xff]
  %v259 = vld [vmem:[%s1 + $0x120] sm:$0xff]
  %v260 = vld [vmem:[%s1 + $0x128] sm:$0xff]
  %v261 = vld [vmem:[%s1 + $0x130] sm:$0xff]
  %v262 = vld [vmem:[%s1 + $0x138] sm:$0xff]
  %v263 = vld [vmem:[%s1 + $0x140] sm:$0xff]
  %v264 = vld [vmem:[%s1 + $0x148] sm:$0xff]
  %v265 = vld [vmem:[%s1 + $0x150] sm:$0xff]
  %v266 = vld [vmem:[%s1 + $0x158] sm:$0xff]
  %v267 = vld [vmem:[%s1 + $0x160] sm:$0xff]
  %v268 = vld [vmem:[%s1 + $0x168] sm:$0xff]
  %v269 = vld [vmem:[%s1 + $0x170] sm:$0xff]
  %v270 = vld [vmem:[%s1 + $0x178] sm:$0xff]
  %v271 = vld [vmem:[%s1 + $0x180] sm:$0xff]
  %v272 = vld [vmem:[%s1 + $0x188] sm:$0xff]
  %v273 = vld [vmem:[%s1 + $0x190] sm:$0xff]
  %v274 = vld [vmem:[%s1 + $0x198] sm:$0xff]
  %v275 = vld [vmem:[%s1 + $0x1a0] sm:$0xff]
  %v276 = vld [vmem:[%s1 + $0x1a8] sm:$0xff]
  %v277 = vld [vmem:[%s1 + $0x1b0] sm:$0xff]
  %v278 = vld [vmem:[%s1 + $0x1b8] sm:$0xff]
  %v279 = vld [vmem:[%s1 + $0x1c0] sm:$0xff]
  %v280 = vld [vmem:[%s1 + $0x1c8] sm:$0xff]
  %v281 = vld [vmem:[%s1 + $0x1d0] sm:$0xff]
  %v282 = vld [vmem:[%s1 + $0x1d8] sm:$0xff]
  %v283 = vld [vmem:[%s1 + $0x1e0] sm:$0xff]
  %v284 = vld [vmem:[%s1 + $0x1e8] sm:$0xff]
  %v285 = vld [vmem:[%s1 + $0x1f0] sm:$0xff]
  %v286 = vld [vmem:[%s1 + $0x1f8] sm:$0xff]
  %v287 = vadd.f32 %v159, %v223
  %v288 = vadd.f32 %v160, %v224
  %v289 = vadd.f32 %v161, %v225
  %v290 = vadd.f32 %v162, %v226
  %v291 = vadd.f32 %v163, %v227
  %v292 = vadd.f32 %v164, %v228
  %v293 = vadd.f32 %v165, %v229
  %v294 = vadd.f32 %v166, %v230
  %v295 = vadd.f32 %v167, %v231
  %v296 = vadd.f32 %v168, %v232
  %v297 = vadd.f32 %v169, %v233
  %v298 = vadd.f32 %v170, %v234
  %v299 = vadd.f32 %v171, %v235
  %v300 = vadd.f32 %v172, %v236
  %v301 = vadd.f32 %v173, %v237
  %v302 = vadd.f32 %v174, %v238
  %v303 = vadd.f32 %v175, %v239
  %v304 = vadd.f32 %v176, %v240
  %v305 = vadd.f32 %v177, %v241
  %v306 = vadd.f32 %v178, %v242
  %v307 = vadd.f32 %v179, %v243
  %v308 = vadd.f32 %v180, %v244
  %v309 = vadd.f32 %v181, %v245
  %v310 = vadd.f32 %v182, %v246
  %v311 = vadd.f32 %v183, %v247
  %v312 = vadd.f32 %v184, %v248
  %v313 = vadd.f32 %v185, %v249
  %v314 = vadd.f32 %v186, %v250
  %v315 = vadd.f32 %v187, %v251
  %v316 = vadd.f32 %v188, %v252
  %v317 = vadd.f32 %v189, %v253
  %v318 = vadd.f32 %v190, %v254
  %v319 = vadd.f32 %v191, %v255
  %v320 = vadd.f32 %v192, %v256
  %v321 = vadd.f32 %v193, %v257
  %v322 = vadd.f32 %v194, %v258
  %v323 = vadd.f32 %v195, %v259
  %v324 = vadd.f32 %v196, %v260
  %v325 = vadd.f32 %v197, %v261
  %v326 = vadd.f32 %v198, %v262
  %v327 = vadd.f32 %v199, %v263
  %v328 = vadd.f32 %v200, %v264
  %v329 = vadd.f32 %v201, %v265
  %v330 = vadd.f32 %v202, %v266
  %v331 = vadd.f32 %v203, %v267
  %v332 = vadd.f32 %v204, %v268
  %v333 = vadd.f32 %v205, %v269
  %v334 = vadd.f32 %v206, %v270
  %v335 = vadd.f32 %v207, %v271
  %v336 = vadd.f32 %v208, %v272
  %v337 = vadd.f32 %v209, %v273
  %v338 = vadd.f32 %v210, %v274
  %v339 = vadd.f32 %v211, %v275
  %v340 = vadd.f32 %v212, %v276
  %v341 = vadd.f32 %v213, %v277
  %v342 = vadd.f32 %v214, %v278
  %v343 = vadd.f32 %v215, %v279
  %v344 = vadd.f32 %v216, %v280
  %v345 = vadd.f32 %v217, %v281
  %v346 = vadd.f32 %v218, %v282
  %v347 = vadd.f32 %v219, %v283
  %v348 = vadd.f32 %v220, %v284
  %v349 = vadd.f32 %v221, %v285
  %v350 = vadd.f32 %v222, %v286
  %v351 = vmax.f32 %v287, 0.0
  %v352 = vmax.f32 %v288, 0.0
  %v353 = vmax.f32 %v289, 0.0
  %v354 = vmax.f32 %v290, 0.0
  %v355 = vmax.f32 %v291, 0.0
  %v356 = vmax.f32 %v292, 0.0
  %v357 = vmax.f32 %v293, 0.0
  %v358 = vmax.f32 %v294, 0.0
  %v359 = vmax.f32 %v295, 0.0
  %v360 = vmax.f32 %v296, 0.0
  %v361 = vmax.f32 %v297, 0.0
  %v362 = vmax.f32 %v298, 0.0
  %v363 = vmax.f32 %v299, 0.0
  %v364 = vmax.f32 %v300, 0.0
  %v365 = vmax.f32 %v301, 0.0
  %v366 = vmax.f32 %v302, 0.0
  %v367 = vmax.f32 %v303, 0.0
  %v368 = vmax.f32 %v304, 0.0
  %v369 = vmax.f32 %v305, 0.0
  %v370 = vmax.f32 %v306, 0.0
  %v371 = vmax.f32 %v307, 0.0
  %v372 = vmax.f32 %v308, 0.0
  %v373 = vmax.f32 %v309, 0.0
  %v374 = vmax.f32 %v310, 0.0
  %v375 = vmax.f32 %v311, 0.0
  %v376 = vmax.f32 %v312, 0.0
  %v377 = vmax.f32 %v313, 0.0
  %v378 = vmax.f32 %v314, 0.0
  %v379 = vmax.f32 %v315, 0.0
  %v380 = vmax.f32 %v316, 0.0
  %v381 = vmax.f32 %v317, 0.0
  %v382 = vmax.f32 %v318, 0.0
  %v383 = vmax.f32 %v319, 0.0
  %v384 = vmax.f32 %v320, 0.0
  %v385 = vmax.f32 %v321, 0.0
  %v386 = vmax.f32 %v322, 0.0
  %v387 = vmax.f32 %v323, 0.0
  %v388 = vmax.f32 %v324, 0.0
  %v389 = vmax.f32 %v325, 0.0
  %v390 = vmax.f32 %v326, 0.0
  %v391 = vmax.f32 %v327, 0.0
  %v392 = vmax.f32 %v328, 0.0
  %v393 = vmax.f32 %v329, 0.0
  %v394 = vmax.f32 %v330, 0.0
  %v395 = vmax.f32 %v331, 0.0
  %v396 = vmax.f32 %v332, 0.0
  %v397 = vmax.f32 %v333, 0.0
  %v398 = vmax.f32 %v334, 0.0
  %v399 = vmax.f32 %v335, 0.0
  %v400 = vmax.f32 %v336, 0.0
  %v401 = vmax.f32 %v337, 0.0
  %v402 = vmax.f32 %v338, 0.0
  %v403 = vmax.f32 %v339, 0.0
  %v404 = vmax.f32 %v340, 0.0
  %v405 = vmax.f32 %v341, 0.0
  %v406 = vmax.f32 %v342, 0.0
  %v407 = vmax.f32 %v343, 0.0
  %v408 = vmax.f32 %v344, 0.0
  %v409 = vmax.f32 %v345, 0.0
  %v410 = vmax.f32 %v346, 0.0
  %v411 = vmax.f32 %v347, 0.0
  %v412 = vmax.f32 %v348, 0.0
  %v413 = vmax.f32 %v349, 0.0
  %v414 = vmax.f32 %v350, 0.0
  %415 = vst [vmem:[%s4] sm:$0xff] %v351
  %416 = vst [vmem:[%s4 + $0x8] sm:$0xff] %v352
  %417 = vst [vmem:[%s4 + $0x10] sm:$0xff] %v353
  %418 = vst [vmem:[%s4 + $0x18] sm:$0xff] %v354
  %419 = vst [vmem:[%s4 + $0x20] sm:$0xff] %v355
  %420 = vst [vmem:[%s4 + $0x28] sm:$0xff] %v356
  %421 = vst [vmem:[%s4 + $0x30] sm:$0xff] %v357
  %422 = vst [vmem:[%s4 + $0x38] sm:$0xff] %v358
  %423 = vst [vmem:[%s4 + $0x40] sm:$0xff] %v359
  %424 = vst [vmem:[%s4 + $0x48] sm:$0xff] %v360
  %425 = vst [vmem:[%s4 + $0x50] sm:$0xff] %v361
  %426 = vst [vmem:[%s4 + $0x58] sm:$0xff] %v362
  %427 = vst [vmem:[%s4 + $0x60] sm:$0xff] %v363
  %428 = vst [vmem:[%s4 + $0x68] sm:$0xff] %v364
  %429 = vst [vmem:[%s4 + $0x70] sm:$0xff] %v365
  %430 = vst [vmem:[%s4 + $0x78] sm:$0xff] %v366
  %431 = vst [vmem:[%s4 + $0x80] sm:$0xff] %v367
  %432 = vst [vmem:[%s4 + $0x88] sm:$0xff] %v368
  %433 = vst [vmem:[%s4 + $0x90] sm:$0xff] %v369
  %434 = vst [vmem:[%s4 + $0x98] sm:$0xff] %v370
  %435 = vst [vmem:[%s4 + $0xa0] sm:$0xff] %v371
  %436 = vst [vmem:[%s4 + $0xa8] sm:$0xff] %v372
  %437 = vst [vmem:[%s4 + $0xb0] sm:$0xff] %v373
  %438 = vst [vmem:[%s4 + $0xb8] sm:$0xff] %v374
  %439 = vst [vmem:[%s4 + $0xc0] sm:$0xff] %v375
  %440 = vst [vmem:[%s4 + $0xc8] sm:$0xff] %v376
  %441 = vst [vmem:[%s4 + $0xd0] sm:$0xff] %v377
  %442 = vst [vmem:[%s4 + $0xd8] sm:$0xff] %v378
  %443 = vst [vmem:[%s4 + $0xe0] sm:$0xff] %v379
  %444 = vst [vmem:[%s4 + $0xe8] sm:$0xff] %v380
  %445 = vst [vmem:[%s4 + $0xf0] sm:$0xff] %v381
  %446 = vst [vmem:[%s4 + $0xf8] sm:$0xff] %v382
  %447 = vst [vmem:[%s4 + $0x100] sm:$0xff] %v383
  %448 = vst [vmem:[%s4 + $0x108] sm:$0xff] %v384
  %449 = vst [vmem:[%s4 + $0x110] sm:$0xff] %v385
  %450 = vst [vmem:[%s4 + $0x118] sm:$0xff] %v386
  %451 = vst [vmem:[%s4 + $0x120] sm:$0xff] %v387
  %452 = vst [vmem:[%s4 + $0x128] sm:$0xff] %v388
  %453 = vst [vmem:[%s4 + $0x130] sm:$0xff] %v389
  %454 = vst [vmem:[%s4 + $0x138] sm:$0xff] %v390
  %455 = vst [vmem:[%s4 + $0x140] sm:$0xff] %v391
  %456 = vst [vmem:[%s4 + $0x148] sm:$0xff] %v392
  %457 = vst [vmem:[%s4 + $0x150] sm:$0xff] %v393
  %458 = vst [vmem:[%s4 + $0x158] sm:$0xff] %v394
  %459 = vst [vmem:[%s4 + $0x160] sm:$0xff] %v395
  %460 = vst [vmem:[%s4 + $0x168] sm:$0xff] %v396
  %461 = vst [vmem:[%s4 + $0x170] sm:$0xff] %v397
  %462 = vst [vmem:[%s4 + $0x178] sm:$0xff] %v398
  %463 = vst [vmem:[%s4 + $0x180] sm:$0xff] %v399
  %464 = vst [vmem:[%s4 + $0x188] sm:$0xff] %v400
  %465 = vst [vmem:[%s4 + $0x190] sm:$0xff] %v401
  %466 = vst [vmem:[%s4 + $0x198] sm:$0xff] %v402
  %467 = vst [vmem:[%s4 + $0x1a0] sm:$0xff] %v403
  %468 = vst [vmem:[%s4 + $0x1a8] sm:$0xff] %v404
  %469 = vst [vmem:[%s4 + $0x1b0] sm:$0xff] %v405
  %470 = vst [vmem:[%s4 + $0x1b8] sm:$0xff] %v406
  %471 = vst [vmem:[%s4 + $0x1c0] sm:$0xff] %v407
  %472 = vst [vmem:[%s4 + $0x1c8] sm:$0xff] %v408
  %473 = vst [vmem:[%s4 + $0x1d0] sm:$0xff] %v409
  %474 = vst [vmem:[%s4 + $0x1d8] sm:$0xff] %v410
  %475 = vst [vmem:[%s4 + $0x1e0] sm:$0xff] %v411
  %476 = vst [vmem:[%s4 + $0x1e8] sm:$0xff] %v412
  %477 = vst [vmem:[%s4 + $0x1f0] sm:$0xff] %v413
  %478 = vst [vmem:[%s4 + $0x1f8] sm:$0xff] %v414
  // Predicated region
  $region18: #{bottleneck_forward.7} parent=0 // pred_check
    _
  $region19: #{bottleneck_forward.7} parent=0 // pred_check_branch
    %480 = sbr.rel (0) target = $region21
  $region20: #{bottleneck_forward.7} parent=0 // pred_region
    _
  $region21: #{bottleneck_forward.7} parent=0 // pred_fallthru
    _
  // Predicated region
  $region22: #{bottleneck_forward.7} parent=0 // pred_check
    _
  $region23: #{bottleneck_forward.7} parent=0 // pred_check_branch
    %482 = sbr.rel (0) target = $region25
  $region24: #{bottleneck_forward.7} parent=0 // pred_region
    _
  $region25: #{bottleneck_forward.7} parent=0 // pred_fallthru
    _

// kernel: bottleneck_forward.4
$region0: #{bottleneck_forward.4}
  #allocation0 [shape = 'u32[]', space=smem, size = 0x4, offset = 0x4, fixed_abs, tag = 'smem constant byte address 0x4 - core index']
  #allocation1 [shape = 'u32[144,128]{1,0:T(1,128)}', space=vmem, size = 0x12000, scoped, tag = 'internal scratch']
  %s0 = inlined_call_operand.vmem [shape: f32[512,128], index: 0, kind: input, shape index: {}]
  %s1 = inlined_call_operand.vmem [shape: f32[128,128], index: 1, kind: input, shape index: {}]
  %s2 = inlined_call_operand.vmem [shape: f32[512,128], index: 2, kind: output, shape index: {0}]
  %s3 = inlined_call_operand.vmem [shape: f32[1,2,128], index: 3, kind: output, shape index: {1}]
  %4 = xla_tuple %s2, %s3
  %s5 = sld [smem:[#allocation0]]
  $region26: #{bottleneck_forward.4} parent=0
    _
  %s7 = ssub.s32 1, %s5
  %s8 = scalar_select 0, %s7, %s5
  // Predicated region
  $region2: #{bottleneck_forward.4} parent=0 // pred_check
    _
  $region3: #{bottleneck_forward.4} parent=0 // pred_check_branch
    %10 = sbr.rel (0) target = $region5
  $region4: #{bottleneck_forward.4} parent=0 // pred_region
    _
  $region5: #{bottleneck_forward.4} parent=0 // pred_fallthru
    _
  // Predicated region
  $region6: #{bottleneck_forward.4} parent=0 // pred_check
    _
  $region7: #{bottleneck_forward.4} parent=0 // pred_check_branch
    %12 = sbr.rel (0) target = $region9
  $region8: #{bottleneck_forward.4} parent=0 // pred_region
    _
  $region9: #{bottleneck_forward.4} parent=0 // pred_fallthru
    _
  %v13 = vld [vmem:[%s0] sm:$0xff]
  %v14 = vld [vmem:[%s0 + $0x8] sm:$0xff]
  %v15 = vld [vmem:[%s0 + $0x10] sm:$0xff]
  %v16 = vld [vmem:[%s0 + $0x18] sm:$0xff]
  %v17 = vld [vmem:[%s0 + $0x20] sm:$0xff]
  %v18 = vld [vmem:[%s0 + $0x28] sm:$0xff]
  %v19 = vld [vmem:[%s0 + $0x30] sm:$0xff]
  %v20 = vld [vmem:[%s0 + $0x38] sm:$0xff]
  %v21 = vld [vmem:[%s0 + $0x40] sm:$0xff]
  %v22 = vld [vmem:[%s0 + $0x48] sm:$0xff]
  %v23 = vld [vmem:[%s0 + $0x50] sm:$0xff]
  %v24 = vld [vmem:[%s0 + $0x58] sm:$0xff]
  %v25 = vld [vmem:[%s0 + $0x60] sm:$0xff]
  %v26 = vld [vmem:[%s0 + $0x68] sm:$0xff]
  %v27 = vld [vmem:[%s0 + $0x70] sm:$0xff]
  %v28 = vld [vmem:[%s0 + $0x78] sm:$0xff]
  %v29 = vld [vmem:[%s0 + $0x80] sm:$0xff]
  %v30 = vld [vmem:[%s0 + $0x88] sm:$0xff]
  %v31 = vld [vmem:[%s0 + $0x90] sm:$0xff]
  %v32 = vld [vmem:[%s0 + $0x98] sm:$0xff]
  %v33 = vld [vmem:[%s0 + $0xa0] sm:$0xff]
  %v34 = vld [vmem:[%s0 + $0xa8] sm:$0xff]
  %v35 = vld [vmem:[%s0 + $0xb0] sm:$0xff]
  %v36 = vld [vmem:[%s0 + $0xb8] sm:$0xff]
  %v37 = vld [vmem:[%s0 + $0xc0] sm:$0xff]
  %v38 = vld [vmem:[%s0 + $0xc8] sm:$0xff]
  %v39 = vld [vmem:[%s0 + $0xd0] sm:$0xff]
  %v40 = vld [vmem:[%s0 + $0xd8] sm:$0xff]
  %v41 = vld [vmem:[%s0 + $0xe0] sm:$0xff]
  %v42 = vld [vmem:[%s0 + $0xe8] sm:$0xff]
  %v43 = vld [vmem:[%s0 + $0xf0] sm:$0xff]
  %v44 = vld [vmem:[%s0 + $0xf8] sm:$0xff]
  %v45 = vld [vmem:[%s0 + $0x100] sm:$0xff]
  %v46 = vld [vmem:[%s0 + $0x108] sm:$0xff]
  %v47 = vld [vmem:[%s0 + $0x110] sm:$0xff]
  %v48 = vld [vmem:[%s0 + $0x118] sm:$0xff]
  %v49 = vld [vmem:[%s0 + $0x120] sm:$0xff]
  %v50 = vld [vmem:[%s0 + $0x128] sm:$0xff]
  %v51 = vld [vmem:[%s0 + $0x130] sm:$0xff]
  %v52 = vld [vmem:[%s0 + $0x138] sm:$0xff]
  %v53 = vld [vmem:[%s0 + $0x140] sm:$0xff]
  %v54 = vld [vmem:[%s0 + $0x148] sm:$0xff]
  %v55 = vld [vmem:[%s0 + $0x150] sm:$0xff]
  %v56 = vld [vmem:[%s0 + $0x158] sm:$0xff]
  %v57 = vld [vmem:[%s0 + $0x160] sm:$0xff]
  %v58 = vld [vmem:[%s0 + $0x168] sm:$0xff]
  %v59 = vld [vmem:[%s0 + $0x170] sm:$0xff]
  %v60 = vld [vmem:[%s0 + $0x178] sm:$0xff]
  %v61 = vld [vmem:[%s0 + $0x180] sm:$0xff]
  %v62 = vld [vmem:[%s0 + $0x188] sm:$0xff]
  %v63 = vld [vmem:[%s0 + $0x190] sm:$0xff]
  %v64 = vld [vmem:[%s0 + $0x198] sm:$0xff]
  %v65 = vld [vmem:[%s0 + $0x1a0] sm:$0xff]
  %v66 = vld [vmem:[%s0 + $0x1a8] sm:$0xff]
  %v67 = vld [vmem:[%s0 + $0x1b0] sm:$0xff]
  %v68 = vld [vmem:[%s0 + $0x1b8] sm:$0xff]
  %v69 = vld [vmem:[%s0 + $0x1c0] sm:$0xff]
  %v70 = vld [vmem:[%s0 + $0x1c8] sm:$0xff]
  %v71 = vld [vmem:[%s0 + $0x1d0] sm:$0xff]
  %v72 = vld [vmem:[%s0 + $0x1d8] sm:$0xff]
  %v73 = vld [vmem:[%s0 + $0x1e0] sm:$0xff]
  %v74 = vld [vmem:[%s0 + $0x1e8] sm:$0xff]
  %v75 = vld [vmem:[%s0 + $0x1f0] sm:$0xff]
  %v76 = vld [vmem:[%s0 + $0x1f8] sm:$0xff]
  %v77 = vld [vmem:[%s1] sm:$0xff]
  %v78 = vld [vmem:[%s1 + $0x8] sm:$0xff]
  %v79 = vld [vmem:[%s1 + $0x10] sm:$0xff]
  %v80 = vld [vmem:[%s1 + $0x18] sm:$0xff]
  %v81 = vld [vmem:[%s1 + $0x20] sm:$0xff]
  %v82 = vld [vmem:[%s1 + $0x28] sm:$0xff]
  %v83 = vld [vmem:[%s1 + $0x30] sm:$0xff]
  %v84 = vld [vmem:[%s1 + $0x38] sm:$0xff]
  %v85 = vld [vmem:[%s1 + $0x40] sm:$0xff]
  %v86 = vld [vmem:[%s1 + $0x48] sm:$0xff]
  %v87 = vld [vmem:[%s1 + $0x50] sm:$0xff]
  %v88 = vld [vmem:[%s1 + $0x58] sm:$0xff]
  %v89 = vld [vmem:[%s1 + $0x60] sm:$0xff]
  %v90 = vld [vmem:[%s1 + $0x68] sm:$0xff]
  %v91 = vld [vmem:[%s1 + $0x70] sm:$0xff]
  %v92 = vld [vmem:[%s1 + $0x78] sm:$0xff]
  %93 = vmatprep.subr.mxu0 0.0
  %94 = vmatpush1.msra.mxu0 %v77
  %95 = vmatprep.subr.mxu0 0.0
  %96 = vmatpush1.msra.mxu0 %v78
  %97 = vmatprep.subr.mxu0 0.0
  %98 = vmatpush1.msra.mxu0 %v79
  %99 = vmatprep.subr.mxu0 0.0
  %100 = vmatpush1.msra.mxu0 %v80
  %101 = vmatprep.subr.mxu0 0.0
  %102 = vmatpush1.msra.mxu0 %v81
  %103 = vmatprep.subr.mxu0 0.0
  %104 = vmatpush1.msra.mxu0 %v82
  %105 = vmatprep.subr.mxu0 0.0
  %106 = vmatpush1.msra.mxu0 %v83
  %107 = vmatprep.subr.mxu0 0.0
  %108 = vmatpush1.msra.mxu0 %v84
  %109 = vmatprep.subr.mxu0 0.0
  %110 = vmatpush1.msra.mxu0 %v85
  %111 = vmatprep.subr.mxu0 0.0
  %112 = vmatpush1.msra.mxu0 %v86
  %113 = vmatprep.subr.mxu0 0.0
  %114 = vmatpush1.msra.mxu0 %v87
  %115 = vmatprep.subr.mxu0 0.0
  %116 = vmatpush1.msra.mxu0 %v88
  %117 = vmatprep.subr.mxu0 0.0
  %118 = vmatpush1.msra.mxu0 %v89
  %119 = vmatprep.subr.mxu0 0.0
  %120 = vmatpush1.msra.mxu0 %v90
  %121 = vmatprep.subr.mxu0 0.0
  %122 = vmatpush1.msra.mxu0 %v91
  %123 = vmatprep.subr.mxu0 0.0
  %124 = vmatpush1.msra.mxu0 %v92
  %125 = vmatprep.subr.mxu0 0.0
  %126 = vmatpush1.msra.mxu0 0.0
  %127 = vmatprep.subr.mxu0 0.0
  %128 = vmatpush1.msra.mxu0 0.0
  %129 = vmatprep.subr.mxu0 0.0
  %130 = vmatpush1.msra.mxu0 0.0
  %131 = vmatprep.subr.mxu0 0.0
  %132 = vmatpush1.msra.mxu0 0.0
  %133 = vmatprep.subr.mxu0 0.0
  %134 = vmatpush1.msra.mxu0 0.0
  %135 = vmatprep.subr.mxu0 0.0
  %136 = vmatpush1.msra.mxu0 0.0
  %137 = vmatprep.subr.mxu0 0.0
  %138 = vmatpush1.msra.mxu0 0.0
  %139 = vmatprep.subr.mxu0 0.0
  %140 = vmatpush1.msra.mxu0 0.0
  %141 = vmatprep.subr.mxu0 0.0
  %142 = vmatpush1.msra.mxu0 0.0
  %143 = vmatprep.subr.mxu0 0.0
  %144 = vmatpush1.msra.mxu0 0.0
  %145 = vmatprep.subr.mxu0 0.0
  %146 = vmatpush1.msra.mxu0 0.0
  %147 = vmatprep.subr.mxu0 0.0
  %148 = vmatpush1.msra.mxu0 0.0
  %149 = vmatprep.subr.mxu0 0.0
  %150 = vmatpush1.msra.mxu0 0.0
  %151 = vmatprep.subr.mxu0 0.0
  %152 = vmatpush1.msra.mxu0 0.0
  %153 = vmatprep.subr.mxu0 0.0
  %154 = vmatpush1.msra.mxu0 0.0
  %155 = vmatprep.subr.mxu0 0.0
  %156 = vmatpush1.msra.mxu0 0.0
  %157 = vmatprep.mubr.f32.mxu0 0.0
  %158 = vmatmul.mubr.f32.gmra.mrb[0].mxu0 %v13
  %v159 = vpop.f32.mrb[0].mxu0
  %v160 = vadd.f32 0.0, %v159
  %v161 = vpop.f32.mrb[0].mxu0
  %162 = vmatprep.mubr.f32.mxu0 0.0
  %163 = vmatmul.mubr.f32.gmra.mrb[0].mxu0 %v14
  %v164 = vpop.f32.mrb[0].mxu0
  %v165 = vadd.f32 0.0, %v164
  %v166 = vpop.f32.mrb[0].mxu0
  %167 = vmatprep.mubr.f32.mxu0 0.0
  %168 = vmatmul.mubr.f32.gmra.mrb[0].mxu0 %v15
  %v169 = vpop.f32.mrb[0].mxu0
  %v170 = vadd.f32 0.0, %v169
  %v171 = vpop.f32.mrb[0].mxu0
  %172 = vmatprep.mubr.f32.mxu0 0.0
  %173 = vmatmul.mubr.f32.gmra.mrb[0].mxu0 %v16
  %v174 = vpop.f32.mrb[0].mxu0
  %v175 = vadd.f32 0.0, %v174
  %v176 = vpop.f32.mrb[0].mxu0
  %177 = vmatprep.mubr.f32.mxu0 0.0
  %178 = vmatmul.mubr.f32.gmra.mrb[0].mxu0 %v17
  %v179 = vpop.f32.mrb[0].mxu0
  %v180 = vadd.f32 0.0, %v179
  %v181 = vpop.f32.mrb[0].mxu0
  %182 = vmatprep.mubr.f32.mxu0 0.0
  %183 = vmatmul.mubr.f32.gmra.mrb[0].mxu0 %v18
  %v184 = vpop.f32.mrb[0].mxu0
  %v185 = vadd.f32 0.0, %v184
  %v186 = vpop.f32.mrb[0].mxu0
  %187 = vmatprep.mubr.f32.mxu0 0.0
  %188 = vmatmul.mubr.f32.gmra.mrb[0].mxu0 %v19
  %v189 = vpop.f32.mrb[0].mxu0
  %v190 = vadd.f32 0.0, %v189
  %v191 = vpop.f32.mrb[0].mxu0
  %192 = vmatprep.mubr.f32.mxu0 0.0
  %193 = vmatmul.mubr.f32.gmra.mrb[0].mxu0 %v20
  %v194 = vpop.f32.mrb[0].mxu0
  %v195 = vadd.f32 0.0, %v194
  %v196 = vpop.f32.mrb[0].mxu0
  %197 = vmatprep.mubr.f32.mxu0 0.0
  %198 = vmatmul.mubr.f32.gmra.mrb[0].mxu0 %v21
  %v199 = vpop.f32.mrb[0].mxu0
  %v200 = vadd.f32 0.0, %v199
  %v201 = vpop.f32.mrb[0].mxu0
  %202 = vmatprep.mubr.f32.mxu0 0.0
  %203 = vmatmul.mubr.f32.gmra.mrb[0].mxu0 %v22
  %v204 = vpop.f32.mrb[0].mxu0
  %v205 = vadd.f32 0.0, %v204
  %v206 = vpop.f32.mrb[0].mxu0
  %207 = vmatprep.mubr.f32.mxu0 0.0
  %208 = vmatmul.mubr.f32.gmra.mrb[0].mxu0 %v23
  %v209 = vpop.f32.mrb[0].mxu0
  %v210 = vadd.f32 0.0, %v209
  %v211 = vpop.f32.mrb[0].mxu0
  %212 = vmatprep.mubr.f32.mxu0 0.0
  %213 = vmatmul.mubr.f32.gmra.mrb[0].mxu0 %v24
  %v214 = vpop.f32.mrb[0].mxu0
  %v215 = vadd.f32 0.0, %v214
  %v216 = vpop.f32.mrb[0].mxu0
  %217 = vmatprep.mubr.f32.mxu0 0.0
  %218 = vmatmul.mubr.f32.gmra.mrb[0].mxu0 %v25
  %v219 = vpop.f32.mrb[0].mxu0
  %v220 = vadd.f32 0.0, %v219
  %v221 = vpop.f32.mrb[0].mxu0
  %222 = vmatprep.mubr.f32.mxu0 0.0
  %223 = vmatmul.mubr.f32.gmra.mrb[0].mxu0 %v26
  %v224 = vpop.f32.mrb[0].mxu0
  %v225 = vadd.f32 0.0, %v224
  %v226 = vpop.f32.mrb[0].mxu0
  %227 = vmatprep.mubr.f32.mxu0 0.0
  %228 = vmatmul.mubr.f32.gmra.mrb[0].mxu0 %v27
  %v229 = vpop.f32.mrb[0].mxu0
  %v230 = vadd.f32 0.0, %v229
  %v231 = vpop.f32.mrb[0].mxu0
  %232 = vmatprep.mubr.f32.mxu0 0.0
  %233 = vmatmul.mubr.f32.gmra.mrb[0].mxu0 %v28
  %v234 = vpop.f32.mrb[0].mxu0
  %v235 = vadd.f32 0.0, %v234
  %v236 = vpop.f32.mrb[0].mxu0
  %237 = vmatprep.mubr.f32.mxu0 0.0
  %238 = vmatmul.mubr.f32.gmra.mrb[0].mxu0 %v29
  %v239 = vpop.f32.mrb[0].mxu0
  %v240 = vadd.f32 0.0, %v239
  %v241 = vpop.f32.mrb[0].mxu0
  %242 = vmatprep.mubr.f32.mxu0 0.0
  %243 = vmatmul.mubr.f32.gmra.mrb[0].mxu0 %v30
  %v244 = vpop.f32.mrb[0].mxu0
  %v245 = vadd.f32 0.0, %v244
  %v246 = vpop.f32.mrb[0].mxu0
  %247 = vmatprep.mubr.f32.mxu0 0.0
  %248 = vmatmul.mubr.f32.gmra.mrb[0].mxu0 %v31
  %v249 = vpop.f32.mrb[0].mxu0
  %v250 = vadd.f32 0.0, %v249
  %v251 = vpop.f32.mrb[0].mxu0
  %252 = vmatprep.mubr.f32.mxu0 0.0
  %253 = vmatmul.mubr.f32.gmra.mrb[0].mxu0 %v32
  %v254 = vpop.f32.mrb[0].mxu0
  %v255 = vadd.f32 0.0, %v254
  %v256 = vpop.f32.mrb[0].mxu0
  %257 = vmatprep.mubr.f32.mxu0 0.0
  %258 = vmatmul.mubr.f32.gmra.mrb[0].mxu0 %v33
  %v259 = vpop.f32.mrb[0].mxu0
  %v260 = vadd.f32 0.0, %v259
  %v261 = vpop.f32.mrb[0].mxu0
  %262 = vmatprep.mubr.f32.mxu0 0.0
  %263 = vmatmul.mubr.f32.gmra.mrb[0].mxu0 %v34
  %v264 = vpop.f32.mrb[0].mxu0
  %v265 = vadd.f32 0.0, %v264
  %v266 = vpop.f32.mrb[0].mxu0
  %267 = vmatprep.mubr.f32.mxu0 0.0
  %268 = vmatmul.mubr.f32.gmra.mrb[0].mxu0 %v35
  %v269 = vpop.f32.mrb[0].mxu0
  %v270 = vadd.f32 0.0, %v269
  %v271 = vpop.f32.mrb[0].mxu0
  %272 = vmatprep.mubr.f32.mxu0 0.0
  %273 = vmatmul.mubr.f32.gmra.mrb[0].mxu0 %v36
  %v274 = vpop.f32.mrb[0].mxu0
  %v275 = vadd.f32 0.0, %v274
  %v276 = vpop.f32.mrb[0].mxu0
  %277 = vmatprep.mubr.f32.mxu0 0.0
  %278 = vmatmul.mubr.f32.gmra.mrb[0].mxu0 %v37
  %v279 = vpop.f32.mrb[0].mxu0
  %v280 = vadd.f32 0.0, %v279
  %v281 = vpop.f32.mrb[0].mxu0
  %282 = vmatprep.mubr.f32.mxu0 0.0
  %283 = vmatmul.mubr.f32.gmra.mrb[0].mxu0 %v38
  %v284 = vpop.f32.mrb[0].mxu0
  %v285 = vadd.f32 0.0, %v284
  %v286 = vpop.f32.mrb[0].mxu0
  %287 = vmatprep.mubr.f32.mxu0 0.0
  %288 = vmatmul.mubr.f32.gmra.mrb[0].mxu0 %v39
  %v289 = vpop.f32.mrb[0].mxu0
  %v290 = vadd.f32 0.0, %v289
  %v291 = vpop.f32.mrb[0].mxu0
  %292 = vmatprep.mubr.f32.mxu0 0.0
  %293 = vmatmul.mubr.f32.gmra.mrb[0].mxu0 %v40
  %v294 = vpop.f32.mrb[0].mxu0
  %v295 = vadd.f32 0.0, %v294
  %v296 = vpop.f32.mrb[0].mxu0
  %297 = vmatprep.mubr.f32.mxu0 0.0
  %298 = vmatmul.mubr.f32.gmra.mrb[0].mxu0 %v41
  %v299 = vpop.f32.mrb[0].mxu0
  %v300 = vadd.f32 0.0, %v299
  %v301 = vpop.f32.mrb[0].mxu0
  %302 = vmatprep.mubr.f32.mxu0 0.0
  %303 = vmatmul.mubr.f32.gmra.mrb[0].mxu0 %v42
  %v304 = vpop.f32.mrb[0].mxu0
  %v305 = vadd.f32 0.0, %v304
  %v306 = vpop.f32.mrb[0].mxu0
  %307 = vmatprep.mubr.f32.mxu0 0.0
  %308 = vmatmul.mubr.f32.gmra.mrb[0].mxu0 %v43
  %v309 = vpop.f32.mrb[0].mxu0
  %v310 = vadd.f32 0.0, %v309
  %v311 = vpop.f32.mrb[0].mxu0
  %312 = vmatprep.mubr.f32.mxu0 0.0
  %313 = vmatmul.mubr.f32.gmra.mrb[0].mxu0 %v44
  %v314 = vpop.f32.mrb[0].mxu0
  %v315 = vadd.f32 0.0, %v314
  %v316 = vpop.f32.mrb[0].mxu0
  %317 = vmatprep.mubr.f32.mxu0 0.0
  %318 = vmatmul.mubr.f32.gmra.mrb[0].mxu0 %v45
  %v319 = vpop.f32.mrb[0].mxu0
  %v320 = vadd.f32 0.0, %v319
  %v321 = vpop.f32.mrb[0].mxu0
  %322 = vmatprep.mubr.f32.mxu0 0.0
  %323 = vmatmul.mubr.f32.gmra.mrb[0].mxu0 %v46
  %v324 = vpop.f32.mrb[0].mxu0
  %v325 = vadd.f32 0.0, %v324
  %v326 = vpop.f32.mrb[0].mxu0
  %327 = vmatprep.mubr.f32.mxu0 0.0
  %328 = vmatmul.mubr.f32.gmra.mrb[0].mxu0 %v47
  %v329 = vpop.f32.mrb[0].mxu0
  %v330 = vadd.f32 0.0, %v329
  %v331 = vpop.f32.mrb[0].mxu0
  %332 = vmatprep.mubr.f32.mxu0 0.0
  %333 = vmatmul.mubr.f32.gmra.mrb[0].mxu0 %v48
  %v334 = vpop.f32.mrb[0].mxu0
  %v335 = vadd.f32 0.0, %v334
  %v336 = vpop.f32.mrb[0].mxu0
  %337 = vmatprep.mubr.f32.mxu0 0.0
  %338 = vmatmul.mubr.f32.gmra.mrb[0].mxu0 %v49
  %v339 = vpop.f32.mrb[0].mxu0
  %v340 = vadd.f32 0.0, %v339
  %v341 = vpop.f32.mrb[0].mxu0
  %342 = vmatprep.mubr.f32.mxu0 0.0
  %343 = vmatmul.mubr.f32.gmra.mrb[0].mxu0 %v50
  %v344 = vpop.f32.mrb[0].mxu0
  %v345 = vadd.f32 0.0, %v344
  %v346 = vpop.f32.mrb[0].mxu0
  %347 = vmatprep.mubr.f32.mxu0 0.0
  %348 = vmatmul.mubr.f32.gmra.mrb[0].mxu0 %v51
  %v349 = vpop.f32.mrb[0].mxu0
  %v350 = vadd.f32 0.0, %v349
  %v351 = vpop.f32.mrb[0].mxu0
  %352 = vmatprep.mubr.f32.mxu0 0.0
  %353 = vmatmul.mubr.f32.gmra.mrb[0].mxu0 %v52
  %v354 = vpop.f32.mrb[0].mxu0
  %v355 = vadd.f32 0.0, %v354
  %v356 = vpop.f32.mrb[0].mxu0
  %357 = vmatprep.mubr.f32.mxu0 0.0
  %358 = vmatmul.mubr.f32.gmra.mrb[0].mxu0 %v53
  %v359 = vpop.f32.mrb[0].mxu0
  %v360 = vadd.f32 0.0, %v359
  %v361 = vpop.f32.mrb[0].mxu0
  %362 = vmatprep.mubr.f32.mxu0 0.0
  %363 = vmatmul.mubr.f32.gmra.mrb[0].mxu0 %v54
  %v364 = vpop.f32.mrb[0].mxu0
  %v365 = vadd.f32 0.0, %v364
  %v366 = vpop.f32.mrb[0].mxu0
  %367 = vmatprep.mubr.f32.mxu0 0.0
  %368 = vmatmul.mubr.f32.gmra.mrb[0].mxu0 %v55
  %v369 = vpop.f32.mrb[0].mxu0
  %v370 = vadd.f32 0.0, %v369
  %v371 = vpop.f32.mrb[0].mxu0
  %372 = vmatprep.mubr.f32.mxu0 0.0
  %373 = vmatmul.mubr.f32.gmra.mrb[0].mxu0 %v56
  %v374 = vpop.f32.mrb[0].mxu0
  %v375 = vadd.f32 0.0, %v374
  %v376 = vpop.f32.mrb[0].mxu0
  %377 = vmatprep.mubr.f32.mxu0 0.0
  %378 = vmatmul.mubr.f32.gmra.mrb[0].mxu0 %v57
  %v379 = vpop.f32.mrb[0].mxu0
  %v380 = vadd.f32 0.0, %v379
  %v381 = vpop.f32.mrb[0].mxu0
  %382 = vmatprep.mubr.f32.mxu0 0.0
  %383 = vmatmul.mubr.f32.gmra.mrb[0].mxu0 %v58
  %v384 = vpop.f32.mrb[0].mxu0
  %v385 = vadd.f32 0.0, %v384
  %v386 = vpop.f32.mrb[0].mxu0
  %387 = vmatprep.mubr.f32.mxu0 0.0
  %388 = vmatmul.mubr.f32.gmra.mrb[0].mxu0 %v59
  %v389 = vpop.f32.mrb[0].mxu0
  %v390 = vadd.f32 0.0, %v389
  %v391 = vpop.f32.mrb[0].mxu0
  %392 = vmatprep.mubr.f32.mxu0 0.0
  %393 = vmatmul.mubr.f32.gmra.mrb[0].mxu0 %v60
  %v394 = vpop.f32.mrb[0].mxu0
  %v395 = vadd.f32 0.0, %v394
  %v396 = vpop.f32.mrb[0].mxu0
  %397 = vmatprep.mubr.f32.mxu0 0.0
  %398 = vmatmul.mubr.f32.gmra.mrb[0].mxu0 %v61
  %v399 = vpop.f32.mrb[0].mxu0
  %v400 = vadd.f32 0.0, %v399
  %v401 = vpop.f32.mrb[0].mxu0
  %402 = vmatprep.mubr.f32.mxu0 0.0
  %403 = vmatmul.mubr.f32.gmra.mrb[0].mxu0 %v62
  %v404 = vpop.f32.mrb[0].mxu0
  %v405 = vadd.f32 0.0, %v404
  %v406 = vpop.f32.mrb[0].mxu0
  %407 = vmatprep.mubr.f32.mxu0 0.0
  %408 = vmatmul.mubr.f32.gmra.mrb[0].mxu0 %v63
  %v409 = vpop.f32.mrb[0].mxu0
  %v410 = vadd.f32 0.0, %v409
  %v411 = vpop.f32.mrb[0].mxu0
  %412 = vmatprep.mubr.f32.mxu0 0.0
  %413 = vmatmul.mubr.f32.gmra.mrb[0].mxu0 %v64
  %v414 = vpop.f32.mrb[0].mxu0
  %v415 = vadd.f32 0.0, %v414
  %v416 = vpop.f32.mrb[0].mxu0
  %417 = vmatprep.mubr.f32.mxu0 0.0
  %418 = vmatmul.mubr.f32.gmra.mrb[0].mxu0 %v65
  %v419 = vpop.f32.mrb[0].mxu0
  %v420 = vadd.f32 0.0, %v419
  %v421 = vpop.f32.mrb[0].mxu0
  %422 = vmatprep.mubr.f32.mxu0 0.0
  %423 = vmatmul.mubr.f32.gmra.mrb[0].mxu0 %v66
  %v424 = vpop.f32.mrb[0].mxu0
  %v425 = vadd.f32 0.0, %v424
  %v426 = vpop.f32.mrb[0].mxu0
  %427 = vmatprep.mubr.f32.mxu0 0.0
  %428 = vmatmul.mubr.f32.gmra.mrb[0].mxu0 %v67
  %v429 = vpop.f32.mrb[0].mxu0
  %v430 = vadd.f32 0.0, %v429
  %v431 = vpop.f32.mrb[0].mxu0
  %432 = vmatprep.mubr.f32.mxu0 0.0
  %433 = vmatmul.mubr.f32.gmra.mrb[0].mxu0 %v68
  %v434 = vpop.f32.mrb[0].mxu0
  %v435 = vadd.f32 0.0, %v434
  %v436 = vpop.f32.mrb[0].mxu0
  %437 = vmatprep.mubr.f32.mxu0 0.0
  %438 = vmatmul.mubr.f32.gmra.mrb[0].mxu0 %v69
  %v439 = vpop.f32.mrb[0].mxu0
  %v440 = vadd.f32 0.0, %v439
  %v441 = vpop.f32.mrb[0].mxu0
  %442 = vmatprep.mubr.f32.mxu0 0.0
  %443 = vmatmul.mubr.f32.gmra.mrb[0].mxu0 %v70
  %v444 = vpop.f32.mrb[0].mxu0
  %v445 = vadd.f32 0.0, %v444
  %v446 = vpop.f32.mrb[0].mxu0
  %447 = vmatprep.mubr.f32.mxu0 0.0
  %448 = vmatmul.mubr.f32.gmra.mrb[0].mxu0 %v71
  %v449 = vpop.f32.mrb[0].mxu0
  %v450 = vadd.f32 0.0, %v449
  %v451 = vpop.f32.mrb[0].mxu0
  %452 = vmatprep.mubr.f32.mxu0 0.0
  %453 = vmatmul.mubr.f32.gmra.mrb[0].mxu0 %v72
  %v454 = vpop.f32.mrb[0].mxu0
  %v455 = vadd.f32 0.0, %v454
  %v456 = vpop.f32.mrb[0].mxu0
  %457 = vmatprep.mubr.f32.mxu0 0.0
  %458 = vmatmul.mubr.f32.gmra.mrb[0].mxu0 %v73
  %v459 = vpop.f32.mrb[0].mxu0
  %v460 = vadd.f32 0.0, %v459
  %v461 = vpop.f32.mrb[0].mxu0
  %462 = vmatprep.mubr.f32.mxu0 0.0
  %463 = vmatmul.mubr.f32.gmra.mrb[0].mxu0 %v74
  %v464 = vpop.f32.mrb[0].mxu0
  %v465 = vadd.f32 0.0, %v464
  %v466 = vpop.f32.mrb[0].mxu0
  %467 = vmatprep.mubr.f32.mxu0 0.0
  %468 = vmatmul.mubr.f32.gmra.mrb[0].mxu0 %v75
  %v469 = vpop.f32.mrb[0].mxu0
  %v470 = vadd.f32 0.0, %v469
  %v471 = vpop.f32.mrb[0].mxu0
  %472 = vmatprep.mubr.f32.mxu0 0.0
  %473 = vmatmul.mubr.f32.gmra.mrb[0].mxu0 %v76
  %v474 = vpop.f32.mrb[0].mxu0
  %v475 = vadd.f32 0.0, %v474
  %v476 = vpop.f32.mrb[0].mxu0
  %477 = vdwg.mxu0
  %478 = vst [vmem:[%s2] sm:$0xff] %v160
  %479 = vst [vmem:[%s2 + $0x8] sm:$0xff] %v165
  %480 = vst [vmem:[%s2 + $0x10] sm:$0xff] %v170
  %481 = vst [vmem:[%s2 + $0x18] sm:$0xff] %v175
  %482 = vst [vmem:[%s2 + $0x20] sm:$0xff] %v180
  %483 = vst [vmem:[%s2 + $0x28] sm:$0xff] %v185
  %484 = vst [vmem:[%s2 + $0x30] sm:$0xff] %v190
  %485 = vst [vmem:[%s2 + $0x38] sm:$0xff] %v195
  %486 = vst [vmem:[%s2 + $0x40] sm:$0xff] %v200
  %487 = vst [vmem:[%s2 + $0x48] sm:$0xff] %v205
  %488 = vst [vmem:[%s2 + $0x50] sm:$0xff] %v210
  %489 = vst [vmem:[%s2 + $0x58] sm:$0xff] %v215
  %490 = vst [vmem:[%s2 + $0x60] sm:$0xff] %v220
  %491 = vst [vmem:[%s2 + $0x68] sm:$0xff] %v225
  %492 = vst [vmem:[%s2 + $0x70] sm:$0xff] %v230
  %493 = vst [vmem:[%s2 + $0x78] sm:$0xff] %v235
  %494 = vst [vmem:[%s2 + $0x80] sm:$0xff] %v240
  %495 = vst [vmem:[%s2 + $0x88] sm:$0xff] %v245
  %496 = vst [vmem:[%s2 + $0x90] sm:$0xff] %v250
  %497 = vst [vmem:[%s2 + $0x98] sm:$0xff] %v255
  %498 = vst [vmem:[%s2 + $0xa0] sm:$0xff] %v260
  %499 = vst [vmem:[%s2 + $0xa8] sm:$0xff] %v265
  %500 = vst [vmem:[%s2 + $0xb0] sm:$0xff] %v270
  %501 = vst [vmem:[%s2 + $0xb8] sm:$0xff] %v275
  %502 = vst [vmem:[%s2 + $0xc0] sm:$0xff] %v280
  %503 = vst [vmem:[%s2 + $0xc8] sm:$0xff] %v285
  %504 = vst [vmem:[%s2 + $0xd0] sm:$0xff] %v290
  %505 = vst [vmem:[%s2 + $0xd8] sm:$0xff] %v295
  %506 = vst [vmem:[%s2 + $0xe0] sm:$0xff] %v300
  %507 = vst [vmem:[%s2 + $0xe8] sm:$0xff] %v305
  %508 = vst [vmem:[%s2 + $0xf0] sm:$0xff] %v310
  %509 = vst [vmem:[%s2 + $0xf8] sm:$0xff] %v315
  %510 = vst [vmem:[%s2 + $0x100] sm:$0xff] %v320
  %511 = vst [vmem:[%s2 + $0x108] sm:$0xff] %v325
  %512 = vst [vmem:[%s2 + $0x110] sm:$0xff] %v330
  %513 = vst [vmem:[%s2 + $0x118] sm:$0xff] %v335
  %514 = vst [vmem:[%s2 + $0x120] sm:$0xff] %v340
  %515 = vst [vmem:[%s2 + $0x128] sm:$0xff] %v345
  %516 = vst [vmem:[%s2 + $0x130] sm:$0xff] %v350
  %517 = vst [vmem:[%s2 + $0x138] sm:$0xff] %v355
  %518 = vst [vmem:[%s2 + $0x140] sm:$0xff] %v360
  %519 = vst [vmem:[%s2 + $0x148] sm:$0xff] %v365
  %520 = vst [vmem:[%s2 + $0x150] sm:$0xff] %v370
  %521 = vst [vmem:[%s2 + $0x158] sm:$0xff] %v375
  %522 = vst [vmem:[%s2 + $0x160] sm:$0xff] %v380
  %523 = vst [vmem:[%s2 + $0x168] sm:$0xff] %v385
  %524 = vst [vmem:[%s2 + $0x170] sm:$0xff] %v390
  %525 = vst [vmem:[%s2 + $0x178] sm:$0xff] %v395
  %526 = vst [vmem:[%s2 + $0x180] sm:$0xff] %v400
  %527 = vst [vmem:[%s2 + $0x188] sm:$0xff] %v405
  %528 = vst [vmem:[%s2 + $0x190] sm:$0xff] %v410
  %529 = vst [vmem:[%s2 + $0x198] sm:$0xff] %v415
  %530 = vst [vmem:[%s2 + $0x1a0] sm:$0xff] %v420
  %531 = vst [vmem:[%s2 + $0x1a8] sm:$0xff] %v425
  %532 = vst [vmem:[%s2 + $0x1b0] sm:$0xff] %v430
  %533 = vst [vmem:[%s2 + $0x1b8] sm:$0xff] %v435
  %534 = vst [vmem:[%s2 + $0x1c0] sm:$0xff] %v440
  %535 = vst [vmem:[%s2 + $0x1c8] sm:$0xff] %v445
  %536 = vst [vmem:[%s2 + $0x1d0] sm:$0xff] %v450
  %537 = vst [vmem:[%s2 + $0x1d8] sm:$0xff] %v455
  %538 = vst [vmem:[%s2 + $0x1e0] sm:$0xff] %v460
  %539 = vst [vmem:[%s2 + $0x1e8] sm:$0xff] %v465
  %540 = vst [vmem:[%s2 + $0x1f0] sm:$0xff] %v470
  %541 = vst [vmem:[%s2 + $0x1f8] sm:$0xff] %v475
  %v542 = vadd.f32 %v160, %v165
  %v543 = vadd.f32 %v542, %v170
  %v544 = vadd.f32 %v543, %v175
  %v545 = vadd.f32 %v544, %v180
  %v546 = vadd.f32 %v545, %v185
  %v547 = vadd.f32 %v546, %v190
  %v548 = vadd.f32 %v547, %v195
  %v549 = vadd.f32 %v548, %v200
  %v550 = vadd.f32 %v549, %v205
  %v551 = vadd.f32 %v550, %v210
  %v552 = vadd.f32 %v551, %v215
  %v553 = vadd.f32 %v552, %v220
  %v554 = vadd.f32 %v553, %v225
  %v555 = vadd.f32 %v554, %v230
  %v556 = vadd.f32 %v555, %v235
  %v557 = vadd.f32 %v556, %v240
  %v558 = vadd.f32 %v557, %v245
  %v559 = vadd.f32 %v558, %v250
  %v560 = vadd.f32 %v559, %v255
  %v561 = vadd.f32 %v560, %v260
  %v562 = vadd.f32 %v561, %v265
  %v563 = vadd.f32 %v562, %v270
  %v564 = vadd.f32 %v563, %v275
  %v565 = vadd.f32 %v564, %v280
  %v566 = vadd.f32 %v565, %v285
  %v567 = vadd.f32 %v566, %v290
  %v568 = vadd.f32 %v567, %v295
  %v569 = vadd.f32 %v568, %v300
  %v570 = vadd.f32 %v569, %v305
  %v571 = vadd.f32 %v570, %v310
  %v572 = vadd.f32 %v571, %v315
  %v573 = vadd.f32 %v572, %v320
  %v574 = vadd.f32 %v573, %v325
  %v575 = vadd.f32 %v574, %v330
  %v576 = vadd.f32 %v575, %v335
  %v577 = vadd.f32 %v576, %v340
  %v578 = vadd.f32 %v577, %v345
  %v579 = vadd.f32 %v578, %v350
  %v580 = vadd.f32 %v579, %v355
  %v581 = vadd.f32 %v580, %v360
  %v582 = vadd.f32 %v581, %v365
  %v583 = vadd.f32 %v582, %v370
  %v584 = vadd.f32 %v583, %v375
  %v585 = vadd.f32 %v584, %v380
  %v586 = vadd.f32 %v585, %v385
  %v587 = vadd.f32 %v586, %v390
  %v588 = vadd.f32 %v587, %v395
  %v589 = vadd.f32 %v588, %v400
  %v590 = vadd.f32 %v589, %v405
  %v591 = vadd.f32 %v590, %v410
  %v592 = vadd.f32 %v591, %v415
  %v593 = vadd.f32 %v592, %v420
  %v594 = vadd.f32 %v593, %v425
  %v595 = vadd.f32 %v594, %v430
  %v596 = vadd.f32 %v595, %v435
  %v597 = vadd.f32 %v596, %v440
  %v598 = vadd.f32 %v597, %v445
  %v599 = vadd.f32 %v598, %v450
  %v600 = vadd.f32 %v599, %v455
  %v601 = vadd.f32 %v600, %v460
  %v602 = vadd.f32 %v601, %v465
  %v603 = vadd.f32 %v602, %v470
  %v604 = vadd.f32 %v603, %v475
  %v605 = vrot.slane %v604, 4
  %v606 = vadd.f32 %v604, %v605
  %v607 = vrot.slane %v606, 2
  %v608 = vadd.f32 %v606, %v607
  %v609 = vrot.slane %v608, 1
  %v610 = vadd.f32 %v608, %v609
  %v611 = vmul.f32 %v160, %v160
  %v612 = vmul.f32 %v165, %v165
  %v613 = vmul.f32 %v170, %v170
  %v614 = vmul.f32 %v175, %v175
  %v615 = vmul.f32 %v180, %v180
  %v616 = vmul.f32 %v185, %v185
  %v617 = vmul.f32 %v190, %v190
  %v618 = vmul.f32 %v195, %v195
  %v619 = vmul.f32 %v200, %v200
  %v620 = vmul.f32 %v205, %v205
  %v621 = vmul.f32 %v210, %v210
  %v622 = vmul.f32 %v215, %v215
  %v623 = vmul.f32 %v220, %v220
  %v624 = vmul.f32 %v225, %v225
  %v625 = vmul.f32 %v230, %v230
  %v626 = vmul.f32 %v235, %v235
  %v627 = vmul.f32 %v240, %v240
  %v628 = vmul.f32 %v245, %v245
  %v629 = vmul.f32 %v250, %v250
  %v630 = vmul.f32 %v255, %v255
  %v631 = vmul.f32 %v260, %v260
  %v632 = vmul.f32 %v265, %v265
  %v633 = vmul.f32 %v270, %v270
  %v634 = vmul.f32 %v275, %v275
  %v635 = vmul.f32 %v280, %v280
  %v636 = vmul.f32 %v285, %v285
  %v637 = vmul.f32 %v290, %v290
  %v638 = vmul.f32 %v295, %v295
  %v639 = vmul.f32 %v300, %v300
  %v640 = vmul.f32 %v305, %v305
  %v641 = vmul.f32 %v310, %v310
  %v642 = vmul.f32 %v315, %v315
  %v643 = vmul.f32 %v320, %v320
  %v644 = vmul.f32 %v325, %v325
  %v645 = vmul.f32 %v330, %v330
  %v646 = vmul.f32 %v335, %v335
  %v647 = vmul.f32 %v340, %v340
  %v648 = vmul.f32 %v345, %v345
  %v649 = vmul.f32 %v350, %v350
  %v650 = vmul.f32 %v355, %v355
  %v651 = vmul.f32 %v360, %v360
  %v652 = vmul.f32 %v365, %v365
  %v653 = vmul.f32 %v370, %v370
  %v654 = vmul.f32 %v375, %v375
  %v655 = vmul.f32 %v380, %v380
  %v656 = vmul.f32 %v385, %v385
  %v657 = vmul.f32 %v390, %v390
  %v658 = vmul.f32 %v395, %v395
  %v659 = vmul.f32 %v400, %v400
  %v660 = vmul.f32 %v405, %v405
  %v661 = vmul.f32 %v410, %v410
  %v662 = vmul.f32 %v415, %v415
  %v663 = vmul.f32 %v420, %v420
  %v664 = vmul.f32 %v425, %v425
  %v665 = vmul.f32 %v430, %v430
  %v666 = vmul.f32 %v435, %v435
  %v667 = vmul.f32 %v440, %v440
  %v668 = vmul.f32 %v445, %v445
  %v669 = vmul.f32 %v450, %v450
  %v670 = vmul.f32 %v455, %v455
  %v671 = vmul.f32 %v460, %v460
  %v672 = vmul.f32 %v465, %v465
  %v673 = vmul.f32 %v470, %v470
  %v674 = vmul.f32 %v475, %v475
  %v675 = vadd.f32 %v611, %v612
  %v676 = vadd.f32 %v675, %v613
  %v677 = vadd.f32 %v676, %v614
  %v678 = vadd.f32 %v677, %v615
  %v679 = vadd.f32 %v678, %v616
  %v680 = vadd.f32 %v679, %v617
  %v681 = vadd.f32 %v680, %v618
  %v682 = vadd.f32 %v681, %v619
  %v683 = vadd.f32 %v682, %v620
  %v684 = vadd.f32 %v683, %v621
  %v685 = vadd.f32 %v684, %v622
  %v686 = vadd.f32 %v685, %v623
  %v687 = vadd.f32 %v686, %v624
  %v688 = vadd.f32 %v687, %v625
  %v689 = vadd.f32 %v688, %v626
  %v690 = vadd.f32 %v689, %v627
  %v691 = vadd.f32 %v690, %v628
  %v692 = vadd.f32 %v691, %v629
  %v693 = vadd.f32 %v692, %v630
  %v694 = vadd.f32 %v693, %v631
  %v695 = vadd.f32 %v694, %v632
  %v696 = vadd.f32 %v695, %v633
  %v697 = vadd.f32 %v696, %v634
  %v698 = vadd.f32 %v697, %v635
  %v699 = vadd.f32 %v698, %v636
  %v700 = vadd.f32 %v699, %v637
  %v701 = vadd.f32 %v700, %v638
  %v702 = vadd.f32 %v701, %v639
  %v703 = vadd.f32 %v702, %v640
  %v704 = vadd.f32 %v703, %v641
  %v705 = vadd.f32 %v704, %v642
  %v706 = vadd.f32 %v705, %v643
  %v707 = vadd.f32 %v706, %v644
  %v708 = vadd.f32 %v707, %v645
  %v709 = vadd.f32 %v708, %v646
  %v710 = vadd.f32 %v709, %v647
  %v711 = vadd.f32 %v710, %v648
  %v712 = vadd.f32 %v711, %v649
  %v713 = vadd.f32 %v712, %v650
  %v714 = vadd.f32 %v713, %v651
  %v715 = vadd.f32 %v714, %v652
  %v716 = vadd.f32 %v715, %v653
  %v717 = vadd.f32 %v716, %v654
  %v718 = vadd.f32 %v717, %v655
  %v719 = vadd.f32 %v718, %v656
  %v720 = vadd.f32 %v719, %v657
  %v721 = vadd.f32 %v720, %v658
  %v722 = vadd.f32 %v721, %v659
  %v723 = vadd.f32 %v722, %v660
  %v724 = vadd.f32 %v723, %v661
  %v725 = vadd.f32 %v724, %v662
  %v726 = vadd.f32 %v725, %v663
  %v727 = vadd.f32 %v726, %v664
  %v728 = vadd.f32 %v727, %v665
  %v729 = vadd.f32 %v728, %v666
  %v730 = vadd.f32 %v729, %v667
  %v731 = vadd.f32 %v730, %v668
  %v732 = vadd.f32 %v731, %v669
  %v733 = vadd.f32 %v732, %v670
  %v734 = vadd.f32 %v733, %v671
  %v735 = vadd.f32 %v734, %v672
  %v736 = vadd.f32 %v735, %v673
  %v737 = vadd.f32 %v736, %v674
  %v738 = vrot.slane %v737, 4
  %v739 = vadd.f32 %v737, %v738
  %v740 = vrot.slane %v739, 2
  %v741 = vadd.f32 %v739, %v740
  %v742 = vrot.slane %v741, 1
  %v743 = vadd.f32 %v741, %v742
  %vm744 = vcmask 1040384
  %v745 = vsel %vm744, %v610, %v743
  %746 = vst [vmem:[%s3] sm:$0x3] %v745
  // Predicated region
  $region10: #{bottleneck_forward.4} parent=0 // pred_check
    _
  $region11: #{bottleneck_forward.4} parent=0 // pred_check_branch
    %748 = sbr.rel (0) target = $region13
  $region12: #{bottleneck_forward.4} parent=0 // pred_region
    _
  $region13: #{bottleneck_forward.4} parent=0 // pred_fallthru
    _
  // Predicated region
  $region14: #{bottleneck_forward.4} parent=0 // pred_check
    _
  $region15: #{bottleneck_forward.4} parent=0 // pred_check_branch
    %750 = sbr.rel (0) target = $region17
  $region16: #{bottleneck_forward.4} parent=0 // pred_region
    _
  $region17: #{bottleneck_forward.4} parent=0 // pred_fallthru
    _
  // Predicated region
  $region18: #{bottleneck_forward.4} parent=0 // pred_check
    _
  $region19: #{bottleneck_forward.4} parent=0 // pred_check_branch
    %752 = sbr.rel (0) target = $region21
  $region20: #{bottleneck_forward.4} parent=0 // pred_region
    _
  $region21: #{bottleneck_forward.4} parent=0 // pred_fallthru
    _
  // Predicated region
  $region22: #{bottleneck_forward.4} parent=0 // pred_check
    _
  $region23: #{bottleneck_forward.4} parent=0 // pred_check_branch
    %754 = sbr.rel (0) target = $region25
  $region24: #{bottleneck_forward.4} parent=0 // pred_region
    _
  $region25: #{bottleneck_forward.4} parent=0 // pred_fallthru
    _

// kernel: bottleneck_forward.6
$region0: #{bottleneck_forward.6}
  #allocation0 [shape = 'u32[]', space=smem, size = 0x4, offset = 0x4, fixed_abs, tag = 'smem constant byte address 0x4 - core index']
  #allocation1 [shape = 'u32[144,128]{1,0:T(1,128)}', space=vmem, size = 0x12000, scoped, tag = 'internal scratch']
  %s0 = inlined_call_operand.vmem [shape: f32[512,128], index: 0, kind: input, shape index: {}]
  %s1 = inlined_call_operand.vmem [shape: f32[1,128], index: 1, kind: input, shape index: {}]
  %s2 = inlined_call_operand.vmem [shape: f32[1,128], index: 2, kind: input, shape index: {}]
  %s3 = inlined_call_operand.vmem [shape: f32[128,128], index: 3, kind: input, shape index: {}]
  %s4 = inlined_call_operand.vmem [shape: f32[512,128], index: 4, kind: output, shape index: {0}]
  %s5 = inlined_call_operand.vmem [shape: f32[1,2,128], index: 5, kind: output, shape index: {1}]
  %6 = xla_tuple %s4, %s5
  %s7 = sld [smem:[#allocation0]]
  $region34: #{bottleneck_forward.6} parent=0
    _
  %s9 = ssub.s32 1, %s7
  %s10 = scalar_select 0, %s9, %s7
  // Predicated region
  $region2: #{bottleneck_forward.6} parent=0 // pred_check
    _
  $region3: #{bottleneck_forward.6} parent=0 // pred_check_branch
    %12 = sbr.rel (0) target = $region5
  $region4: #{bottleneck_forward.6} parent=0 // pred_region
    _
  $region5: #{bottleneck_forward.6} parent=0 // pred_fallthru
    _
  // Predicated region
  $region6: #{bottleneck_forward.6} parent=0 // pred_check
    _
  $region7: #{bottleneck_forward.6} parent=0 // pred_check_branch
    %14 = sbr.rel (0) target = $region9
  $region8: #{bottleneck_forward.6} parent=0 // pred_region
    _
  $region9: #{bottleneck_forward.6} parent=0 // pred_fallthru
    _
  // Predicated region
  $region10: #{bottleneck_forward.6} parent=0 // pred_check
    _
  $region11: #{bottleneck_forward.6} parent=0 // pred_check_branch
    %16 = sbr.rel (0) target = $region13
  $region12: #{bottleneck_forward.6} parent=0 // pred_region
    _
  $region13: #{bottleneck_forward.6} parent=0 // pred_fallthru
    _
  // Predicated region
  $region14: #{bottleneck_forward.6} parent=0 // pred_check
    _
  $region15: #{bottleneck_forward.6} parent=0 // pred_check_branch
    %18 = sbr.rel (0) target = $region17
  $region16: #{bottleneck_forward.6} parent=0 // pred_region
    _
  $region17: #{bottleneck_forward.6} parent=0 // pred_fallthru
    _
  %v19 = vld [vmem:[%s0] sm:$0xff]
  %v20 = vld [vmem:[%s0 + $0x8] sm:$0xff]
  %v21 = vld [vmem:[%s0 + $0x10] sm:$0xff]
  %v22 = vld [vmem:[%s0 + $0x18] sm:$0xff]
  %v23 = vld [vmem:[%s0 + $0x20] sm:$0xff]
  %v24 = vld [vmem:[%s0 + $0x28] sm:$0xff]
  %v25 = vld [vmem:[%s0 + $0x30] sm:$0xff]
  %v26 = vld [vmem:[%s0 + $0x38] sm:$0xff]
  %v27 = vld [vmem:[%s0 + $0x40] sm:$0xff]
  %v28 = vld [vmem:[%s0 + $0x48] sm:$0xff]
  %v29 = vld [vmem:[%s0 + $0x50] sm:$0xff]
  %v30 = vld [vmem:[%s0 + $0x58] sm:$0xff]
  %v31 = vld [vmem:[%s0 + $0x60] sm:$0xff]
  %v32 = vld [vmem:[%s0 + $0x68] sm:$0xff]
  %v33 = vld [vmem:[%s0 + $0x70] sm:$0xff]
  %v34 = vld [vmem:[%s0 + $0x78] sm:$0xff]
  %v35 = vld [vmem:[%s0 + $0x80] sm:$0xff]
  %v36 = vld [vmem:[%s0 + $0x88] sm:$0xff]
  %v37 = vld [vmem:[%s0 + $0x90] sm:$0xff]
  %v38 = vld [vmem:[%s0 + $0x98] sm:$0xff]
  %v39 = vld [vmem:[%s0 + $0xa0] sm:$0xff]
  %v40 = vld [vmem:[%s0 + $0xa8] sm:$0xff]
  %v41 = vld [vmem:[%s0 + $0xb0] sm:$0xff]
  %v42 = vld [vmem:[%s0 + $0xb8] sm:$0xff]
  %v43 = vld [vmem:[%s0 + $0xc0] sm:$0xff]
  %v44 = vld [vmem:[%s0 + $0xc8] sm:$0xff]
  %v45 = vld [vmem:[%s0 + $0xd0] sm:$0xff]
  %v46 = vld [vmem:[%s0 + $0xd8] sm:$0xff]
  %v47 = vld [vmem:[%s0 + $0xe0] sm:$0xff]
  %v48 = vld [vmem:[%s0 + $0xe8] sm:$0xff]
  %v49 = vld [vmem:[%s0 + $0xf0] sm:$0xff]
  %v50 = vld [vmem:[%s0 + $0xf8] sm:$0xff]
  %v51 = vld [vmem:[%s0 + $0x100] sm:$0xff]
  %v52 = vld [vmem:[%s0 + $0x108] sm:$0xff]
  %v53 = vld [vmem:[%s0 + $0x110] sm:$0xff]
  %v54 = vld [vmem:[%s0 + $0x118] sm:$0xff]
  %v55 = vld [vmem:[%s0 + $0x120] sm:$0xff]
  %v56 = vld [vmem:[%s0 + $0x128] sm:$0xff]
  %v57 = vld [vmem:[%s0 + $0x130] sm:$0xff]
  %v58 = vld [vmem:[%s0 + $0x138] sm:$0xff]
  %v59 = vld [vmem:[%s0 + $0x140] sm:$0xff]
  %v60 = vld [vmem:[%s0 + $0x148] sm:$0xff]
  %v61 = vld [vmem:[%s0 + $0x150] sm:$0xff]
  %v62 = vld [vmem:[%s0 + $0x158] sm:$0xff]
  %v63 = vld [vmem:[%s0 + $0x160] sm:$0xff]
  %v64 = vld [vmem:[%s0 + $0x168] sm:$0xff]
  %v65 = vld [vmem:[%s0 + $0x170] sm:$0xff]
  %v66 = vld [vmem:[%s0 + $0x178] sm:$0xff]
  %v67 = vld [vmem:[%s0 + $0x180] sm:$0xff]
  %v68 = vld [vmem:[%s0 + $0x188] sm:$0xff]
  %v69 = vld [vmem:[%s0 + $0x190] sm:$0xff]
  %v70 = vld [vmem:[%s0 + $0x198] sm:$0xff]
  %v71 = vld [vmem:[%s0 + $0x1a0] sm:$0xff]
  %v72 = vld [vmem:[%s0 + $0x1a8] sm:$0xff]
  %v73 = vld [vmem:[%s0 + $0x1b0] sm:$0xff]
  %v74 = vld [vmem:[%s0 + $0x1b8] sm:$0xff]
  %v75 = vld [vmem:[%s0 + $0x1c0] sm:$0xff]
  %v76 = vld [vmem:[%s0 + $0x1c8] sm:$0xff]
  %v77 = vld [vmem:[%s0 + $0x1d0] sm:$0xff]
  %v78 = vld [vmem:[%s0 + $0x1d8] sm:$0xff]
  %v79 = vld [vmem:[%s0 + $0x1e0] sm:$0xff]
  %v80 = vld [vmem:[%s0 + $0x1e8] sm:$0xff]
  %v81 = vld [vmem:[%s0 + $0x1f0] sm:$0xff]
  %v82 = vld [vmem:[%s0 + $0x1f8] sm:$0xff]
  %v83 = vld [vmem:[%s1] sm:$0x1]
  %v85 = vlaneseq
  %v86 = vshrl.u32 %v85, 7
  %v87 = vsub.s32 0, %v86
  %v88 = vrot.slane %v83, %v87
  %v90 = vmul.f32 %v19, %v88
  %v91 = vmul.f32 %v20, %v88
  %v92 = vmul.f32 %v21, %v88
  %v93 = vmul.f32 %v22, %v88
  %v94 = vmul.f32 %v23, %v88
  %v95 = vmul.f32 %v24, %v88
  %v96 = vmul.f32 %v25, %v88
  %v97 = vmul.f32 %v26, %v88
  %v98 = vmul.f32 %v27, %v88
  %v99 = vmul.f32 %v28, %v88
  %v100 = vmul.f32 %v29, %v88
  %v101 = vmul.f32 %v30, %v88
  %v102 = vmul.f32 %v31, %v88
  %v103 = vmul.f32 %v32, %v88
  %v104 = vmul.f32 %v33, %v88
  %v105 = vmul.f32 %v34, %v88
  %v106 = vmul.f32 %v35, %v88
  %v107 = vmul.f32 %v36, %v88
  %v108 = vmul.f32 %v37, %v88
  %v109 = vmul.f32 %v38, %v88
  %v110 = vmul.f32 %v39, %v88
  %v111 = vmul.f32 %v40, %v88
  %v112 = vmul.f32 %v41, %v88
  %v113 = vmul.f32 %v42, %v88
  %v114 = vmul.f32 %v43, %v88
  %v115 = vmul.f32 %v44, %v88
  %v116 = vmul.f32 %v45, %v88
  %v117 = vmul.f32 %v46, %v88
  %v118 = vmul.f32 %v47, %v88
  %v119 = vmul.f32 %v48, %v88
  %v120 = vmul.f32 %v49, %v88
  %v121 = vmul.f32 %v50, %v88
  %v122 = vmul.f32 %v51, %v88
  %v123 = vmul.f32 %v52, %v88
  %v124 = vmul.f32 %v53, %v88
  %v125 = vmul.f32 %v54, %v88
  %v126 = vmul.f32 %v55, %v88
  %v127 = vmul.f32 %v56, %v88
  %v128 = vmul.f32 %v57, %v88
  %v129 = vmul.f32 %v58, %v88
  %v130 = vmul.f32 %v59, %v88
  %v131 = vmul.f32 %v60, %v88
  %v132 = vmul.f32 %v61, %v88
  %v133 = vmul.f32 %v62, %v88
  %v134 = vmul.f32 %v63, %v88
  %v135 = vmul.f32 %v64, %v88
  %v136 = vmul.f32 %v65, %v88
  %v137 = vmul.f32 %v66, %v88
  %v138 = vmul.f32 %v67, %v88
  %v139 = vmul.f32 %v68, %v88
  %v140 = vmul.f32 %v69, %v88
  %v141 = vmul.f32 %v70, %v88
  %v142 = vmul.f32 %v71, %v88
  %v143 = vmul.f32 %v72, %v88
  %v144 = vmul.f32 %v73, %v88
  %v145 = vmul.f32 %v74, %v88
  %v146 = vmul.f32 %v75, %v88
  %v147 = vmul.f32 %v76, %v88
  %v148 = vmul.f32 %v77, %v88
  %v149 = vmul.f32 %v78, %v88
  %v150 = vmul.f32 %v79, %v88
  %v151 = vmul.f32 %v80, %v88
  %v152 = vmul.f32 %v81, %v88
  %v153 = vmul.f32 %v82, %v88
  %v154 = vld [vmem:[%s2] sm:$0x1]
  %v156 = vlaneseq
  %v157 = vshrl.u32 %v156, 7
  %v158 = vsub.s32 0, %v157
  %v159 = vrot.slane %v154, %v158
  %v161 = vadd.f32 %v90, %v159
  %v162 = vadd.f32 %v91, %v159
  %v163 = vadd.f32 %v92, %v159
  %v164 = vadd.f32 %v93, %v159
  %v165 = vadd.f32 %v94, %v159
  %v166 = vadd.f32 %v95, %v159
  %v167 = vadd.f32 %v96, %v159
  %v168 = vadd.f32 %v97, %v159
  %v169 = vadd.f32 %v98, %v159
  %v170 = vadd.f32 %v99, %v159
  %v171 = vadd.f32 %v100, %v159
  %v172 = vadd.f32 %v101, %v159
  %v173 = vadd.f32 %v102, %v159
  %v174 = vadd.f32 %v103, %v159
  %v175 = vadd.f32 %v104, %v159
  %v176 = vadd.f32 %v105, %v159
  %v177 = vadd.f32 %v106, %v159
  %v178 = vadd.f32 %v107, %v159
  %v179 = vadd.f32 %v108, %v159
  %v180 = vadd.f32 %v109, %v159
  %v181 = vadd.f32 %v110, %v159
  %v182 = vadd.f32 %v111, %v159
  %v183 = vadd.f32 %v112, %v159
  %v184 = vadd.f32 %v113, %v159
  %v185 = vadd.f32 %v114, %v159
  %v186 = vadd.f32 %v115, %v159
  %v187 = vadd.f32 %v116, %v159
  %v188 = vadd.f32 %v117, %v159
  %v189 = vadd.f32 %v118, %v159
  %v190 = vadd.f32 %v119, %v159
  %v191 = vadd.f32 %v120, %v159
  %v192 = vadd.f32 %v121, %v159
  %v193 = vadd.f32 %v122, %v159
  %v194 = vadd.f32 %v123, %v159
  %v195 = vadd.f32 %v124, %v159
  %v196 = vadd.f32 %v125, %v159
  %v197 = vadd.f32 %v126, %v159
  %v198 = vadd.f32 %v127, %v159
  %v199 = vadd.f32 %v128, %v159
  %v200 = vadd.f32 %v129, %v159
  %v201 = vadd.f32 %v130, %v159
  %v202 = vadd.f32 %v131, %v159
  %v203 = vadd.f32 %v132, %v159
  %v204 = vadd.f32 %v133, %v159
  %v205 = vadd.f32 %v134, %v159
  %v206 = vadd.f32 %v135, %v159
  %v207 = vadd.f32 %v136, %v159
  %v208 = vadd.f32 %v137, %v159
  %v209 = vadd.f32 %v138, %v159
  %v210 = vadd.f32 %v139, %v159
  %v211 = vadd.f32 %v140, %v159
  %v212 = vadd.f32 %v141, %v159
  %v213 = vadd.f32 %v142, %v159
  %v214 = vadd.f32 %v143, %v159
  %v215 = vadd.f32 %v144, %v159
  %v216 = vadd.f32 %v145, %v159
  %v217 = vadd.f32 %v146, %v159
  %v218 = vadd.f32 %v147, %v159
  %v219 = vadd.f32 %v148, %v159
  %v220 = vadd.f32 %v149, %v159
  %v221 = vadd.f32 %v150, %v159
  %v222 = vadd.f32 %v151, %v159
  %v223 = vadd.f32 %v152, %v159
  %v224 = vadd.f32 %v153, %v159
  %v225 = vmax.f32 %v161, 0.0
  %v226 = vmax.f32 %v162, 0.0
  %v227 = vmax.f32 %v163, 0.0
  %v228 = vmax.f32 %v164, 0.0
  %v229 = vmax.f32 %v165, 0.0
  %v230 = vmax.f32 %v166, 0.0
  %v231 = vmax.f32 %v167, 0.0
  %v232 = vmax.f32 %v168, 0.0
  %v233 = vmax.f32 %v169, 0.0
  %v234 = vmax.f32 %v170, 0.0
  %v235 = vmax.f32 %v171, 0.0
  %v236 = vmax.f32 %v172, 0.0
  %v237 = vmax.f32 %v173, 0.0
  %v238 = vmax.f32 %v174, 0.0
  %v239 = vmax.f32 %v175, 0.0
  %v240 = vmax.f32 %v176, 0.0
  %v241 = vmax.f32 %v177, 0.0
  %v242 = vmax.f32 %v178, 0.0
  %v243 = vmax.f32 %v179, 0.0
  %v244 = vmax.f32 %v180, 0.0
  %v245 = vmax.f32 %v181, 0.0
  %v246 = vmax.f32 %v182, 0.0
  %v247 = vmax.f32 %v183, 0.0
  %v248 = vmax.f32 %v184, 0.0
  %v249 = vmax.f32 %v185, 0.0
  %v250 = vmax.f32 %v186, 0.0
  %v251 = vmax.f32 %v187, 0.0
  %v252 = vmax.f32 %v188, 0.0
  %v253 = vmax.f32 %v189, 0.0
  %v254 = vmax.f32 %v190, 0.0
  %v255 = vmax.f32 %v191, 0.0
  %v256 = vmax.f32 %v192, 0.0
  %v257 = vmax.f32 %v193, 0.0
  %v258 = vmax.f32 %v194, 0.0
  %v259 = vmax.f32 %v195, 0.0
  %v260 = vmax.f32 %v196, 0.0
  %v261 = vmax.f32 %v197, 0.0
  %v262 = vmax.f32 %v198, 0.0
  %v263 = vmax.f32 %v199, 0.0
  %v264 = vmax.f32 %v200, 0.0
  %v265 = vmax.f32 %v201, 0.0
  %v266 = vmax.f32 %v202, 0.0
  %v267 = vmax.f32 %v203, 0.0
  %v268 = vmax.f32 %v204, 0.0
  %v269 = vmax.f32 %v205, 0.0
  %v270 = vmax.f32 %v206, 0.0
  %v271 = vmax.f32 %v207, 0.0
  %v272 = vmax.f32 %v208, 0.0
  %v273 = vmax.f32 %v209, 0.0
  %v274 = vmax.f32 %v210, 0.0
  %v275 = vmax.f32 %v211, 0.0
  %v276 = vmax.f32 %v212, 0.0
  %v277 = vmax.f32 %v213, 0.0
  %v278 = vmax.f32 %v214, 0.0
  %v279 = vmax.f32 %v215, 0.0
  %v280 = vmax.f32 %v216, 0.0
  %v281 = vmax.f32 %v217, 0.0
  %v282 = vmax.f32 %v218, 0.0
  %v283 = vmax.f32 %v219, 0.0
  %v284 = vmax.f32 %v220, 0.0
  %v285 = vmax.f32 %v221, 0.0
  %v286 = vmax.f32 %v222, 0.0
  %v287 = vmax.f32 %v223, 0.0
  %v288 = vmax.f32 %v224, 0.0
  %v289 = vld [vmem:[%s3] sm:$0xff]
  %v290 = vld [vmem:[%s3 + $0x8] sm:$0xff]
  %v291 = vld [vmem:[%s3 + $0x10] sm:$0xff]
  %v292 = vld [vmem:[%s3 + $0x18] sm:$0xff]
  %v293 = vld [vmem:[%s3 + $0x20] sm:$0xff]
  %v294 = vld [vmem:[%s3 + $0x28] sm:$0xff]
  %v295 = vld [vmem:[%s3 + $0x30] sm:$0xff]
  %v296 = vld [vmem:[%s3 + $0x38] sm:$0xff]
  %v297 = vld [vmem:[%s3 + $0x40] sm:$0xff]
  %v298 = vld [vmem:[%s3 + $0x48] sm:$0xff]
  %v299 = vld [vmem:[%s3 + $0x50] sm:$0xff]
  %v300 = vld [vmem:[%s3 + $0x58] sm:$0xff]
  %v301 = vld [vmem:[%s3 + $0x60] sm:$0xff]
  %v302 = vld [vmem:[%s3 + $0x68] sm:$0xff]
  %v303 = vld [vmem:[%s3 + $0x70] sm:$0xff]
  %v304 = vld [vmem:[%s3 + $0x78] sm:$0xff]
  %305 = vmatprep.subr.mxu0 0.0
  %306 = vmatpush1.msra.mxu0 %v289
  %307 = vmatprep.subr.mxu0 0.0
  %308 = vmatpush1.msra.mxu0 %v290
  %309 = vmatprep.subr.mxu0 0.0
  %310 = vmatpush1.msra.mxu0 %v291
  %311 = vmatprep.subr.mxu0 0.0
  %312 = vmatpush1.msra.mxu0 %v292
  %313 = vmatprep.subr.mxu0 0.0
  %314 = vmatpush1.msra.mxu0 %v293
  %315 = vmatprep.subr.mxu0 0.0
  %316 = vmatpush1.msra.mxu0 %v294
  %317 = vmatprep.subr.mxu0 0.0
  %318 = vmatpush1.msra.mxu0 %v295
  %319 = vmatprep.subr.mxu0 0.0
  %320 = vmatpush1.msra.mxu0 %v296
  %321 = vmatprep.subr.mxu0 0.0
  %322 = vmatpush1.msra.mxu0 %v297
  %323 = vmatprep.subr.mxu0 0.0
  %324 = vmatpush1.msra.mxu0 %v298
  %325 = vmatprep.subr.mxu0 0.0
  %326 = vmatpush1.msra.mxu0 %v299
  %327 = vmatprep.subr.mxu0 0.0
  %328 = vmatpush1.msra.mxu0 %v300
  %329 = vmatprep.subr.mxu0 0.0
  %330 = vmatpush1.msra.mxu0 %v301
  %331 = vmatprep.subr.mxu0 0.0
  %332 = vmatpush1.msra.mxu0 %v302
  %333 = vmatprep.subr.mxu0 0.0
  %334 = vmatpush1.msra.mxu0 %v303
  %335 = vmatprep.subr.mxu0 0.0
  %336 = vmatpush1.msra.mxu0 %v304
  %337 = vmatprep.subr.mxu0 0.0
  %338 = vmatpush1.msra.mxu0 0.0
  %339 = vmatprep.subr.mxu0 0.0
  %340 = vmatpush1.msra.mxu0 0.0
  %341 = vmatprep.subr.mxu0 0.0
  %342 = vmatpush1.msra.mxu0 0.0
  %343 = vmatprep.subr.mxu0 0.0
  %344 = vmatpush1.msra.mxu0 0.0
  %345 = vmatprep.subr.mxu0 0.0
  %346 = vmatpush1.msra.mxu0 0.0
  %347 = vmatprep.subr.mxu0 0.0
  %348 = vmatpush1.msra.mxu0 0.0
  %349 = vmatprep.subr.mxu0 0.0
  %350 = vmatpush1.msra.mxu0 0.0
  %351 = vmatprep.subr.mxu0 0.0
  %352 = vmatpush1.msra.mxu0 0.0
  %353 = vmatprep.subr.mxu0 0.0
  %354 = vmatpush1.msra.mxu0 0.0
  %355 = vmatprep.subr.mxu0 0.0
  %356 = vmatpush1.msra.mxu0 0.0
  %357 = vmatprep.subr.mxu0 0.0
  %358 = vmatpush1.msra.mxu0 0.0
  %359 = vmatprep.subr.mxu0 0.0
  %360 = vmatpush1.msra.mxu0 0.0
  %361 = vmatprep.subr.mxu0 0.0
  %362 = vmatpush1.msra.mxu0 0.0
  %363 = vmatprep.subr.mxu0 0.0
  %364 = vmatpush1.msra.mxu0 0.0
  %365 = vmatprep.subr.mxu0 0.0
  %366 = vmatpush1.msra.mxu0 0.0
  %367 = vmatprep.subr.mxu0 0.0
  %368 = vmatpush1.msra.mxu0 0.0
  %369 = vmatprep.mubr.f32.mxu0 0.0
  %370 = vmatmul.mubr.f32.gmra.mrb[0].mxu0 %v225
  %v371 = vpop.f32.mrb[0].mxu0
  %v372 = vadd.f32 0.0, %v371
  %v373 = vpop.f32.mrb[0].mxu0
  %374 = vmatprep.mubr.f32.mxu0 0.0
  %375 = vmatmul.mubr.f32.gmra.mrb[0].mxu0 %v226
  %v376 = vpop.f32.mrb[0].mxu0
  %v377 = vadd.f32 0.0, %v376
  %v378 = vpop.f32.mrb[0].mxu0
  %379 = vmatprep.mubr.f32.mxu0 0.0
  %380 = vmatmul.mubr.f32.gmra.mrb[0].mxu0 %v227
  %v381 = vpop.f32.mrb[0].mxu0
  %v382 = vadd.f32 0.0, %v381
  %v383 = vpop.f32.mrb[0].mxu0
  %384 = vmatprep.mubr.f32.mxu0 0.0
  %385 = vmatmul.mubr.f32.gmra.mrb[0].mxu0 %v228
  %v386 = vpop.f32.mrb[0].mxu0
  %v387 = vadd.f32 0.0, %v386
  %v388 = vpop.f32.mrb[0].mxu0
  %389 = vmatprep.mubr.f32.mxu0 0.0
  %390 = vmatmul.mubr.f32.gmra.mrb[0].mxu0 %v229
  %v391 = vpop.f32.mrb[0].mxu0
  %v392 = vadd.f32 0.0, %v391
  %v393 = vpop.f32.mrb[0].mxu0
  %394 = vmatprep.mubr.f32.mxu0 0.0
  %395 = vmatmul.mubr.f32.gmra.mrb[0].mxu0 %v230
  %v396 = vpop.f32.mrb[0].mxu0
  %v397 = vadd.f32 0.0, %v396
  %v398 = vpop.f32.mrb[0].mxu0
  %399 = vmatprep.mubr.f32.mxu0 0.0
  %400 = vmatmul.mubr.f32.gmra.mrb[0].mxu0 %v231
  %v401 = vpop.f32.mrb[0].mxu0
  %v402 = vadd.f32 0.0, %v401
  %v403 = vpop.f32.mrb[0].mxu0
  %404 = vmatprep.mubr.f32.mxu0 0.0
  %405 = vmatmul.mubr.f32.gmra.mrb[0].mxu0 %v232
  %v406 = vpop.f32.mrb[0].mxu0
  %v407 = vadd.f32 0.0, %v406
  %v408 = vpop.f32.mrb[0].mxu0
  %409 = vmatprep.mubr.f32.mxu0 0.0
  %410 = vmatmul.mubr.f32.gmra.mrb[0].mxu0 %v233
  %v411 = vpop.f32.mrb[0].mxu0
  %v412 = vadd.f32 0.0, %v411
  %v413 = vpop.f32.mrb[0].mxu0
  %414 = vmatprep.mubr.f32.mxu0 0.0
  %415 = vmatmul.mubr.f32.gmra.mrb[0].mxu0 %v234
  %v416 = vpop.f32.mrb[0].mxu0
  %v417 = vadd.f32 0.0, %v416
  %v418 = vpop.f32.mrb[0].mxu0
  %419 = vmatprep.mubr.f32.mxu0 0.0
  %420 = vmatmul.mubr.f32.gmra.mrb[0].mxu0 %v235
  %v421 = vpop.f32.mrb[0].mxu0
  %v422 = vadd.f32 0.0, %v421
  %v423 = vpop.f32.mrb[0].mxu0
  %424 = vmatprep.mubr.f32.mxu0 0.0
  %425 = vmatmul.mubr.f32.gmra.mrb[0].mxu0 %v236
  %v426 = vpop.f32.mrb[0].mxu0
  %v427 = vadd.f32 0.0, %v426
  %v428 = vpop.f32.mrb[0].mxu0
  %429 = vmatprep.mubr.f32.mxu0 0.0
  %430 = vmatmul.mubr.f32.gmra.mrb[0].mxu0 %v237
  %v431 = vpop.f32.mrb[0].mxu0
  %v432 = vadd.f32 0.0, %v431
  %v433 = vpop.f32.mrb[0].mxu0
  %434 = vmatprep.mubr.f32.mxu0 0.0
  %435 = vmatmul.mubr.f32.gmra.mrb[0].mxu0 %v238
  %v436 = vpop.f32.mrb[0].mxu0
  %v437 = vadd.f32 0.0, %v436
  %v438 = vpop.f32.mrb[0].mxu0
  %439 = vmatprep.mubr.f32.mxu0 0.0
  %440 = vmatmul.mubr.f32.gmra.mrb[0].mxu0 %v239
  %v441 = vpop.f32.mrb[0].mxu0
  %v442 = vadd.f32 0.0, %v441
  %v443 = vpop.f32.mrb[0].mxu0
  %444 = vmatprep.mubr.f32.mxu0 0.0
  %445 = vmatmul.mubr.f32.gmra.mrb[0].mxu0 %v240
  %v446 = vpop.f32.mrb[0].mxu0
  %v447 = vadd.f32 0.0, %v446
  %v448 = vpop.f32.mrb[0].mxu0
  %449 = vmatprep.mubr.f32.mxu0 0.0
  %450 = vmatmul.mubr.f32.gmra.mrb[0].mxu0 %v241
  %v451 = vpop.f32.mrb[0].mxu0
  %v452 = vadd.f32 0.0, %v451
  %v453 = vpop.f32.mrb[0].mxu0
  %454 = vmatprep.mubr.f32.mxu0 0.0
  %455 = vmatmul.mubr.f32.gmra.mrb[0].mxu0 %v242
  %v456 = vpop.f32.mrb[0].mxu0
  %v457 = vadd.f32 0.0, %v456
  %v458 = vpop.f32.mrb[0].mxu0
  %459 = vmatprep.mubr.f32.mxu0 0.0
  %460 = vmatmul.mubr.f32.gmra.mrb[0].mxu0 %v243
  %v461 = vpop.f32.mrb[0].mxu0
  %v462 = vadd.f32 0.0, %v461
  %v463 = vpop.f32.mrb[0].mxu0
  %464 = vmatprep.mubr.f32.mxu0 0.0
  %465 = vmatmul.mubr.f32.gmra.mrb[0].mxu0 %v244
  %v466 = vpop.f32.mrb[0].mxu0
  %v467 = vadd.f32 0.0, %v466
  %v468 = vpop.f32.mrb[0].mxu0
  %469 = vmatprep.mubr.f32.mxu0 0.0
  %470 = vmatmul.mubr.f32.gmra.mrb[0].mxu0 %v245
  %v471 = vpop.f32.mrb[0].mxu0
  %v472 = vadd.f32 0.0, %v471
  %v473 = vpop.f32.mrb[0].mxu0
  %474 = vmatprep.mubr.f32.mxu0 0.0
  %475 = vmatmul.mubr.f32.gmra.mrb[0].mxu0 %v246
  %v476 = vpop.f32.mrb[0].mxu0
  %v477 = vadd.f32 0.0, %v476
  %v478 = vpop.f32.mrb[0].mxu0
  %479 = vmatprep.mubr.f32.mxu0 0.0
  %480 = vmatmul.mubr.f32.gmra.mrb[0].mxu0 %v247
  %v481 = vpop.f32.mrb[0].mxu0
  %v482 = vadd.f32 0.0, %v481
  %v483 = vpop.f32.mrb[0].mxu0
  %484 = vmatprep.mubr.f32.mxu0 0.0
  %485 = vmatmul.mubr.f32.gmra.mrb[0].mxu0 %v248
  %v486 = vpop.f32.mrb[0].mxu0
  %v487 = vadd.f32 0.0, %v486
  %v488 = vpop.f32.mrb[0].mxu0
  %489 = vmatprep.mubr.f32.mxu0 0.0
  %490 = vmatmul.mubr.f32.gmra.mrb[0].mxu0 %v249
  %v491 = vpop.f32.mrb[0].mxu0
  %v492 = vadd.f32 0.0, %v491
  %v493 = vpop.f32.mrb[0].mxu0
  %494 = vmatprep.mubr.f32.mxu0 0.0
  %495 = vmatmul.mubr.f32.gmra.mrb[0].mxu0 %v250
  %v496 = vpop.f32.mrb[0].mxu0
  %v497 = vadd.f32 0.0, %v496
  %v498 = vpop.f32.mrb[0].mxu0
  %499 = vmatprep.mubr.f32.mxu0 0.0
  %500 = vmatmul.mubr.f32.gmra.mrb[0].mxu0 %v251
  %v501 = vpop.f32.mrb[0].mxu0
  %v502 = vadd.f32 0.0, %v501
  %v503 = vpop.f32.mrb[0].mxu0
  %504 = vmatprep.mubr.f32.mxu0 0.0
  %505 = vmatmul.mubr.f32.gmra.mrb[0].mxu0 %v252
  %v506 = vpop.f32.mrb[0].mxu0
  %v507 = vadd.f32 0.0, %v506
  %v508 = vpop.f32.mrb[0].mxu0
  %509 = vmatprep.mubr.f32.mxu0 0.0
  %510 = vmatmul.mubr.f32.gmra.mrb[0].mxu0 %v253
  %v511 = vpop.f32.mrb[0].mxu0
  %v512 = vadd.f32 0.0, %v511
  %v513 = vpop.f32.mrb[0].mxu0
  %514 = vmatprep.mubr.f32.mxu0 0.0
  %515 = vmatmul.mubr.f32.gmra.mrb[0].mxu0 %v254
  %v516 = vpop.f32.mrb[0].mxu0
  %v517 = vadd.f32 0.0, %v516
  %v518 = vpop.f32.mrb[0].mxu0
  %519 = vmatprep.mubr.f32.mxu0 0.0
  %520 = vmatmul.mubr.f32.gmra.mrb[0].mxu0 %v255
  %v521 = vpop.f32.mrb[0].mxu0
  %v522 = vadd.f32 0.0, %v521
  %v523 = vpop.f32.mrb[0].mxu0
  %524 = vmatprep.mubr.f32.mxu0 0.0
  %525 = vmatmul.mubr.f32.gmra.mrb[0].mxu0 %v256
  %v526 = vpop.f32.mrb[0].mxu0
  %v527 = vadd.f32 0.0, %v526
  %v528 = vpop.f32.mrb[0].mxu0
  %529 = vmatprep.mubr.f32.mxu0 0.0
  %530 = vmatmul.mubr.f32.gmra.mrb[0].mxu0 %v257
  %v531 = vpop.f32.mrb[0].mxu0
  %v532 = vadd.f32 0.0, %v531
  %v533 = vpop.f32.mrb[0].mxu0
  %534 = vmatprep.mubr.f32.mxu0 0.0
  %535 = vmatmul.mubr.f32.gmra.mrb[0].mxu0 %v258
  %v536 = vpop.f32.mrb[0].mxu0
  %v537 = vadd.f32 0.0, %v536
  %v538 = vpop.f32.mrb[0].mxu0
  %539 = vmatprep.mubr.f32.mxu0 0.0
  %540 = vmatmul.mubr.f32.gmra.mrb[0].mxu0 %v259
  %v541 = vpop.f32.mrb[0].mxu0
  %v542 = vadd.f32 0.0, %v541
  %v543 = vpop.f32.mrb[0].mxu0
  %544 = vmatprep.mubr.f32.mxu0 0.0
  %545 = vmatmul.mubr.f32.gmra.mrb[0].mxu0 %v260
  %v546 = vpop.f32.mrb[0].mxu0
  %v547 = vadd.f32 0.0, %v546
  %v548 = vpop.f32.mrb[0].mxu0
  %549 = vmatprep.mubr.f32.mxu0 0.0
  %550 = vmatmul.mubr.f32.gmra.mrb[0].mxu0 %v261
  %v551 = vpop.f32.mrb[0].mxu0
  %v552 = vadd.f32 0.0, %v551
  %v553 = vpop.f32.mrb[0].mxu0
  %554 = vmatprep.mubr.f32.mxu0 0.0
  %555 = vmatmul.mubr.f32.gmra.mrb[0].mxu0 %v262
  %v556 = vpop.f32.mrb[0].mxu0
  %v557 = vadd.f32 0.0, %v556
  %v558 = vpop.f32.mrb[0].mxu0
  %559 = vmatprep.mubr.f32.mxu0 0.0
  %560 = vmatmul.mubr.f32.gmra.mrb[0].mxu0 %v263
  %v561 = vpop.f32.mrb[0].mxu0
  %v562 = vadd.f32 0.0, %v561
  %v563 = vpop.f32.mrb[0].mxu0
  %564 = vmatprep.mubr.f32.mxu0 0.0
  %565 = vmatmul.mubr.f32.gmra.mrb[0].mxu0 %v264
  %v566 = vpop.f32.mrb[0].mxu0
  %v567 = vadd.f32 0.0, %v566
  %v568 = vpop.f32.mrb[0].mxu0
  %569 = vmatprep.mubr.f32.mxu0 0.0
  %570 = vmatmul.mubr.f32.gmra.mrb[0].mxu0 %v265
  %v571 = vpop.f32.mrb[0].mxu0
  %v572 = vadd.f32 0.0, %v571
  %v573 = vpop.f32.mrb[0].mxu0
  %574 = vmatprep.mubr.f32.mxu0 0.0
  %575 = vmatmul.mubr.f32.gmra.mrb[0].mxu0 %v266
  %v576 = vpop.f32.mrb[0].mxu0
  %v577 = vadd.f32 0.0, %v576
  %v578 = vpop.f32.mrb[0].mxu0
  %579 = vmatprep.mubr.f32.mxu0 0.0
  %580 = vmatmul.mubr.f32.gmra.mrb[0].mxu0 %v267
  %v581 = vpop.f32.mrb[0].mxu0
  %v582 = vadd.f32 0.0, %v581
  %v583 = vpop.f32.mrb[0].mxu0
  %584 = vmatprep.mubr.f32.mxu0 0.0
  %585 = vmatmul.mubr.f32.gmra.mrb[0].mxu0 %v268
  %v586 = vpop.f32.mrb[0].mxu0
  %v587 = vadd.f32 0.0, %v586
  %v588 = vpop.f32.mrb[0].mxu0
  %589 = vmatprep.mubr.f32.mxu0 0.0
  %590 = vmatmul.mubr.f32.gmra.mrb[0].mxu0 %v269
  %v591 = vpop.f32.mrb[0].mxu0
  %v592 = vadd.f32 0.0, %v591
  %v593 = vpop.f32.mrb[0].mxu0
  %594 = vmatprep.mubr.f32.mxu0 0.0
  %595 = vmatmul.mubr.f32.gmra.mrb[0].mxu0 %v270
  %v596 = vpop.f32.mrb[0].mxu0
  %v597 = vadd.f32 0.0, %v596
  %v598 = vpop.f32.mrb[0].mxu0
  %599 = vmatprep.mubr.f32.mxu0 0.0
  %600 = vmatmul.mubr.f32.gmra.mrb[0].mxu0 %v271
  %v601 = vpop.f32.mrb[0].mxu0
  %v602 = vadd.f32 0.0, %v601
  %v603 = vpop.f32.mrb[0].mxu0
  %604 = vmatprep.mubr.f32.mxu0 0.0
  %605 = vmatmul.mubr.f32.gmra.mrb[0].mxu0 %v272
  %v606 = vpop.f32.mrb[0].mxu0
  %v607 = vadd.f32 0.0, %v606
  %v608 = vpop.f32.mrb[0].mxu0
  %609 = vmatprep.mubr.f32.mxu0 0.0
  %610 = vmatmul.mubr.f32.gmra.mrb[0].mxu0 %v273
  %v611 = vpop.f32.mrb[0].mxu0
  %v612 = vadd.f32 0.0, %v611
  %v613 = vpop.f32.mrb[0].mxu0
  %614 = vmatprep.mubr.f32.mxu0 0.0
  %615 = vmatmul.mubr.f32.gmra.mrb[0].mxu0 %v274
  %v616 = vpop.f32.mrb[0].mxu0
  %v617 = vadd.f32 0.0, %v616
  %v618 = vpop.f32.mrb[0].mxu0
  %619 = vmatprep.mubr.f32.mxu0 0.0
  %620 = vmatmul.mubr.f32.gmra.mrb[0].mxu0 %v275
  %v621 = vpop.f32.mrb[0].mxu0
  %v622 = vadd.f32 0.0, %v621
  %v623 = vpop.f32.mrb[0].mxu0
  %624 = vmatprep.mubr.f32.mxu0 0.0
  %625 = vmatmul.mubr.f32.gmra.mrb[0].mxu0 %v276
  %v626 = vpop.f32.mrb[0].mxu0
  %v627 = vadd.f32 0.0, %v626
  %v628 = vpop.f32.mrb[0].mxu0
  %629 = vmatprep.mubr.f32.mxu0 0.0
  %630 = vmatmul.mubr.f32.gmra.mrb[0].mxu0 %v277
  %v631 = vpop.f32.mrb[0].mxu0
  %v632 = vadd.f32 0.0, %v631
  %v633 = vpop.f32.mrb[0].mxu0
  %634 = vmatprep.mubr.f32.mxu0 0.0
  %635 = vmatmul.mubr.f32.gmra.mrb[0].mxu0 %v278
  %v636 = vpop.f32.mrb[0].mxu0
  %v637 = vadd.f32 0.0, %v636
  %v638 = vpop.f32.mrb[0].mxu0
  %639 = vmatprep.mubr.f32.mxu0 0.0
  %640 = vmatmul.mubr.f32.gmra.mrb[0].mxu0 %v279
  %v641 = vpop.f32.mrb[0].mxu0
  %v642 = vadd.f32 0.0, %v641
  %v643 = vpop.f32.mrb[0].mxu0
  %644 = vmatprep.mubr.f32.mxu0 0.0
  %645 = vmatmul.mubr.f32.gmra.mrb[0].mxu0 %v280
  %v646 = vpop.f32.mrb[0].mxu0
  %v647 = vadd.f32 0.0, %v646
  %v648 = vpop.f32.mrb[0].mxu0
  %649 = vmatprep.mubr.f32.mxu0 0.0
  %650 = vmatmul.mubr.f32.gmra.mrb[0].mxu0 %v281
  %v651 = vpop.f32.mrb[0].mxu0
  %v652 = vadd.f32 0.0, %v651
  %v653 = vpop.f32.mrb[0].mxu0
  %654 = vmatprep.mubr.f32.mxu0 0.0
  %655 = vmatmul.mubr.f32.gmra.mrb[0].mxu0 %v282
  %v656 = vpop.f32.mrb[0].mxu0
  %v657 = vadd.f32 0.0, %v656
  %v658 = vpop.f32.mrb[0].mxu0
  %659 = vmatprep.mubr.f32.mxu0 0.0
  %660 = vmatmul.mubr.f32.gmra.mrb[0].mxu0 %v283
  %v661 = vpop.f32.mrb[0].mxu0
  %v662 = vadd.f32 0.0, %v661
  %v663 = vpop.f32.mrb[0].mxu0
  %664 = vmatprep.mubr.f32.mxu0 0.0
  %665 = vmatmul.mubr.f32.gmra.mrb[0].mxu0 %v284
  %v666 = vpop.f32.mrb[0].mxu0
  %v667 = vadd.f32 0.0, %v666
  %v668 = vpop.f32.mrb[0].mxu0
  %669 = vmatprep.mubr.f32.mxu0 0.0
  %670 = vmatmul.mubr.f32.gmra.mrb[0].mxu0 %v285
  %v671 = vpop.f32.mrb[0].mxu0
  %v672 = vadd.f32 0.0, %v671
  %v673 = vpop.f32.mrb[0].mxu0
  %674 = vmatprep.mubr.f32.mxu0 0.0
  %675 = vmatmul.mubr.f32.gmra.mrb[0].mxu0 %v286
  %v676 = vpop.f32.mrb[0].mxu0
  %v677 = vadd.f32 0.0, %v676
  %v678 = vpop.f32.mrb[0].mxu0
  %679 = vmatprep.mubr.f32.mxu0 0.0
  %680 = vmatmul.mubr.f32.gmra.mrb[0].mxu0 %v287
  %v681 = vpop.f32.mrb[0].mxu0
  %v682 = vadd.f32 0.0, %v681
  %v683 = vpop.f32.mrb[0].mxu0
  %684 = vmatprep.mubr.f32.mxu0 0.0
  %685 = vmatmul.mubr.f32.gmra.mrb[0].mxu0 %v288
  %v686 = vpop.f32.mrb[0].mxu0
  %v687 = vadd.f32 0.0, %v686
  %v688 = vpop.f32.mrb[0].mxu0
  %689 = vdwg.mxu0
  %690 = vst [vmem:[%s4] sm:$0xff] %v372
  %691 = vst [vmem:[%s4 + $0x8] sm:$0xff] %v377
  %692 = vst [vmem:[%s4 + $0x10] sm:$0xff] %v382
  %693 = vst [vmem:[%s4 + $0x18] sm:$0xff] %v387
  %694 = vst [vmem:[%s4 + $0x20] sm:$0xff] %v392
  %695 = vst [vmem:[%s4 + $0x28] sm:$0xff] %v397
  %696 = vst [vmem:[%s4 + $0x30] sm:$0xff] %v402
  %697 = vst [vmem:[%s4 + $0x38] sm:$0xff] %v407
  %698 = vst [vmem:[%s4 + $0x40] sm:$0xff] %v412
  %699 = vst [vmem:[%s4 + $0x48] sm:$0xff] %v417
  %700 = vst [vmem:[%s4 + $0x50] sm:$0xff] %v422
  %701 = vst [vmem:[%s4 + $0x58] sm:$0xff] %v427
  %702 = vst [vmem:[%s4 + $0x60] sm:$0xff] %v432
  %703 = vst [vmem:[%s4 + $0x68] sm:$0xff] %v437
  %704 = vst [vmem:[%s4 + $0x70] sm:$0xff] %v442
  %705 = vst [vmem:[%s4 + $0x78] sm:$0xff] %v447
  %706 = vst [vmem:[%s4 + $0x80] sm:$0xff] %v452
  %707 = vst [vmem:[%s4 + $0x88] sm:$0xff] %v457
  %708 = vst [vmem:[%s4 + $0x90] sm:$0xff] %v462
  %709 = vst [vmem:[%s4 + $0x98] sm:$0xff] %v467
  %710 = vst [vmem:[%s4 + $0xa0] sm:$0xff] %v472
  %711 = vst [vmem:[%s4 + $0xa8] sm:$0xff] %v477
  %712 = vst [vmem:[%s4 + $0xb0] sm:$0xff] %v482
  %713 = vst [vmem:[%s4 + $0xb8] sm:$0xff] %v487
  %714 = vst [vmem:[%s4 + $0xc0] sm:$0xff] %v492
  %715 = vst [vmem:[%s4 + $0xc8] sm:$0xff] %v497
  %716 = vst [vmem:[%s4 + $0xd0] sm:$0xff] %v502
  %717 = vst [vmem:[%s4 + $0xd8] sm:$0xff] %v507
  %718 = vst [vmem:[%s4 + $0xe0] sm:$0xff] %v512
  %719 = vst [vmem:[%s4 + $0xe8] sm:$0xff] %v517
  %720 = vst [vmem:[%s4 + $0xf0] sm:$0xff] %v522
  %721 = vst [vmem:[%s4 + $0xf8] sm:$0xff] %v527
  %722 = vst [vmem:[%s4 + $0x100] sm:$0xff] %v532
  %723 = vst [vmem:[%s4 + $0x108] sm:$0xff] %v537
  %724 = vst [vmem:[%s4 + $0x110] sm:$0xff] %v542
  %725 = vst [vmem:[%s4 + $0x118] sm:$0xff] %v547
  %726 = vst [vmem:[%s4 + $0x120] sm:$0xff] %v552
  %727 = vst [vmem:[%s4 + $0x128] sm:$0xff] %v557
  %728 = vst [vmem:[%s4 + $0x130] sm:$0xff] %v562
  %729 = vst [vmem:[%s4 + $0x138] sm:$0xff] %v567
  %730 = vst [vmem:[%s4 + $0x140] sm:$0xff] %v572
  %731 = vst [vmem:[%s4 + $0x148] sm:$0xff] %v577
  %732 = vst [vmem:[%s4 + $0x150] sm:$0xff] %v582
  %733 = vst [vmem:[%s4 + $0x158] sm:$0xff] %v587
  %734 = vst [vmem:[%s4 + $0x160] sm:$0xff] %v592
  %735 = vst [vmem:[%s4 + $0x168] sm:$0xff] %v597
  %736 = vst [vmem:[%s4 + $0x170] sm:$0xff] %v602
  %737 = vst [vmem:[%s4 + $0x178] sm:$0xff] %v607
  %738 = vst [vmem:[%s4 + $0x180] sm:$0xff] %v612
  %739 = vst [vmem:[%s4 + $0x188] sm:$0xff] %v617
  %740 = vst [vmem:[%s4 + $0x190] sm:$0xff] %v622
  %741 = vst [vmem:[%s4 + $0x198] sm:$0xff] %v627
  %742 = vst [vmem:[%s4 + $0x1a0] sm:$0xff] %v632
  %743 = vst [vmem:[%s4 + $0x1a8] sm:$0xff] %v637
  %744 = vst [vmem:[%s4 + $0x1b0] sm:$0xff] %v642
  %745 = vst [vmem:[%s4 + $0x1b8] sm:$0xff] %v647
  %746 = vst [vmem:[%s4 + $0x1c0] sm:$0xff] %v652
  %747 = vst [vmem:[%s4 + $0x1c8] sm:$0xff] %v657
  %748 = vst [vmem:[%s4 + $0x1d0] sm:$0xff] %v662
  %749 = vst [vmem:[%s4 + $0x1d8] sm:$0xff] %v667
  %750 = vst [vmem:[%s4 + $0x1e0] sm:$0xff] %v672
  %751 = vst [vmem:[%s4 + $0x1e8] sm:$0xff] %v677
  %752 = vst [vmem:[%s4 + $0x1f0] sm:$0xff] %v682
  %753 = vst [vmem:[%s4 + $0x1f8] sm:$0xff] %v687
  %v754 = vadd.f32 %v372, %v377
  %v755 = vadd.f32 %v754, %v382
  %v756 = vadd.f32 %v755, %v387
  %v757 = vadd.f32 %v756, %v392
  %v758 = vadd.f32 %v757, %v397
  %v759 = vadd.f32 %v758, %v402
  %v760 = vadd.f32 %v759, %v407
  %v761 = vadd.f32 %v760, %v412
  %v762 = vadd.f32 %v761, %v417
  %v763 = vadd.f32 %v762, %v422
  %v764 = vadd.f32 %v763, %v427
  %v765 = vadd.f32 %v764, %v432
  %v766 = vadd.f32 %v765, %v437
  %v767 = vadd.f32 %v766, %v442
  %v768 = vadd.f32 %v767, %v447
  %v769 = vadd.f32 %v768, %v452
  %v770 = vadd.f32 %v769, %v457
  %v771 = vadd.f32 %v770, %v462
  %v772 = vadd.f32 %v771, %v467
  %v773 = vadd.f32 %v772, %v472
  %v774 = vadd.f32 %v773, %v477
  %v775 = vadd.f32 %v774, %v482
  %v776 = vadd.f32 %v775, %v487
  %v777 = vadd.f32 %v776, %v492
  %v778 = vadd.f32 %v777, %v497
  %v779 = vadd.f32 %v778, %v502
  %v780 = vadd.f32 %v779, %v507
  %v781 = vadd.f32 %v780, %v512
  %v782 = vadd.f32 %v781, %v517
  %v783 = vadd.f32 %v782, %v522
  %v784 = vadd.f32 %v783, %v527
  %v785 = vadd.f32 %v784, %v532
  %v786 = vadd.f32 %v785, %v537
  %v787 = vadd.f32 %v786, %v542
  %v788 = vadd.f32 %v787, %v547
  %v789 = vadd.f32 %v788, %v552
  %v790 = vadd.f32 %v789, %v557
  %v791 = vadd.f32 %v790, %v562
  %v792 = vadd.f32 %v791, %v567
  %v793 = vadd.f32 %v792, %v572
  %v794 = vadd.f32 %v793, %v577
  %v795 = vadd.f32 %v794, %v582
  %v796 = vadd.f32 %v795, %v587
  %v797 = vadd.f32 %v796, %v592
  %v798 = vadd.f32 %v797, %v597
  %v799 = vadd.f32 %v798, %v602
  %v800 = vadd.f32 %v799, %v607
  %v801 = vadd.f32 %v800, %v612
  %v802 = vadd.f32 %v801, %v617
  %v803 = vadd.f32 %v802, %v622
  %v804 = vadd.f32 %v803, %v627
  %v805 = vadd.f32 %v804, %v632
  %v806 = vadd.f32 %v805, %v637
  %v807 = vadd.f32 %v806, %v642
  %v808 = vadd.f32 %v807, %v647
  %v809 = vadd.f32 %v808, %v652
  %v810 = vadd.f32 %v809, %v657
  %v811 = vadd.f32 %v810, %v662
  %v812 = vadd.f32 %v811, %v667
  %v813 = vadd.f32 %v812, %v672
  %v814 = vadd.f32 %v813, %v677
  %v815 = vadd.f32 %v814, %v682
  %v816 = vadd.f32 %v815, %v687
  %v817 = vrot.slane %v816, 4
  %v818 = vadd.f32 %v816, %v817
  %v819 = vrot.slane %v818, 2
  %v820 = vadd.f32 %v818, %v819
  %v821 = vrot.slane %v820, 1
  %v822 = vadd.f32 %v820, %v821
  %v823 = vmul.f32 %v372, %v372
  %v824 = vmul.f32 %v377, %v377
  %v825 = vmul.f32 %v382, %v382
  %v826 = vmul.f32 %v387, %v387
  %v827 = vmul.f32 %v392, %v392
  %v828 = vmul.f32 %v397, %v397
  %v829 = vmul.f32 %v402, %v402
  %v830 = vmul.f32 %v407, %v407
  %v831 = vmul.f32 %v412, %v412
  %v832 = vmul.f32 %v417, %v417
  %v833 = vmul.f32 %v422, %v422
  %v834 = vmul.f32 %v427, %v427
  %v835 = vmul.f32 %v432, %v432
  %v836 = vmul.f32 %v437, %v437
  %v837 = vmul.f32 %v442, %v442
  %v838 = vmul.f32 %v447, %v447
  %v839 = vmul.f32 %v452, %v452
  %v840 = vmul.f32 %v457, %v457
  %v841 = vmul.f32 %v462, %v462
  %v842 = vmul.f32 %v467, %v467
  %v843 = vmul.f32 %v472, %v472
  %v844 = vmul.f32 %v477, %v477
  %v845 = vmul.f32 %v482, %v482
  %v846 = vmul.f32 %v487, %v487
  %v847 = vmul.f32 %v492, %v492
  %v848 = vmul.f32 %v497, %v497
  %v849 = vmul.f32 %v502, %v502
  %v850 = vmul.f32 %v507, %v507
  %v851 = vmul.f32 %v512, %v512
  %v852 = vmul.f32 %v517, %v517
  %v853 = vmul.f32 %v522, %v522
  %v854 = vmul.f32 %v527, %v527
  %v855 = vmul.f32 %v532, %v532
  %v856 = vmul.f32 %v537, %v537
  %v857 = vmul.f32 %v542, %v542
  %v858 = vmul.f32 %v547, %v547
  %v859 = vmul.f32 %v552, %v552
  %v860 = vmul.f32 %v557, %v557
  %v861 = vmul.f32 %v562, %v562
  %v862 = vmul.f32 %v567, %v567
  %v863 = vmul.f32 %v572, %v572
  %v864 = vmul.f32 %v577, %v577
  %v865 = vmul.f32 %v582, %v582
  %v866 = vmul.f32 %v587, %v587
  %v867 = vmul.f32 %v592, %v592
  %v868 = vmul.f32 %v597, %v597
  %v869 = vmul.f32 %v602, %v602
  %v870 = vmul.f32 %v607, %v607
  %v871 = vmul.f32 %v612, %v612
  %v872 = vmul.f32 %v617, %v617
  %v873 = vmul.f32 %v622, %v622
  %v874 = vmul.f32 %v627, %v627
  %v875 = vmul.f32 %v632, %v632
  %v876 = vmul.f32 %v637, %v637
  %v877 = vmul.f32 %v642, %v642
  %v878 = vmul.f32 %v647, %v647
  %v879 = vmul.f32 %v652, %v652
  %v880 = vmul.f32 %v657, %v657
  %v881 = vmul.f32 %v662, %v662
  %v882 = vmul.f32 %v667, %v667
  %v883 = vmul.f32 %v672, %v672
  %v884 = vmul.f32 %v677, %v677
  %v885 = vmul.f32 %v682, %v682
  %v886 = vmul.f32 %v687, %v687
  %v887 = vadd.f32 %v823, %v824
  %v888 = vadd.f32 %v887, %v825
  %v889 = vadd.f32 %v888, %v826
  %v890 = vadd.f32 %v889, %v827
  %v891 = vadd.f32 %v890, %v828
  %v892 = vadd.f32 %v891, %v829
  %v893 = vadd.f32 %v892, %v830
  %v894 = vadd.f32 %v893, %v831
  %v895 = vadd.f32 %v894, %v832
  %v896 = vadd.f32 %v895, %v833
  %v897 = vadd.f32 %v896, %v834
  %v898 = vadd.f32 %v897, %v835
  %v899 = vadd.f32 %v898, %v836
  %v900 = vadd.f32 %v899, %v837
  %v901 = vadd.f32 %v900, %v838
  %v902 = vadd.f32 %v901, %v839
  %v903 = vadd.f32 %v902, %v840
  %v904 = vadd.f32 %v903, %v841
  %v905 = vadd.f32 %v904, %v842
  %v906 = vadd.f32 %v905, %v843
  %v907 = vadd.f32 %v906, %v844
  %v908 = vadd.f32 %v907, %v845
  %v909 = vadd.f32 %v908, %v846
  %v910 = vadd.f32 %v909, %v847
  %v911 = vadd.f32 %v910, %v848
  %v912 = vadd.f32 %v911, %v849
  %v913 = vadd.f32 %v912, %v850
  %v914 = vadd.f32 %v913, %v851
  %v915 = vadd.f32 %v914, %v852
  %v916 = vadd.f32 %v915, %v853
  %v917 = vadd.f32 %v916, %v854
  %v918 = vadd.f32 %v917, %v855
  %v919 = vadd.f32 %v918, %v856
  %v920 = vadd.f32 %v919, %v857
  %v921 = vadd.f32 %v920, %v858
  %v922 = vadd.f32 %v921, %v859
  %v923 = vadd.f32 %v922, %v860
  %v924 = vadd.f32 %v923, %v861
  %v925 = vadd.f32 %v924, %v862
  %v926 = vadd.f32 %v925, %v863
  %v927 = vadd.f32 %v926, %v864
  %v928 = vadd.f32 %v927, %v865
  %v929 = vadd.f32 %v928, %v866
  %v930 = vadd.f32 %v929, %v867
  %v931 = vadd.f32 %v930, %v868
  %v932 = vadd.f32 %v931, %v869
  %v933 = vadd.f32 %v932, %v870
  %v934 = vadd.f32 %v933, %v871
  %v935 = vadd.f32 %v934, %v872
  %v936 = vadd.f32 %v935, %v873
  %v937 = vadd.f32 %v936, %v874
  %v938 = vadd.f32 %v937, %v875
  %v939 = vadd.f32 %v938, %v876
  %v940 = vadd.f32 %v939, %v877
  %v941 = vadd.f32 %v940, %v878
  %v942 = vadd.f32 %v941, %v879
  %v943 = vadd.f32 %v942, %v880
  %v944 = vadd.f32 %v943, %v881
  %v945 = vadd.f32 %v944, %v882
  %v946 = vadd.f32 %v945, %v883
  %v947 = vadd.f32 %v946, %v884
  %v948 = vadd.f32 %v947, %v885
  %v949 = vadd.f32 %v948, %v886
  %v950 = vrot.slane %v949, 4
  %v951 = vadd.f32 %v949, %v950
  %v952 = vrot.slane %v951, 2
  %v953 = vadd.f32 %v951, %v952
  %v954 = vrot.slane %v953, 1
  %v955 = vadd.f32 %v953, %v954
  %vm956 = vcmask 1040384
  %v957 = vsel %vm956, %v822, %v955
  %958 = vst [vmem:[%s5] sm:$0x3] %v957
  // Predicated region
  $region18: #{bottleneck_forward.6} parent=0 // pred_check
    _
  $region19: #{bottleneck_forward.6} parent=0 // pred_check_branch
    %960 = sbr.rel (0) target = $region21
  $region20: #{bottleneck_forward.6} parent=0 // pred_region
    _
  $region21: #{bottleneck_forward.6} parent=0 // pred_fallthru
    _
  // Predicated region
  $region22: #{bottleneck_forward.6} parent=0 // pred_check
    _
  $region23: #{bottleneck_forward.6} parent=0 // pred_check_branch
    %962 = sbr.rel (0) target = $region25
  $region24: #{bottleneck_forward.6} parent=0 // pred_region
    _
  $region25: #{bottleneck_forward.6} parent=0 // pred_fallthru
    _
  // Predicated region
  $region26: #{bottleneck_forward.6} parent=0 // pred_check
    _
  $region27: #{bottleneck_forward.6} parent=0 // pred_check_branch
    %964 = sbr.rel (0) target = $region29
  $region28: #{bottleneck_forward.6} parent=0 // pred_region
    _
  $region29: #{bottleneck_forward.6} parent=0 // pred_fallthru
    _
  // Predicated region
  $region30: #{bottleneck_forward.6} parent=0 // pred_check
    _
  $region31: #{bottleneck_forward.6} parent=0 // pred_check_branch
    %966 = sbr.rel (0) target = $region33
  $region32: #{bottleneck_forward.6} parent=0 // pred_region
    _
  $region33: #{bottleneck_forward.6} parent=0 // pred_fallthru
    _

// kernel: bottleneck_forward.5
$region0: #{bottleneck_forward.5}
  #allocation0 [shape = 'u32[]', space=smem, size = 0x4, offset = 0x4, fixed_abs, tag = 'smem constant byte address 0x4 - core index']
  #allocation1 [shape = 'u32[144,128]{1,0:T(1,128)}', space=vmem, size = 0x12000, scoped, tag = 'internal scratch']
  #allocation2 [shape = 'f32[18,18,128]{2,1,0:T(8,128)}', space=vmem, size = 0x36000, scoped, tag = 'scratch operand']
  #allocation3 [shape = 'f32[16,16,1152]{2,1,0:T(8,128)}', space=vmem, size = 0x120000, scoped, tag = 'scratch operand']
  %s0 = inlined_call_operand.vmem [shape: f32[2,256,128], index: 0, kind: input, shape index: {}]
  %s1 = inlined_call_operand.vmem [shape: f32[1,128], index: 1, kind: input, shape index: {}]
  %s2 = inlined_call_operand.vmem [shape: f32[1,128], index: 2, kind: input, shape index: {}]
  %s3 = inlined_call_operand.vmem [shape: f32[1152,128], index: 3, kind: input, shape index: {}]
  %s4 = inlined_call_operand.vmem [shape: f32[2,256,128], index: 4, kind: output, shape index: {0}]
  %s5 = inlined_call_operand.vmem [shape: f32[2,2,128], index: 5, kind: output, shape index: {1}]
  %6 = xla_tuple %s4, %s5
  %s7 = sld [smem:[#allocation0]]
  $region57: #{bottleneck_forward.5} parent=0
    _
  %s9 = ssub.s32 1, %s7
  %s10 = scalar_select 0, %s9, %s7
  loop: start=0, step=1, limit=4
  $region2: #{bottleneck_forward.5} parent=0 // loop_pre_header
    _
  $region3: #{bottleneck_forward.5} parent=0 // loop_header
    %s12 = sphi 0, %s16
    %p13 = scmp.ge.s32.totalorder %s12, 4
    %s22 = sphi 0, %s24
    %s25 = sphi 0, %s22
    %s26 = sphi 0, %s25
    %s42 = sphi 0, %s26
    %s46 = sphi 0, %s46
    %s48 = sphi 0, %s46
    %s49 = sphi 0, %s48
    %s63 = sphi 0, %s49
    %s67 = sphi 0, %s67
    %s69 = sphi 0, %s67
    %s70 = sphi 0, %s69
    %s84 = sphi 0, %s70
    %s88 = sphi 0, %s88
    %s90 = sphi 0, %s88
    %s91 = sphi 0, %s90
    %s105 = sphi 0, %s91
    %s111 = sphi 0, %s113
    %s114 = sphi 0, %s111
    %s115 = sphi 0, %s114
    %s131 = sphi 0, %s115
    %s137 = sphi 0, %s139
    %s140 = sphi 0, %s137
    %s141 = sphi 0, %s140
    %s157 = sphi 0, %s141
  $region4: #{bottleneck_forward.5} parent=0 // loop_header_branch
    %15 = sbr.rel (%p13) target = $region8
  $region5: #{bottleneck_forward.5} parent=0 // loop_body
    %s17 = ssub.s32 %s12, 1
    %s18 = ssub.s32 %s12, 2
    %s19 = sadd.s32 %s12, 1
    %s20 = ssub.s32 %s12, %s19
    %p21 = scmp.eq.s32.totalorder %s20, 0
    %s23 = sadd.s32 %s22, 1
    %s24 = scalar_select %p21, %s22, %s23
    %p27 = pneg %p21
    %p28 = scmp.eq.s32.totalorder %s12, 1
    %p29 = por %p27, %p28
    %p30 = scmp.ne.s32.totalorder %s22, %s25
    %p31 = scmp.eq.s32.totalorder %s12, 0
    %p32 = por %p30, %p31
    %p33 = scmp.ne.s32.totalorder %s22, %s25
    %p34 = scmp.eq.s32.totalorder %s17, 1
    %p35 = por %p33, %p34
    %p36 = scmp.ne.s32.totalorder %s25, %s26
    %p37 = scmp.eq.s32.totalorder %s17, 0
    %p38 = por %p36, %p37
    %p39 = scmp.ne.s32.totalorder %s25, %s26
    %p40 = scmp.eq.s32.totalorder %s18, 1
    %p41 = por %p39, %p40
    %p43 = scmp.ne.s32.totalorder %s26, %s42
    %p44 = scmp.eq.s32.totalorder %s18, 0
    %p45 = por %p43, %p44
    %s47 = sadd.s32 %s46, 1
    %p50 = scmp.eq.s32.totalorder %s12, 1
    %p51 = scmp.ne.s32.totalorder %s46, %s48
    %p52 = scmp.eq.s32.totalorder %s12, 0
    %p53 = por %p51, %p52
    %p54 = scmp.ne.s32.totalorder %s46, %s48
    %p55 = scmp.eq.s32.totalorder %s17, 1
    %p56 = por %p54, %p55
    %p57 = scmp.ne.s32.totalorder %s48, %s49
    %p58 = scmp.eq.s32.totalorder %s17, 0
    %p59 = por %p57, %p58
    %p60 = scmp.ne.s32.totalorder %s48, %s49
    %p61 = scmp.eq.s32.totalorder %s18, 1
    %p62 = por %p60, %p61
    %p64 = scmp.ne.s32.totalorder %s49, %s63
    %p65 = scmp.eq.s32.totalorder %s18, 0
    %p66 = por %p64, %p65
    %s68 = sadd.s32 %s67, 1
    %p71 = scmp.eq.s32.totalorder %s12, 1
    %p72 = scmp.ne.s32.totalorder %s67, %s69
    %p73 = scmp.eq.s32.totalorder %s12, 0
    %p74 = por %p72, %p73
    %p75 = scmp.ne.s32.totalorder %s67, %s69
    %p76 = scmp.eq.s32.totalorder %s17, 1
    %p77 = por %p75, %p76
    %p78 = scmp.ne.s32.totalorder %s69, %s70
    %p79 = scmp.eq.s32.totalorder %s17, 0
    %p80 = por %p78, %p79
    %p81 = scmp.ne.s32.totalorder %s69, %s70
    %p82 = scmp.eq.s32.totalorder %s18, 1
    %p83 = por %p81, %p82
    %p85 = scmp.ne.s32.totalorder %s70, %s84
    %p86 = scmp.eq.s32.totalorder %s18, 0
    %p87 = por %p85, %p86
    %s89 = sadd.s32 %s88, 1
    %p92 = scmp.eq.s32.totalorder %s12, 1
    %p93 = scmp.ne.s32.totalorder %s88, %s90
    %p94 = scmp.eq.s32.totalorder %s12, 0
    %p95 = por %p93, %p94
    %p96 = scmp.ne.s32.totalorder %s88, %s90
    %p97 = scmp.eq.s32.totalorder %s17, 1
    %p98 = por %p96, %p97
    %p99 = scmp.ne.s32.totalorder %s90, %s91
    %p100 = scmp.eq.s32.totalorder %s17, 0
    %p101 = por %p99, %p100
    %p102 = scmp.ne.s32.totalorder %s90, %s91
    %p103 = scmp.eq.s32.totalorder %s18, 1
    %p104 = por %p102, %p103
    %p106 = scmp.ne.s32.totalorder %s91, %s105
    %p107 = scmp.eq.s32.totalorder %s18, 0
    %p108 = por %p106, %p107
    %s109 = ssub.s32 %s12, %s19
    %p110 = scmp.eq.s32.totalorder %s109, 0
    %s112 = sadd.s32 %s111, 1
    %s113 = scalar_select %p110, %s111, %s112
    %p116 = pneg %p110
    %p117 = scmp.eq.s32.totalorder %s12, 1
    %p118 = por %p116, %p117
    %p119 = scmp.ne.s32.totalorder %s111, %s114
    %p120 = scmp.eq.s32.totalorder %s12, 0
    %p121 = por %p119, %p120
    %p122 = scmp.ne.s32.totalorder %s111, %s114
    %p123 = scmp.eq.s32.totalorder %s17, 1
    %p124 = por %p122, %p123
    %p125 = scmp.ne.s32.totalorder %s114, %s115
    %p126 = scmp.eq.s32.totalorder %s17, 0
    %p127 = por %p125, %p126
    %p128 = scmp.ne.s32.totalorder %s114, %s115
    %p129 = scmp.eq.s32.totalorder %s18, 1
    %p130 = por %p128, %p129
    %p132 = scmp.ne.s32.totalorder %s115, %s131
    %p133 = scmp.eq.s32.totalorder %s18, 0
    %p134 = por %p132, %p133
    %s135 = ssub.s32 %s12, %s19
    %p136 = scmp.eq.s32.totalorder %s135, 0
    %s138 = sadd.s32 %s137, 1
    %s139 = scalar_select %p136, %s137, %s138
    %p142 = pneg %p136
    %p143 = scmp.eq.s32.totalorder %s12, 1
    %p144 = por %p142, %p143
    %p145 = scmp.ne.s32.totalorder %s137, %s140
    %p146 = scmp.eq.s32.totalorder %s12, 0
    %p147 = por %p145, %p146
    %p148 = scmp.ne.s32.totalorder %s137, %s140
    %p149 = scmp.eq.s32.totalorder %s17, 1
    %p150 = por %p148, %p149
    %p151 = scmp.ne.s32.totalorder %s140, %s141
    %p152 = scmp.eq.s32.totalorder %s17, 0
    %p153 = por %p151, %p152
    %p154 = scmp.ne.s32.totalorder %s140, %s141
    %p155 = scmp.eq.s32.totalorder %s18, 1
    %p156 = por %p154, %p155
    %p158 = scmp.ne.s32.totalorder %s141, %s157
    %p159 = scmp.eq.s32.totalorder %s18, 0
    %p160 = por %p158, %p159
    %p161 = scmp.le.s32.totalorder 1, %s12
    %p162 = scmp.lt.s32.totalorder %s12, 3
    %p163 = pnand %p161, %p162
    %p164 = pneg %p163
    // Predicated region
    $region9: #{bottleneck_forward.5} parent=5 // pred_check
      _
    $region10: #{bottleneck_forward.5} parent=5 // pred_check_branch
      %166 = sbr.rel (%p163) target = $region12
    $region11: #{bottleneck_forward.5} parent=5 // pred_region
      %s167 = ssub.s32 %s12, 1
      // Predicated region
      $region13: #{bottleneck_forward.5} parent=11 // pred_check
        %p168 = pneg %p59
      $region14: #{bottleneck_forward.5} parent=11 // pred_check_branch
        %170 = sbr.rel (%p168) target = $region16
      $region15: #{bottleneck_forward.5} parent=11 // pred_region
        _
      $region16: #{bottleneck_forward.5} parent=11 // pred_fallthru
        _
      // Predicated region
      $region17: #{bottleneck_forward.5} parent=11 // pred_check
        %p171 = pneg %p80
      $region18: #{bottleneck_forward.5} parent=11 // pred_check_branch
        %173 = sbr.rel (%p171) target = $region20
      $region19: #{bottleneck_forward.5} parent=11 // pred_region
        _
      $region20: #{bottleneck_forward.5} parent=11 // pred_fallthru
        _
      // Predicated region
      $region21: #{bottleneck_forward.5} parent=11 // pred_check
        %p174 = pneg %p101
      $region22: #{bottleneck_forward.5} parent=11 // pred_check_branch
        %176 = sbr.rel (%p174) target = $region24
      $region23: #{bottleneck_forward.5} parent=11 // pred_region
        _
      $region24: #{bottleneck_forward.5} parent=11 // pred_fallthru
        _
    $region12: #{bottleneck_forward.5} parent=5 // pred_fallthru
      _
    %p177 = scmp.lt.s32.totalorder %s12, 2
    // Predicated region
    $region25: #{bottleneck_forward.5} parent=5 // pred_check
      %p178 = pneg %p177
    $region26: #{bottleneck_forward.5} parent=5 // pred_check_branch
      %180 = sbr.rel (%p178) target = $region28
    $region27: #{bottleneck_forward.5} parent=5 // pred_region
      // Predicated region
      $region29: #{bottleneck_forward.5} parent=27 // pred_check
        %p181 = pneg %p32
      $region30: #{bottleneck_forward.5} parent=27 // pred_check_branch
        %183 = sbr.rel (%p181) target = $region32
      $region31: #{bottleneck_forward.5} parent=27 // pred_region
        %p184 = scmp.lt.s32.totalorder %s12, 1
        %s185 = scalar_select %p184, %s12, 1
        %s186 = smul.addr %s185, 32
        %s187 = smul.addr %s186, 8
        %s188 = scalar_lea.vmem %s0, %s187
      $region32: #{bottleneck_forward.5} parent=27 // pred_fallthru
        _
    $region28: #{bottleneck_forward.5} parent=5 // pred_fallthru
      _
    %p189 = scmp.le.s32.totalorder 1, %s12
    %p190 = scmp.lt.s32.totalorder %s12, 3
    %p191 = pnand %p189, %p190
    %p192 = pneg %p191
    // Predicated region
    $region33: #{bottleneck_forward.5} parent=5 // pred_check
      _
    $region34: #{bottleneck_forward.5} parent=5 // pred_check_branch
      %194 = sbr.rel (%p191) target = $region36
    $region35: #{bottleneck_forward.5} parent=5 // pred_region
      %s195 = ssub.s32 %s12, 1
      %p196 = scmp.lt.s32.totalorder %s17, 1
      %s197 = scalar_select %p196, %s17, 1
      %s198 = smul.addr %s197, 32
      %s199 = smul.addr %s198, 8
      %s200 = scalar_lea.vmem %s0, %s199
      %p201 = pneg %p38
      %p202 = pneg %p35
      %p203 = pneg %p59
      %p204 = pneg %p56
      %p205 = pneg %p80
      %p206 = pneg %p77
      %p207 = pneg %p101
      %p208 = pneg %p98
      %p209 = pneg %p127
      %p210 = pneg %p124
      %p211 = scmp.lt.s32.totalorder %s17, 1
      %s212 = scalar_select %p211, %s17, 1
      %s213 = smul.addr %s212, 32
      %s214 = smul.addr %s213, 8
      %s215 = scalar_lea.vmem %s4, %s214
      %p216 = pneg %p153
      %p217 = pneg %p150
      %p218 = scmp.lt.s32.totalorder %s17, 1
      %s219 = scalar_select %p218, %s17, 1
      %s220 = smul.addr %s219, 2
      %s221 = scalar_lea.vmem %s5, %s220
      %p222 = scmp.lt.s32.totalorder %s17, 1
      %s223 = scalar_select %p222, %s17, 1
      %s224 = smul.addr %s223, 32
      %s225 = smul.addr %s224, 8
      %s226 = scalar_lea.vmem %s0, %s225
      %p227 = scmp.lt.s32.totalorder %s17, 1
      %s228 = scalar_select %p227, %s17, 1
      %s229 = smul.addr %s228, 32
      %s230 = smul.addr %s229, 8
      %s231 = scalar_lea.vmem %s4, %s230
      %p232 = scmp.lt.s32.totalorder %s17, 1
      %s233 = scalar_select %p232, %s17, 1
      %s234 = smul.addr %s233, 2
      %s235 = scalar_lea.vmem %s5, %s234
      %v236 = vld [vmem:[%s226] sm:$0xff]
      %v237 = vld [vmem:[%s226 + $0x8] sm:$0xff]
      %v238 = vld [vmem:[%s226 + $0x10] sm:$0xff]
      %v239 = vld [vmem:[%s226 + $0x18] sm:$0xff]
      %v240 = vld [vmem:[%s226 + $0x20] sm:$0xff]
      %v241 = vld [vmem:[%s226 + $0x28] sm:$0xff]
      %v242 = vld [vmem:[%s226 + $0x30] sm:$0xff]
      %v243 = vld [vmem:[%s226 + $0x38] sm:$0xff]
      %v244 = vld [vmem:[%s226 + $0x40] sm:$0xff]
      %v245 = vld [vmem:[%s226 + $0x48] sm:$0xff]
      %v246 = vld [vmem:[%s226 + $0x50] sm:$0xff]
      %v247 = vld [vmem:[%s226 + $0x58] sm:$0xff]
      %v248 = vld [vmem:[%s226 + $0x60] sm:$0xff]
      %v249 = vld [vmem:[%s226 + $0x68] sm:$0xff]
      %v250 = vld [vmem:[%s226 + $0x70] sm:$0xff]
      %v251 = vld [vmem:[%s226 + $0x78] sm:$0xff]
      %v252 = vld [vmem:[%s226 + $0x80] sm:$0xff]
      %v253 = vld [vmem:[%s226 + $0x88] sm:$0xff]
      %v254 = vld [vmem:[%s226 + $0x90] sm:$0xff]
      %v255 = vld [vmem:[%s226 + $0x98] sm:$0xff]
      %v256 = vld [vmem:[%s226 + $0xa0] sm:$0xff]
      %v257 = vld [vmem:[%s226 + $0xa8] sm:$0xff]
      %v258 = vld [vmem:[%s226 + $0xb0] sm:$0xff]
      %v259 = vld [vmem:[%s226 + $0xb8] sm:$0xff]
      %v260 = vld [vmem:[%s226 + $0xc0] sm:$0xff]
      %v261 = vld [vmem:[%s226 + $0xc8] sm:$0xff]
      %v262 = vld [vmem:[%s226 + $0xd0] sm:$0xff]
      %v263 = vld [vmem:[%s226 + $0xd8] sm:$0xff]
      %v264 = vld [vmem:[%s226 + $0xe0] sm:$0xff]
      %v265 = vld [vmem:[%s226 + $0xe8] sm:$0xff]
      %v266 = vld [vmem:[%s226 + $0xf0] sm:$0xff]
      %v267 = vld [vmem:[%s226 + $0xf8] sm:$0xff]
      %v268 = vld [vmem:[%s1] sm:$0x1]
      %v270 = vlaneseq
      %v271 = vshrl.u32 %v270, 7
      %v272 = vsub.s32 0, %v271
      %v273 = vrot.slane %v268, %v272
      %v275 = vmul.f32 %v236, %v273
      %v276 = vmul.f32 %v237, %v273
      %v277 = vmul.f32 %v238, %v273
      %v278 = vmul.f32 %v239, %v273
      %v279 = vmul.f32 %v240, %v273
      %v280 = vmul.f32 %v241, %v273
      %v281 = vmul.f32 %v242, %v273
      %v282 = vmul.f32 %v243, %v273
      %v283 = vmul.f32 %v244, %v273
      %v284 = vmul.f32 %v245, %v273
      %v285 = vmul.f32 %v246, %v273
      %v286 = vmul.f32 %v247, %v273
      %v287 = vmul.f32 %v248, %v273
      %v288 = vmul.f32 %v249, %v273
      %v289 = vmul.f32 %v250, %v273
      %v290 = vmul.f32 %v251, %v273
      %v291 = vmul.f32 %v252, %v273
      %v292 = vmul.f32 %v253, %v273
      %v293 = vmul.f32 %v254, %v273
      %v294 = vmul.f32 %v255, %v273
      %v295 = vmul.f32 %v256, %v273
      %v296 = vmul.f32 %v257, %v273
      %v297 = vmul.f32 %v258, %v273
      %v298 = vmul.f32 %v259, %v273
      %v299 = vmul.f32 %v260, %v273
      %v300 = vmul.f32 %v261, %v273
      %v301 = vmul.f32 %v262, %v273
      %v302 = vmul.f32 %v263, %v273
      %v303 = vmul.f32 %v264, %v273
      %v304 = vmul.f32 %v265, %v273
      %v305 = vmul.f32 %v266, %v273
      %v306 = vmul.f32 %v267, %v273
      %v307 = vld [vmem:[%s2] sm:$0x1]
      %v309 = vlaneseq
      %v310 = vshrl.u32 %v309, 7
      %v311 = vsub.s32 0, %v310
      %v312 = vrot.slane %v307, %v311
      %v314 = vadd.f32 %v275, %v312
      %v315 = vadd.f32 %v276, %v312
      %v316 = vadd.f32 %v277, %v312
      %v317 = vadd.f32 %v278, %v312
      %v318 = vadd.f32 %v279, %v312
      %v319 = vadd.f32 %v280, %v312
      %v320 = vadd.f32 %v281, %v312
      %v321 = vadd.f32 %v282, %v312
      %v322 = vadd.f32 %v283, %v312
      %v323 = vadd.f32 %v284, %v312
      %v324 = vadd.f32 %v285, %v312
      %v325 = vadd.f32 %v286, %v312
      %v326 = vadd.f32 %v287, %v312
      %v327 = vadd.f32 %v288, %v312
      %v328 = vadd.f32 %v289, %v312
      %v329 = vadd.f32 %v290, %v312
      %v330 = vadd.f32 %v291, %v312
      %v331 = vadd.f32 %v292, %v312
      %v332 = vadd.f32 %v293, %v312
      %v333 = vadd.f32 %v294, %v312
      %v334 = vadd.f32 %v295, %v312
      %v335 = vadd.f32 %v296, %v312
      %v336 = vadd.f32 %v297, %v312
      %v337 = vadd.f32 %v298, %v312
      %v338 = vadd.f32 %v299, %v312
      %v339 = vadd.f32 %v300, %v312
      %v340 = vadd.f32 %v301, %v312
      %v341 = vadd.f32 %v302, %v312
      %v342 = vadd.f32 %v303, %v312
      %v343 = vadd.f32 %v304, %v312
      %v344 = vadd.f32 %v305, %v312
      %v345 = vadd.f32 %v306, %v312
      %v346 = vmax.f32 %v314, 0.0
      %v347 = vmax.f32 %v315, 0.0
      %v348 = vmax.f32 %v316, 0.0
      %v349 = vmax.f32 %v317, 0.0
      %v350 = vmax.f32 %v318, 0.0
      %v351 = vmax.f32 %v319, 0.0
      %v352 = vmax.f32 %v320, 0.0
      %v353 = vmax.f32 %v321, 0.0
      %v354 = vmax.f32 %v322, 0.0
      %v355 = vmax.f32 %v323, 0.0
      %v356 = vmax.f32 %v324, 0.0
      %v357 = vmax.f32 %v325, 0.0
      %v358 = vmax.f32 %v326, 0.0
      %v359 = vmax.f32 %v327, 0.0
      %v360 = vmax.f32 %v328, 0.0
      %v361 = vmax.f32 %v329, 0.0
      %v362 = vmax.f32 %v330, 0.0
      %v363 = vmax.f32 %v331, 0.0
      %v364 = vmax.f32 %v332, 0.0
      %v365 = vmax.f32 %v333, 0.0
      %v366 = vmax.f32 %v334, 0.0
      %v367 = vmax.f32 %v335, 0.0
      %v368 = vmax.f32 %v336, 0.0
      %v369 = vmax.f32 %v337, 0.0
      %v370 = vmax.f32 %v338, 0.0
      %v371 = vmax.f32 %v339, 0.0
      %v372 = vmax.f32 %v340, 0.0
      %v373 = vmax.f32 %v341, 0.0
      %v374 = vmax.f32 %v342, 0.0
      %v375 = vmax.f32 %v343, 0.0
      %v376 = vmax.f32 %v344, 0.0
      %v377 = vmax.f32 %v345, 0.0
      %378 = vst [vmem:[#allocation2] sm:$0xff] 0.0
      %379 = vst [vmem:[#allocation2 + $0x8] sm:$0xff] 0.0
      %380 = vst [vmem:[#allocation2 + $0x10] sm:$0x3] 0.0
      %s381 = scalar_lea.vmem [#allocation2], 408
      %382 = vst [vmem:[%s381] sm:$0xff] 0.0
      %383 = vst [vmem:[%s381 + $0x8] sm:$0xff] 0.0
      %384 = vst [vmem:[%s381 + $0x10] sm:$0x3] 0.0
      %s385 = scalar_lea.vmem [#allocation2], 24
      %386 = vst [vmem:[%s385] sm:$0x1] 0.0
      %387 = vst [vmem:[%s385 + $0x18] sm:$0x1] 0.0
      %388 = vst [vmem:[%s385 + $0x30] sm:$0x1] 0.0
      %389 = vst [vmem:[%s385 + $0x48] sm:$0x1] 0.0
      %390 = vst [vmem:[%s385 + $0x60] sm:$0x1] 0.0
      %391 = vst [vmem:[%s385 + $0x78] sm:$0x1] 0.0
      %392 = vst [vmem:[%s385 + $0x90] sm:$0x1] 0.0
      %393 = vst [vmem:[%s385 + $0xa8] sm:$0x1] 0.0
      %394 = vst [vmem:[%s385 + $0xc0] sm:$0x1] 0.0
      %395 = vst [vmem:[%s385 + $0xd8] sm:$0x1] 0.0
      %396 = vst [vmem:[%s385 + $0xf0] sm:$0x1] 0.0
      %397 = vst [vmem:[%s385 + $0x108] sm:$0x1] 0.0
      %398 = vst [vmem:[%s385 + $0x120] sm:$0x1] 0.0
      %399 = vst [vmem:[%s385 + $0x138] sm:$0x1] 0.0
      %400 = vst [vmem:[%s385 + $0x150] sm:$0x1] 0.0
      %401 = vst [vmem:[%s385 + $0x168] sm:$0x1] 0.0
      %402 = vst [vmem:[%s385 + $0x11] sm:$0x1] 0.0
      %403 = vst [vmem:[%s385 + $0x29] sm:$0x1] 0.0
      %404 = vst [vmem:[%s385 + $0x41] sm:$0x1] 0.0
      %405 = vst [vmem:[%s385 + $0x59] sm:$0x1] 0.0
      %406 = vst [vmem:[%s385 + $0x71] sm:$0x1] 0.0
      %407 = vst [vmem:[%s385 + $0x89] sm:$0x1] 0.0
      %408 = vst [vmem:[%s385 + $0xa1] sm:$0x1] 0.0
      %409 = vst [vmem:[%s385 + $0xb9] sm:$0x1] 0.0
      %410 = vst [vmem:[%s385 + $0xd1] sm:$0x1] 0.0
      %411 = vst [vmem:[%s385 + $0xe9] sm:$0x1] 0.0
      %412 = vst [vmem:[%s385 + $0x101] sm:$0x1] 0.0
      %413 = vst [vmem:[%s385 + $0x119] sm:$0x1] 0.0
      %414 = vst [vmem:[%s385 + $0x131] sm:$0x1] 0.0
      %415 = vst [vmem:[%s385 + $0x149] sm:$0x1] 0.0
      %416 = vst [vmem:[%s385 + $0x161] sm:$0x1] 0.0
      %417 = vst [vmem:[%s385 + $0x179] sm:$0x1] 0.0
      %418 = vst [vmem:[%s385 + $0x1] sm:$0xff] %v346
      %419 = vst [vmem:[%s385 + $0x9] sm:$0xff] %v347
      %420 = vst [vmem:[%s385 + $0x19] sm:$0xff] %v348
      %421 = vst [vmem:[%s385 + $0x21] sm:$0xff] %v349
      %422 = vst [vmem:[%s385 + $0x31] sm:$0xff] %v350
      %423 = vst [vmem:[%s385 + $0x39] sm:$0xff] %v351
      %424 = vst [vmem:[%s385 + $0x49] sm:$0xff] %v352
      %425 = vst [vmem:[%s385 + $0x51] sm:$0xff] %v353
      %426 = vst [vmem:[%s385 + $0x61] sm:$0xff] %v354
      %427 = vst [vmem:[%s385 + $0x69] sm:$0xff] %v355
      %428 = vst [vmem:[%s385 + $0x79] sm:$0xff] %v356
      %429 = vst [vmem:[%s385 + $0x81] sm:$0xff] %v357
      %430 = vst [vmem:[%s385 + $0x91] sm:$0xff] %v358
      %431 = vst [vmem:[%s385 + $0x99] sm:$0xff] %v359
      %432 = vst [vmem:[%s385 + $0xa9] sm:$0xff] %v360
      %433 = vst [vmem:[%s385 + $0xb1] sm:$0xff] %v361
      %434 = vst [vmem:[%s385 + $0xc1] sm:$0xff] %v362
      %435 = vst [vmem:[%s385 + $0xc9] sm:$0xff] %v363
      %436 = vst [vmem:[%s385 + $0xd9] sm:$0xff] %v364
      %437 = vst [vmem:[%s385 + $0xe1] sm:$0xff] %v365
      %438 = vst [vmem:[%s385 + $0xf1] sm:$0xff] %v366
      %439 = vst [vmem:[%s385 + $0xf9] sm:$0xff] %v367
      %440 = vst [vmem:[%s385 + $0x109] sm:$0xff] %v368
      %441 = vst [vmem:[%s385 + $0x111] sm:$0xff] %v369
      %442 = vst [vmem:[%s385 + $0x121] sm:$0xff] %v370
      %443 = vst [vmem:[%s385 + $0x129] sm:$0xff] %v371
      %444 = vst [vmem:[%s385 + $0x139] sm:$0xff] %v372
      %445 = vst [vmem:[%s385 + $0x141] sm:$0xff] %v373
      %446 = vst [vmem:[%s385 + $0x151] sm:$0xff] %v374
      %447 = vst [vmem:[%s385 + $0x159] sm:$0xff] %v375
      %448 = vst [vmem:[%s385 + $0x169] sm:$0xff] %v376
      %449 = vst [vmem:[%s385 + $0x171] sm:$0xff] %v377
      %v450 = vld [vmem:[#allocation2] sm:$0xff]
      %v451 = vld [vmem:[#allocation2 + $0x8] sm:$0xff]
      %v452 = vld [vmem:[#allocation2 + $0x18] sm:$0xff]
      %v453 = vld [vmem:[#allocation2 + $0x20] sm:$0xff]
      %v454 = vld [vmem:[#allocation2 + $0x30] sm:$0xff]
      %v455 = vld [vmem:[#allocation2 + $0x38] sm:$0xff]
      %v456 = vld [vmem:[#allocation2 + $0x48] sm:$0xff]
      %v457 = vld [vmem:[#allocation2 + $0x50] sm:$0xff]
      %v458 = vld [vmem:[#allocation2 + $0x60] sm:$0xff]
      %v459 = vld [vmem:[#allocation2 + $0x68] sm:$0xff]
      %v460 = vld [vmem:[#allocation2 + $0x78] sm:$0xff]
      %v461 = vld [vmem:[#allocation2 + $0x80] sm:$0xff]
      %v462 = vld [vmem:[#allocation2 + $0x90] sm:$0xff]
      %v463 = vld [vmem:[#allocation2 + $0x98] sm:$0xff]
      %v464 = vld [vmem:[#allocation2 + $0xa8] sm:$0xff]
      %v465 = vld [vmem:[#allocation2 + $0xb0] sm:$0xff]
      %v466 = vld [vmem:[#allocation2 + $0xc0] sm:$0xff]
      %v467 = vld [vmem:[#allocation2 + $0xc8] sm:$0xff]
      %v468 = vld [vmem:[#allocation2 + $0xd8] sm:$0xff]
      %v469 = vld [vmem:[#allocation2 + $0xe0] sm:$0xff]
      %v470 = vld [vmem:[#allocation2 + $0xf0] sm:$0xff]
      %v471 = vld [vmem:[#allocation2 + $0xf8] sm:$0xff]
      %v472 = vld [vmem:[#allocation2 + $0x108] sm:$0xff]
      %v473 = vld [vmem:[#allocation2 + $0x110] sm:$0xff]
      %v474 = vld [vmem:[#allocation2 + $0x120] sm:$0xff]
      %v475 = vld [vmem:[#allocation2 + $0x128] sm:$0xff]
      %v476 = vld [vmem:[#allocation2 + $0x138] sm:$0xff]
      %v477 = vld [vmem:[#allocation2 + $0x140] sm:$0xff]
      %v478 = vld [vmem:[#allocation2 + $0x150] sm:$0xff]
      %v479 = vld [vmem:[#allocation2 + $0x158] sm:$0xff]
      %v480 = vld [vmem:[#allocation2 + $0x168] sm:$0xff]
      %v481 = vld [vmem:[#allocation2 + $0x170] sm:$0xff]
      %482 = vst [vmem:[#allocation3] sm:$0xff] %v450
      %483 = vst [vmem:[#allocation3 + $0x48] sm:$0xff] %v451
      %484 = vst [vmem:[#allocation3 + $0x90] sm:$0xff] %v452
      %485 = vst [vmem:[#allocation3 + $0xd8] sm:$0xff] %v453
      %486 = vst [vmem:[#allocation3 + $0x120] sm:$0xff] %v454
      %487 = vst [vmem:[#allocation3 + $0x168] sm:$0xff] %v455
      %488 = vst [vmem:[#allocation3 + $0x1b0] sm:$0xff] %v456
      %489 = vst [vmem:[#allocation3 + $0x1f8] sm:$0xff] %v457
      %490 = vst [vmem:[#allocation3 + $0x240] sm:$0xff] %v458
      %491 = vst [vmem:[#allocation3 + $0x288] sm:$0xff] %v459
      %492 = vst [vmem:[#allocation3 + $0x2d0] sm:$0xff] %v460
      %493 = vst [vmem:[#allocation3 + $0x318] sm:$0xff] %v461
      %494 = vst [vmem:[#allocation3 + $0x360] sm:$0xff] %v462
      %495 = vst [vmem:[#allocation3 + $0x3a8] sm:$0xff] %v463
      %496 = vst [vmem:[#allocation3 + $0x3f0] sm:$0xff] %v464
      %497 = vst [vmem:[#allocation3 + $0x438] sm:$0xff] %v465
      %498 = vst [vmem:[#allocation3 + $0x480] sm:$0xff] %v466
      %499 = vst [vmem:[#allocation3 + $0x4c8] sm:$0xff] %v467
      %500 = vst [vmem:[#allocation3 + $0x510] sm:$0xff] %v468
      %501 = vst [vmem:[#allocation3 + $0x558] sm:$0xff] %v469
      %502 = vst [vmem:[#allocation3 + $0x5a0] sm:$0xff] %v470
      %503 = vst [vmem:[#allocation3 + $0x5e8] sm:$0xff] %v471
      %504 = vst [vmem:[#allocation3 + $0x630] sm:$0xff] %v472
      %505 = vst [vmem:[#allocation3 + $0x678] sm:$0xff] %v473
      %506 = vst [vmem:[#allocation3 + $0x6c0] sm:$0xff] %v474
      %507 = vst [vmem:[#allocation3 + $0x708] sm:$0xff] %v475
      %508 = vst [vmem:[#allocation3 + $0x750] sm:$0xff] %v476
      %509 = vst [vmem:[#allocation3 + $0x798] sm:$0xff] %v477
      %510 = vst [vmem:[#allocation3 + $0x7e0] sm:$0xff] %v478
      %511 = vst [vmem:[#allocation3 + $0x828] sm:$0xff] %v479
      %512 = vst [vmem:[#allocation3 + $0x870] sm:$0xff] %v480
      %513 = vst [vmem:[#allocation3 + $0x8b8] sm:$0xff] %v481
      %v514 = vld [vmem:[#allocation2 + $0x1] sm:$0xff]
      %v515 = vld [vmem:[#allocation2 + $0x9] sm:$0xff]
      %v516 = vld [vmem:[#allocation2 + $0x19] sm:$0xff]
      %v517 = vld [vmem:[#allocation2 + $0x21] sm:$0xff]
      %v518 = vld [vmem:[#allocation2 + $0x31] sm:$0xff]
      %v519 = vld [vmem:[#allocation2 + $0x39] sm:$0xff]
      %v520 = vld [vmem:[#allocation2 + $0x49] sm:$0xff]
      %v521 = vld [vmem:[#allocation2 + $0x51] sm:$0xff]
      %v522 = vld [vmem:[#allocation2 + $0x61] sm:$0xff]
      %v523 = vld [vmem:[#allocation2 + $0x69] sm:$0xff]
      %v524 = vld [vmem:[#allocation2 + $0x79] sm:$0xff]
      %v525 = vld [vmem:[#allocation2 + $0x81] sm:$0xff]
      %v526 = vld [vmem:[#allocation2 + $0x91] sm:$0xff]
      %v527 = vld [vmem:[#allocation2 + $0x99] sm:$0xff]
      %v528 = vld [vmem:[#allocation2 + $0xa9] sm:$0xff]
      %v529 = vld [vmem:[#allocation2 + $0xb1] sm:$0xff]
      %v530 = vld [vmem:[#allocation2 + $0xc1] sm:$0xff]
      %v531 = vld [vmem:[#allocation2 + $0xc9] sm:$0xff]
      %v532 = vld [vmem:[#allocation2 + $0xd9] sm:$0xff]
      %v533 = vld [vmem:[#allocation2 + $0xe1] sm:$0xff]
      %v534 = vld [vmem:[#allocation2 + $0xf1] sm:$0xff]
      %v535 = vld [vmem:[#allocation2 + $0xf9] sm:$0xff]
      %v536 = vld [vmem:[#allocation2 + $0x109] sm:$0xff]
      %v537 = vld [vmem:[#allocation2 + $0x111] sm:$0xff]
      %v538 = vld [vmem:[#allocation2 + $0x121] sm:$0xff]
      %v539 = vld [vmem:[#allocation2 + $0x129] sm:$0xff]
      %v540 = vld [vmem:[#allocation2 + $0x139] sm:$0xff]
      %v541 = vld [vmem:[#allocation2 + $0x141] sm:$0xff]
      %v542 = vld [vmem:[#allocation2 + $0x151] sm:$0xff]
      %v543 = vld [vmem:[#allocation2 + $0x159] sm:$0xff]
      %v544 = vld [vmem:[#allocation2 + $0x169] sm:$0xff]
      %v545 = vld [vmem:[#allocation2 + $0x171] sm:$0xff]
      %546 = vst [vmem:[#allocation3 + $0x8] sm:$0xff] %v514
      %547 = vst [vmem:[#allocation3 + $0x50] sm:$0xff] %v515
      %548 = vst [vmem:[#allocation3 + $0x98] sm:$0xff] %v516
      %549 = vst [vmem:[#allocation3 + $0xe0] sm:$0xff] %v517
      %550 = vst [vmem:[#allocation3 + $0x128] sm:$0xff] %v518
      %551 = vst [vmem:[#allocation3 + $0x170] sm:$0xff] %v519
      %552 = vst [vmem:[#allocation3 + $0x1b8] sm:$0xff] %v520
      %553 = vst [vmem:[#allocation3 + $0x200] sm:$0xff] %v521
      %554 = vst [vmem:[#allocation3 + $0x248] sm:$0xff] %v522
      %555 = vst [vmem:[#allocation3 + $0x290] sm:$0xff] %v523
      %556 = vst [vmem:[#allocation3 + $0x2d8] sm:$0xff] %v524
      %557 = vst [vmem:[#allocation3 + $0x320] sm:$0xff] %v525
      %558 = vst [vmem:[#allocation3 + $0x368] sm:$0xff] %v526
      %559 = vst [vmem:[#allocation3 + $0x3b0] sm:$0xff] %v527
      %560 = vst [vmem:[#allocation3 + $0x3f8] sm:$0xff] %v528
      %561 = vst [vmem:[#allocation3 + $0x440] sm:$0xff] %v529
      %562 = vst [vmem:[#allocation3 + $0x488] sm:$0xff] %v530
      %563 = vst [vmem:[#allocation3 + $0x4d0] sm:$0xff] %v531
      %564 = vst [vmem:[#allocation3 + $0x518] sm:$0xff] %v532
      %565 = vst [vmem:[#allocation3 + $0x560] sm:$0xff] %v533
      %566 = vst [vmem:[#allocation3 + $0x5a8] sm:$0xff] %v534
      %567 = vst [vmem:[#allocation3 + $0x5f0] sm:$0xff] %v535
      %568 = vst [vmem:[#allocation3 + $0x638] sm:$0xff] %v536
      %569 = vst [vmem:[#allocation3 + $0x680] sm:$0xff] %v537
      %570 = vst [vmem:[#allocation3 + $0x6c8] sm:$0xff] %v538
      %571 = vst [vmem:[#allocation3 + $0x710] sm:$0xff] %v539
      %572 = vst [vmem:[#allocation3 + $0x758] sm:$0xff] %v540
      %573 = vst [vmem:[#allocation3 + $0x7a0] sm:$0xff] %v541
      %574 = vst [vmem:[#allocation3 + $0x7e8] sm:$0xff] %v542
      %575 = vst [vmem:[#allocation3 + $0x830] sm:$0xff] %v543
      %576 = vst [vmem:[#allocation3 + $0x878] sm:$0xff] %v544
      %577 = vst [vmem:[#allocation3 + $0x8c0] sm:$0xff] %v545
      %v578 = vld [vmem:[#allocation2 + $0x2] sm:$0xff]
      %v579 = vld [vmem:[#allocation2 + $0xa] sm:$0xff]
      %v580 = vld [vmem:[#allocation2 + $0x1a] sm:$0xff]
      %v581 = vld [vmem:[#allocation2 + $0x22] sm:$0xff]
      %v582 = vld [vmem:[#allocation2 + $0x32] sm:$0xff]
      %v583 = vld [vmem:[#allocation2 + $0x3a] sm:$0xff]
      %v584 = vld [vmem:[#allocation2 + $0x4a] sm:$0xff]
      %v585 = vld [vmem:[#allocation2 + $0x52] sm:$0xff]
      %v586 = vld [vmem:[#allocation2 + $0x62] sm:$0xff]
      %v587 = vld [vmem:[#allocation2 + $0x6a] sm:$0xff]
      %v588 = vld [vmem:[#allocation2 + $0x7a] sm:$0xff]
      %v589 = vld [vmem:[#allocation2 + $0x82] sm:$0xff]
      %v590 = vld [vmem:[#allocation2 + $0x92] sm:$0xff]
      %v591 = vld [vmem:[#allocation2 + $0x9a] sm:$0xff]
      %v592 = vld [vmem:[#allocation2 + $0xaa] sm:$0xff]
      %v593 = vld [vmem:[#allocation2 + $0xb2] sm:$0xff]
      %v594 = vld [vmem:[#allocation2 + $0xc2] sm:$0xff]
      %v595 = vld [vmem:[#allocation2 + $0xca] sm:$0xff]
      %v596 = vld [vmem:[#allocation2 + $0xda] sm:$0xff]
      %v597 = vld [vmem:[#allocation2 + $0xe2] sm:$0xff]
      %v598 = vld [vmem:[#allocation2 + $0xf2] sm:$0xff]
      %v599 = vld [vmem:[#allocation2 + $0xfa] sm:$0xff]
      %v600 = vld [vmem:[#allocation2 + $0x10a] sm:$0xff]
      %v601 = vld [vmem:[#allocation2 + $0x112] sm:$0xff]
      %v602 = vld [vmem:[#allocation2 + $0x122] sm:$0xff]
      %v603 = vld [vmem:[#allocation2 + $0x12a] sm:$0xff]
      %v604 = vld [vmem:[#allocation2 + $0x13a] sm:$0xff]
      %v605 = vld [vmem:[#allocation2 + $0x142] sm:$0xff]
      %v606 = vld [vmem:[#allocation2 + $0x152] sm:$0xff]
      %v607 = vld [vmem:[#allocation2 + $0x15a] sm:$0xff]
      %v608 = vld [vmem:[#allocation2 + $0x16a] sm:$0xff]
      %v609 = vld [vmem:[#allocation2 + $0x172] sm:$0xff]
      %610 = vst [vmem:[#allocation3 + $0x10] sm:$0xff] %v578
      %611 = vst [vmem:[#allocation3 + $0x58] sm:$0xff] %v579
      %612 = vst [vmem:[#allocation3 + $0xa0] sm:$0xff] %v580
      %613 = vst [vmem:[#allocation3 + $0xe8] sm:$0xff] %v581
      %614 = vst [vmem:[#allocation3 + $0x130] sm:$0xff] %v582
      %615 = vst [vmem:[#allocation3 + $0x178] sm:$0xff] %v583
      %616 = vst [vmem:[#allocation3 + $0x1c0] sm:$0xff] %v584
      %617 = vst [vmem:[#allocation3 + $0x208] sm:$0xff] %v585
      %618 = vst [vmem:[#allocation3 + $0x250] sm:$0xff] %v586
      %619 = vst [vmem:[#allocation3 + $0x298] sm:$0xff] %v587
      %620 = vst [vmem:[#allocation3 + $0x2e0] sm:$0xff] %v588
      %621 = vst [vmem:[#allocation3 + $0x328] sm:$0xff] %v589
      %622 = vst [vmem:[#allocation3 + $0x370] sm:$0xff] %v590
      %623 = vst [vmem:[#allocation3 + $0x3b8] sm:$0xff] %v591
      %624 = vst [vmem:[#allocation3 + $0x400] sm:$0xff] %v592
      %625 = vst [vmem:[#allocation3 + $0x448] sm:$0xff] %v593
      %626 = vst [vmem:[#allocation3 + $0x490] sm:$0xff] %v594
      %627 = vst [vmem:[#allocation3 + $0x4d8] sm:$0xff] %v595
      %628 = vst [vmem:[#allocation3 + $0x520] sm:$0xff] %v596
      %629 = vst [vmem:[#allocation3 + $0x568] sm:$0xff] %v597
      %630 = vst [vmem:[#allocation3 + $0x5b0] sm:$0xff] %v598
      %631 = vst [vmem:[#allocation3 + $0x5f8] sm:$0xff] %v599
      %632 = vst [vmem:[#allocation3 + $0x640] sm:$0xff] %v600
      %633 = vst [vmem:[#allocation3 + $0x688] sm:$0xff] %v601
      %634 = vst [vmem:[#allocation3 + $0x6d0] sm:$0xff] %v602
      %635 = vst [vmem:[#allocation3 + $0x718] sm:$0xff] %v603
      %636 = vst [vmem:[#allocation3 + $0x760] sm:$0xff] %v604
      %637 = vst [vmem:[#allocation3 + $0x7a8] sm:$0xff] %v605
      %638 = vst [vmem:[#allocation3 + $0x7f0] sm:$0xff] %v606
      %639 = vst [vmem:[#allocation3 + $0x838] sm:$0xff] %v607
      %640 = vst [vmem:[#allocation3 + $0x880] sm:$0xff] %v608
      %641 = vst [vmem:[#allocation3 + $0x8c8] sm:$0xff] %v609
      %v642 = vld [vmem:[%s385] sm:$0xff]
      %v643 = vld [vmem:[%s385 + $0x8] sm:$0xff]
      %v644 = vld [vmem:[%s385 + $0x18] sm:$0xff]
      %v645 = vld [vmem:[%s385 + $0x20] sm:$0xff]
      %v646 = vld [vmem:[%s385 + $0x30] sm:$0xff]
      %v647 = vld [vmem:[%s385 + $0x38] sm:$0xff]
      %v648 = vld [vmem:[%s385 + $0x48] sm:$0xff]
      %v649 = vld [vmem:[%s385 + $0x50] sm:$0xff]
      %v650 = vld [vmem:[%s385 + $0x60] sm:$0xff]
      %v651 = vld [vmem:[%s385 + $0x68] sm:$0xff]
      %v652 = vld [vmem:[%s385 + $0x78] sm:$0xff]
      %v653 = vld [vmem:[%s385 + $0x80] sm:$0xff]
      %v654 = vld [vmem:[%s385 + $0x90] sm:$0xff]
      %v655 = vld [vmem:[%s385 + $0x98] sm:$0xff]
      %v656 = vld [vmem:[%s385 + $0xa8] sm:$0xff]
      %v657 = vld [vmem:[%s385 + $0xb0] sm:$0xff]
      %v658 = vld [vmem:[%s385 + $0xc0] sm:$0xff]
      %v659 = vld [vmem:[%s385 + $0xc8] sm:$0xff]
      %v660 = vld [vmem:[%s385 + $0xd8] sm:$0xff]
      %v661 = vld [vmem:[%s385 + $0xe0] sm:$0xff]
      %v662 = vld [vmem:[%s385 + $0xf0] sm:$0xff]
      %v663 = vld [vmem:[%s385 + $0xf8] sm:$0xff]
      %v664 = vld [vmem:[%s385 + $0x108] sm:$0xff]
      %v665 = vld [vmem:[%s385 + $0x110] sm:$0xff]
      %v666 = vld [vmem:[%s385 + $0x120] sm:$0xff]
      %v667 = vld [vmem:[%s385 + $0x128] sm:$0xff]
      %v668 = vld [vmem:[%s385 + $0x138] sm:$0xff]
      %v669 = vld [vmem:[%s385 + $0x140] sm:$0xff]
      %v670 = vld [vmem:[%s385 + $0x150] sm:$0xff]
      %v671 = vld [vmem:[%s385 + $0x158] sm:$0xff]
      %v672 = vld [vmem:[%s385 + $0x168] sm:$0xff]
      %v673 = vld [vmem:[%s385 + $0x170] sm:$0xff]
      %674 = vst [vmem:[#allocation3 + $0x18] sm:$0xff] %v642
      %675 = vst [vmem:[#allocation3 + $0x60] sm:$0xff] %v643
      %676 = vst [vmem:[#allocation3 + $0xa8] sm:$0xff] %v644
      %677 = vst [vmem:[#allocation3 + $0xf0] sm:$0xff] %v645
      %678 = vst [vmem:[#allocation3 + $0x138] sm:$0xff] %v646
      %679 = vst [vmem:[#allocation3 + $0x180] sm:$0xff] %v647
      %680 = vst [vmem:[#allocation3 + $0x1c8] sm:$0xff] %v648
      %681 = vst [vmem:[#allocation3 + $0x210] sm:$0xff] %v649
      %682 = vst [vmem:[#allocation3 + $0x258] sm:$0xff] %v650
      %683 = vst [vmem:[#allocation3 + $0x2a0] sm:$0xff] %v651
      %684 = vst [vmem:[#allocation3 + $0x2e8] sm:$0xff] %v652
      %685 = vst [vmem:[#allocation3 + $0x330] sm:$0xff] %v653
      %686 = vst [vmem:[#allocation3 + $0x378] sm:$0xff] %v654
      %687 = vst [vmem:[#allocation3 + $0x3c0] sm:$0xff] %v655
      %688 = vst [vmem:[#allocation3 + $0x408] sm:$0xff] %v656
      %689 = vst [vmem:[#allocation3 + $0x450] sm:$0xff] %v657
      %690 = vst [vmem:[#allocation3 + $0x498] sm:$0xff] %v658
      %691 = vst [vmem:[#allocation3 + $0x4e0] sm:$0xff] %v659
      %692 = vst [vmem:[#allocation3 + $0x528] sm:$0xff] %v660
      %693 = vst [vmem:[#allocation3 + $0x570] sm:$0xff] %v661
      %694 = vst [vmem:[#allocation3 + $0x5b8] sm:$0xff] %v662
      %695 = vst [vmem:[#allocation3 + $0x600] sm:$0xff] %v663
      %696 = vst [vmem:[#allocation3 + $0x648] sm:$0xff] %v664
      %697 = vst [vmem:[#allocation3 + $0x690] sm:$0xff] %v665
      %698 = vst [vmem:[#allocation3 + $0x6d8] sm:$0xff] %v666
      %699 = vst [vmem:[#allocation3 + $0x720] sm:$0xff] %v667
      %700 = vst [vmem:[#allocation3 + $0x768] sm:$0xff] %v668
      %701 = vst [vmem:[#allocation3 + $0x7b0] sm:$0xff] %v669
      %702 = vst [vmem:[#allocation3 + $0x7f8] sm:$0xff] %v670
      %703 = vst [vmem:[#allocation3 + $0x840] sm:$0xff] %v671
      %704 = vst [vmem:[#allocation3 + $0x888] sm:$0xff] %v672
      %705 = vst [vmem:[#allocation3 + $0x8d0] sm:$0xff] %v673
      %v706 = vld [vmem:[%s385 + $0x1] sm:$0xff]
      %v707 = vld [vmem:[%s385 + $0x9] sm:$0xff]
      %v708 = vld [vmem:[%s385 + $0x19] sm:$0xff]
      %v709 = vld [vmem:[%s385 + $0x21] sm:$0xff]
      %v710 = vld [vmem:[%s385 + $0x31] sm:$0xff]
      %v711 = vld [vmem:[%s385 + $0x39] sm:$0xff]
      %v712 = vld [vmem:[%s385 + $0x49] sm:$0xff]
      %v713 = vld [vmem:[%s385 + $0x51] sm:$0xff]
      %v714 = vld [vmem:[%s385 + $0x61] sm:$0xff]
      %v715 = vld [vmem:[%s385 + $0x69] sm:$0xff]
      %v716 = vld [vmem:[%s385 + $0x79] sm:$0xff]
      %v717 = vld [vmem:[%s385 + $0x81] sm:$0xff]
      %v718 = vld [vmem:[%s385 + $0x91] sm:$0xff]
      %v719 = vld [vmem:[%s385 + $0x99] sm:$0xff]
      %v720 = vld [vmem:[%s385 + $0xa9] sm:$0xff]
      %v721 = vld [vmem:[%s385 + $0xb1] sm:$0xff]
      %v722 = vld [vmem:[%s385 + $0xc1] sm:$0xff]
      %v723 = vld [vmem:[%s385 + $0xc9] sm:$0xff]
      %v724 = vld [vmem:[%s385 + $0xd9] sm:$0xff]
      %v725 = vld [vmem:[%s385 + $0xe1] sm:$0xff]
      %v726 = vld [vmem:[%s385 + $0xf1] sm:$0xff]
      %v727 = vld [vmem:[%s385 + $0xf9] sm:$0xff]
      %v728 = vld [vmem:[%s385 + $0x109] sm:$0xff]
      %v729 = vld [vmem:[%s385 + $0x111] sm:$0xff]
      %v730 = vld [vmem:[%s385 + $0x121] sm:$0xff]
      %v731 = vld [vmem:[%s385 + $0x129] sm:$0xff]
      %v732 = vld [vmem:[%s385 + $0x139] sm:$0xff]
      %v733 = vld [vmem:[%s385 + $0x141] sm:$0xff]
      %v734 = vld [vmem:[%s385 + $0x151] sm:$0xff]
      %v735 = vld [vmem:[%s385 + $0x159] sm:$0xff]
      %v736 = vld [vmem:[%s385 + $0x169] sm:$0xff]
      %v737 = vld [vmem:[%s385 + $0x171] sm:$0xff]
      %738 = vst [vmem:[#allocation3 + $0x20] sm:$0xff] %v706
      %739 = vst [vmem:[#allocation3 + $0x68] sm:$0xff] %v707
      %740 = vst [vmem:[#allocation3 + $0xb0] sm:$0xff] %v708
      %741 = vst [vmem:[#allocation3 + $0xf8] sm:$0xff] %v709
      %742 = vst [vmem:[#allocation3 + $0x140] sm:$0xff] %v710
      %743 = vst [vmem:[#allocation3 + $0x188] sm:$0xff] %v711
      %744 = vst [vmem:[#allocation3 + $0x1d0] sm:$0xff] %v712
      %745 = vst [vmem:[#allocation3 + $0x218] sm:$0xff] %v713
      %746 = vst [vmem:[#allocation3 + $0x260] sm:$0xff] %v714
      %747 = vst [vmem:[#allocation3 + $0x2a8] sm:$0xff] %v715
      %748 = vst [vmem:[#allocation3 + $0x2f0] sm:$0xff] %v716
      %749 = vst [vmem:[#allocation3 + $0x338] sm:$0xff] %v717
      %750 = vst [vmem:[#allocation3 + $0x380] sm:$0xff] %v718
      %751 = vst [vmem:[#allocation3 + $0x3c8] sm:$0xff] %v719
      %752 = vst [vmem:[#allocation3 + $0x410] sm:$0xff] %v720
      %753 = vst [vmem:[#allocation3 + $0x458] sm:$0xff] %v721
      %754 = vst [vmem:[#allocation3 + $0x4a0] sm:$0xff] %v722
      %755 = vst [vmem:[#allocation3 + $0x4e8] sm:$0xff] %v723
      %756 = vst [vmem:[#allocation3 + $0x530] sm:$0xff] %v724
      %757 = vst [vmem:[#allocation3 + $0x578] sm:$0xff] %v725
      %758 = vst [vmem:[#allocation3 + $0x5c0] sm:$0xff] %v726
      %759 = vst [vmem:[#allocation3 + $0x608] sm:$0xff] %v727
      %760 = vst [vmem:[#allocation3 + $0x650] sm:$0xff] %v728
      %761 = vst [vmem:[#allocation3 + $0x698] sm:$0xff] %v729
      %762 = vst [vmem:[#allocation3 + $0x6e0] sm:$0xff] %v730
      %763 = vst [vmem:[#allocation3 + $0x728] sm:$0xff] %v731
      %764 = vst [vmem:[#allocation3 + $0x770] sm:$0xff] %v732
      %765 = vst [vmem:[#allocation3 + $0x7b8] sm:$0xff] %v733
      %766 = vst [vmem:[#allocation3 + $0x800] sm:$0xff] %v734
      %767 = vst [vmem:[#allocation3 + $0x848] sm:$0xff] %v735
      %768 = vst [vmem:[#allocation3 + $0x890] sm:$0xff] %v736
      %769 = vst [vmem:[#allocation3 + $0x8d8] sm:$0xff] %v737
      %v770 = vld [vmem:[%s385 + $0x2] sm:$0xff]
      %v771 = vld [vmem:[%s385 + $0xa] sm:$0xff]
      %v772 = vld [vmem:[%s385 + $0x1a] sm:$0xff]
      %v773 = vld [vmem:[%s385 + $0x22] sm:$0xff]
      %v774 = vld [vmem:[%s385 + $0x32] sm:$0xff]
      %v775 = vld [vmem:[%s385 + $0x3a] sm:$0xff]
      %v776 = vld [vmem:[%s385 + $0x4a] sm:$0xff]
      %v777 = vld [vmem:[%s385 + $0x52] sm:$0xff]
      %v778 = vld [vmem:[%s385 + $0x62] sm:$0xff]
      %v779 = vld [vmem:[%s385 + $0x6a] sm:$0xff]
      %v780 = vld [vmem:[%s385 + $0x7a] sm:$0xff]
      %v781 = vld [vmem:[%s385 + $0x82] sm:$0xff]
      %v782 = vld [vmem:[%s385 + $0x92] sm:$0xff]
      %v783 = vld [vmem:[%s385 + $0x9a] sm:$0xff]
      %v784 = vld [vmem:[%s385 + $0xaa] sm:$0xff]
      %v785 = vld [vmem:[%s385 + $0xb2] sm:$0xff]
      %v786 = vld [vmem:[%s385 + $0xc2] sm:$0xff]
      %v787 = vld [vmem:[%s385 + $0xca] sm:$0xff]
      %v788 = vld [vmem:[%s385 + $0xda] sm:$0xff]
      %v789 = vld [vmem:[%s385 + $0xe2] sm:$0xff]
      %v790 = vld [vmem:[%s385 + $0xf2] sm:$0xff]
      %v791 = vld [vmem:[%s385 + $0xfa] sm:$0xff]
      %v792 = vld [vmem:[%s385 + $0x10a] sm:$0xff]
      %v793 = vld [vmem:[%s385 + $0x112] sm:$0xff]
      %v794 = vld [vmem:[%s385 + $0x122] sm:$0xff]
      %v795 = vld [vmem:[%s385 + $0x12a] sm:$0xff]
      %v796 = vld [vmem:[%s385 + $0x13a] sm:$0xff]
      %v797 = vld [vmem:[%s385 + $0x142] sm:$0xff]
      %v798 = vld [vmem:[%s385 + $0x152] sm:$0xff]
      %v799 = vld [vmem:[%s385 + $0x15a] sm:$0xff]
      %v800 = vld [vmem:[%s385 + $0x16a] sm:$0xff]
      %v801 = vld [vmem:[%s385 + $0x172] sm:$0xff]
      %802 = vst [vmem:[#allocation3 + $0x28] sm:$0xff] %v770
      %803 = vst [vmem:[#allocation3 + $0x70] sm:$0xff] %v771
      %804 = vst [vmem:[#allocation3 + $0xb8] sm:$0xff] %v772
      %805 = vst [vmem:[#allocation3 + $0x100] sm:$0xff] %v773
      %806 = vst [vmem:[#allocation3 + $0x148] sm:$0xff] %v774
      %807 = vst [vmem:[#allocation3 + $0x190] sm:$0xff] %v775
      %808 = vst [vmem:[#allocation3 + $0x1d8] sm:$0xff] %v776
      %809 = vst [vmem:[#allocation3 + $0x220] sm:$0xff] %v777
      %810 = vst [vmem:[#allocation3 + $0x268] sm:$0xff] %v778
      %811 = vst [vmem:[#allocation3 + $0x2b0] sm:$0xff] %v779
      %812 = vst [vmem:[#allocation3 + $0x2f8] sm:$0xff] %v780
      %813 = vst [vmem:[#allocation3 + $0x340] sm:$0xff] %v781
      %814 = vst [vmem:[#allocation3 + $0x388] sm:$0xff] %v782
      %815 = vst [vmem:[#allocation3 + $0x3d0] sm:$0xff] %v783
      %816 = vst [vmem:[#allocation3 + $0x418] sm:$0xff] %v784
      %817 = vst [vmem:[#allocation3 + $0x460] sm:$0xff] %v785
      %818 = vst [vmem:[#allocation3 + $0x4a8] sm:$0xff] %v786
      %819 = vst [vmem:[#allocation3 + $0x4f0] sm:$0xff] %v787
      %820 = vst [vmem:[#allocation3 + $0x538] sm:$0xff] %v788
      %821 = vst [vmem:[#allocation3 + $0x580] sm:$0xff] %v789
      %822 = vst [vmem:[#allocation3 + $0x5c8] sm:$0xff] %v790
      %823 = vst [vmem:[#allocation3 + $0x610] sm:$0xff] %v791
      %824 = vst [vmem:[#allocation3 + $0x658] sm:$0xff] %v792
      %825 = vst [vmem:[#allocation3 + $0x6a0] sm:$0xff] %v793
      %826 = vst [vmem:[#allocation3 + $0x6e8] sm:$0xff] %v794
      %827 = vst [vmem:[#allocation3 + $0x730] sm:$0xff] %v795
      %828 = vst [vmem:[#allocation3 + $0x778] sm:$0xff] %v796
      %829 = vst [vmem:[#allocation3 + $0x7c0] sm:$0xff] %v797
      %830 = vst [vmem:[#allocation3 + $0x808] sm:$0xff] %v798
      %831 = vst [vmem:[#allocation3 + $0x850] sm:$0xff] %v799
      %832 = vst [vmem:[#allocation3 + $0x898] sm:$0xff] %v800
      %833 = vst [vmem:[#allocation3 + $0x8e0] sm:$0xff] %v801
      %s834 = scalar_lea.vmem [#allocation2], 48
      %v835 = vld [vmem:[%s834] sm:$0xff]
      %v836 = vld [vmem:[%s834 + $0x8] sm:$0xff]
      %v837 = vld [vmem:[%s834 + $0x18] sm:$0xff]
      %v838 = vld [vmem:[%s834 + $0x20] sm:$0xff]
      %v839 = vld [vmem:[%s834 + $0x30] sm:$0xff]
      %v840 = vld [vmem:[%s834 + $0x38] sm:$0xff]
      %v841 = vld [vmem:[%s834 + $0x48] sm:$0xff]
      %v842 = vld [vmem:[%s834 + $0x50] sm:$0xff]
      %v843 = vld [vmem:[%s834 + $0x60] sm:$0xff]
      %v844 = vld [vmem:[%s834 + $0x68] sm:$0xff]
      %v845 = vld [vmem:[%s834 + $0x78] sm:$0xff]
      %v846 = vld [vmem:[%s834 + $0x80] sm:$0xff]
      %v847 = vld [vmem:[%s834 + $0x90] sm:$0xff]
      %v848 = vld [vmem:[%s834 + $0x98] sm:$0xff]
      %v849 = vld [vmem:[%s834 + $0xa8] sm:$0xff]
      %v850 = vld [vmem:[%s834 + $0xb0] sm:$0xff]
      %v851 = vld [vmem:[%s834 + $0xc0] sm:$0xff]
      %v852 = vld [vmem:[%s834 + $0xc8] sm:$0xff]
      %v853 = vld [vmem:[%s834 + $0xd8] sm:$0xff]
      %v854 = vld [vmem:[%s834 + $0xe0] sm:$0xff]
      %v855 = vld [vmem:[%s834 + $0xf0] sm:$0xff]
      %v856 = vld [vmem:[%s834 + $0xf8] sm:$0xff]
      %v857 = vld [vmem:[%s834 + $0x108] sm:$0xff]
      %v858 = vld [vmem:[%s834 + $0x110] sm:$0xff]
      %v859 = vld [vmem:[%s834 + $0x120] sm:$0xff]
      %v860 = vld [vmem:[%s834 + $0x128] sm:$0xff]
      %v861 = vld [vmem:[%s834 + $0x138] sm:$0xff]
      %v862 = vld [vmem:[%s834 + $0x140] sm:$0xff]
      %v863 = vld [vmem:[%s834 + $0x150] sm:$0xff]
      %v864 = vld [vmem:[%s834 + $0x158] sm:$0xff]
      %v865 = vld [vmem:[%s834 + $0x168] sm:$0xff]
      %v866 = vld [vmem:[%s834 + $0x170] sm:$0xff]
      %867 = vst [vmem:[#allocation3 + $0x30] sm:$0xff] %v835
      %868 = vst [vmem:[#allocation3 + $0x78] sm:$0xff] %v836
      %869 = vst [vmem:[#allocation3 + $0xc0] sm:$0xff] %v837
      %870 = vst [vmem:[#allocation3 + $0x108] sm:$0xff] %v838
      %871 = vst [vmem:[#allocation3 + $0x150] sm:$0xff] %v839
      %872 = vst [vmem:[#allocation3 + $0x198] sm:$0xff] %v840
      %873 = vst [vmem:[#allocation3 + $0x1e0] sm:$0xff] %v841
      %874 = vst [vmem:[#allocation3 + $0x228] sm:$0xff] %v842
      %875 = vst [vmem:[#allocation3 + $0x270] sm:$0xff] %v843
      %876 = vst [vmem:[#allocation3 + $0x2b8] sm:$0xff] %v844
      %877 = vst [vmem:[#allocation3 + $0x300] sm:$0xff] %v845
      %878 = vst [vmem:[#allocation3 + $0x348] sm:$0xff] %v846
      %879 = vst [vmem:[#allocation3 + $0x390] sm:$0xff] %v847
      %880 = vst [vmem:[#allocation3 + $0x3d8] sm:$0xff] %v848
      %881 = vst [vmem:[#allocation3 + $0x420] sm:$0xff] %v849
      %882 = vst [vmem:[#allocation3 + $0x468] sm:$0xff] %v850
      %883 = vst [vmem:[#allocation3 + $0x4b0] sm:$0xff] %v851
      %884 = vst [vmem:[#allocation3 + $0x4f8] sm:$0xff] %v852
      %885 = vst [vmem:[#allocation3 + $0x540] sm:$0xff] %v853
      %886 = vst [vmem:[#allocation3 + $0x588] sm:$0xff] %v854
      %887 = vst [vmem:[#allocation3 + $0x5d0] sm:$0xff] %v855
      %888 = vst [vmem:[#allocation3 + $0x618] sm:$0xff] %v856
      %889 = vst [vmem:[#allocation3 + $0x660] sm:$0xff] %v857
      %890 = vst [vmem:[#allocation3 + $0x6a8] sm:$0xff] %v858
      %891 = vst [vmem:[#allocation3 + $0x6f0] sm:$0xff] %v859
      %892 = vst [vmem:[#allocation3 + $0x738] sm:$0xff] %v860
      %893 = vst [vmem:[#allocation3 + $0x780] sm:$0xff] %v861
      %894 = vst [vmem:[#allocation3 + $0x7c8] sm:$0xff] %v862
      %895 = vst [vmem:[#allocation3 + $0x810] sm:$0xff] %v863
      %896 = vst [vmem:[#allocation3 + $0x858] sm:$0xff] %v864
      %897 = vst [vmem:[#allocation3 + $0x8a0] sm:$0xff] %v865
      %898 = vst [vmem:[#allocation3 + $0x8e8] sm:$0xff] %v866
      %v899 = vld [vmem:[%s834 + $0x1] sm:$0xff]
      %v900 = vld [vmem:[%s834 + $0x9] sm:$0xff]
      %v901 = vld [vmem:[%s834 + $0x19] sm:$0xff]
      %v902 = vld [vmem:[%s834 + $0x21] sm:$0xff]
      %v903 = vld [vmem:[%s834 + $0x31] sm:$0xff]
      %v904 = vld [vmem:[%s834 + $0x39] sm:$0xff]
      %v905 = vld [vmem:[%s834 + $0x49] sm:$0xff]
      %v906 = vld [vmem:[%s834 + $0x51] sm:$0xff]
      %v907 = vld [vmem:[%s834 + $0x61] sm:$0xff]
      %v908 = vld [vmem:[%s834 + $0x69] sm:$0xff]
      %v909 = vld [vmem:[%s834 + $0x79] sm:$0xff]
      %v910 = vld [vmem:[%s834 + $0x81] sm:$0xff]
      %v911 = vld [vmem:[%s834 + $0x91] sm:$0xff]
      %v912 = vld [vmem:[%s834 + $0x99] sm:$0xff]
      %v913 = vld [vmem:[%s834 + $0xa9] sm:$0xff]
      %v914 = vld [vmem:[%s834 + $0xb1] sm:$0xff]
      %v915 = vld [vmem:[%s834 + $0xc1] sm:$0xff]
      %v916 = vld [vmem:[%s834 + $0xc9] sm:$0xff]
      %v917 = vld [vmem:[%s834 + $0xd9] sm:$0xff]
      %v918 = vld [vmem:[%s834 + $0xe1] sm:$0xff]
      %v919 = vld [vmem:[%s834 + $0xf1] sm:$0xff]
      %v920 = vld [vmem:[%s834 + $0xf9] sm:$0xff]
      %v921 = vld [vmem:[%s834 + $0x109] sm:$0xff]
      %v922 = vld [vmem:[%s834 + $0x111] sm:$0xff]
      %v923 = vld [vmem:[%s834 + $0x121] sm:$0xff]
      %v924 = vld [vmem:[%s834 + $0x129] sm:$0xff]
      %v925 = vld [vmem:[%s834 + $0x139] sm:$0xff]
      %v926 = vld [vmem:[%s834 + $0x141] sm:$0xff]
      %v927 = vld [vmem:[%s834 + $0x151] sm:$0xff]
      %v928 = vld [vmem:[%s834 + $0x159] sm:$0xff]
      %v929 = vld [vmem:[%s834 + $0x169] sm:$0xff]
      %v930 = vld [vmem:[%s834 + $0x171] sm:$0xff]
      %931 = vst [vmem:[#allocation3 + $0x38] sm:$0xff] %v899
      %932 = vst [vmem:[#allocation3 + $0x80] sm:$0xff] %v900
      %933 = vst [vmem:[#allocation3 + $0xc8] sm:$0xff] %v901
      %934 = vst [vmem:[#allocation3 + $0x110] sm:$0xff] %v902
      %935 = vst [vmem:[#allocation3 + $0x158] sm:$0xff] %v903
      %936 = vst [vmem:[#allocation3 + $0x1a0] sm:$0xff] %v904
      %937 = vst [vmem:[#allocation3 + $0x1e8] sm:$0xff] %v905
      %938 = vst [vmem:[#allocation3 + $0x230] sm:$0xff] %v906
      %939 = vst [vmem:[#allocation3 + $0x278] sm:$0xff] %v907
      %940 = vst [vmem:[#allocation3 + $0x2c0] sm:$0xff] %v908
      %941 = vst [vmem:[#allocation3 + $0x308] sm:$0xff] %v909
      %942 = vst [vmem:[#allocation3 + $0x350] sm:$0xff] %v910
      %943 = vst [vmem:[#allocation3 + $0x398] sm:$0xff] %v911
      %944 = vst [vmem:[#allocation3 + $0x3e0] sm:$0xff] %v912
      %945 = vst [vmem:[#allocation3 + $0x428] sm:$0xff] %v913
      %946 = vst [vmem:[#allocation3 + $0x470] sm:$0xff] %v914
      %947 = vst [vmem:[#allocation3 + $0x4b8] sm:$0xff] %v915
      %948 = vst [vmem:[#allocation3 + $0x500] sm:$0xff] %v916
      %949 = vst [vmem:[#allocation3 + $0x548] sm:$0xff] %v917
      %950 = vst [vmem:[#allocation3 + $0x590] sm:$0xff] %v918
      %951 = vst [vmem:[#allocation3 + $0x5d8] sm:$0xff] %v919
      %952 = vst [vmem:[#allocation3 + $0x620] sm:$0xff] %v920
      %953 = vst [vmem:[#allocation3 + $0x668] sm:$0xff] %v921
      %954 = vst [vmem:[#allocation3 + $0x6b0] sm:$0xff] %v922
      %955 = vst [vmem:[#allocation3 + $0x6f8] sm:$0xff] %v923
      %956 = vst [vmem:[#allocation3 + $0x740] sm:$0xff] %v924
      %957 = vst [vmem:[#allocation3 + $0x788] sm:$0xff] %v925
      %958 = vst [vmem:[#allocation3 + $0x7d0] sm:$0xff] %v926
      %959 = vst [vmem:[#allocation3 + $0x818] sm:$0xff] %v927
      %960 = vst [vmem:[#allocation3 + $0x860] sm:$0xff] %v928
      %961 = vst [vmem:[#allocation3 + $0x8a8] sm:$0xff] %v929
      %962 = vst [vmem:[#allocation3 + $0x8f0] sm:$0xff] %v930
      %v963 = vld [vmem:[%s834 + $0x2] sm:$0xff]
      %v964 = vld [vmem:[%s834 + $0xa] sm:$0xff]
      %v965 = vld [vmem:[%s834 + $0x1a] sm:$0xff]
      %v966 = vld [vmem:[%s834 + $0x22] sm:$0xff]
      %v967 = vld [vmem:[%s834 + $0x32] sm:$0xff]
      %v968 = vld [vmem:[%s834 + $0x3a] sm:$0xff]
      %v969 = vld [vmem:[%s834 + $0x4a] sm:$0xff]
      %v970 = vld [vmem:[%s834 + $0x52] sm:$0xff]
      %v971 = vld [vmem:[%s834 + $0x62] sm:$0xff]
      %v972 = vld [vmem:[%s834 + $0x6a] sm:$0xff]
      %v973 = vld [vmem:[%s834 + $0x7a] sm:$0xff]
      %v974 = vld [vmem:[%s834 + $0x82] sm:$0xff]
      %v975 = vld [vmem:[%s834 + $0x92] sm:$0xff]
      %v976 = vld [vmem:[%s834 + $0x9a] sm:$0xff]
      %v977 = vld [vmem:[%s834 + $0xaa] sm:$0xff]
      %v978 = vld [vmem:[%s834 + $0xb2] sm:$0xff]
      %v979 = vld [vmem:[%s834 + $0xc2] sm:$0xff]
      %v980 = vld [vmem:[%s834 + $0xca] sm:$0xff]
      %v981 = vld [vmem:[%s834 + $0xda] sm:$0xff]
      %v982 = vld [vmem:[%s834 + $0xe2] sm:$0xff]
      %v983 = vld [vmem:[%s834 + $0xf2] sm:$0xff]
      %v984 = vld [vmem:[%s834 + $0xfa] sm:$0xff]
      %v985 = vld [vmem:[%s834 + $0x10a] sm:$0xff]
      %v986 = vld [vmem:[%s834 + $0x112] sm:$0xff]
      %v987 = vld [vmem:[%s834 + $0x122] sm:$0xff]
      %v988 = vld [vmem:[%s834 + $0x12a] sm:$0xff]
      %v989 = vld [vmem:[%s834 + $0x13a] sm:$0xff]
      %v990 = vld [vmem:[%s834 + $0x142] sm:$0xff]
      %v991 = vld [vmem:[%s834 + $0x152] sm:$0xff]
      %v992 = vld [vmem:[%s834 + $0x15a] sm:$0xff]
      %v993 = vld [vmem:[%s834 + $0x16a] sm:$0xff]
      %v994 = vld [vmem:[%s834 + $0x172] sm:$0xff]
      %995 = vst [vmem:[#allocation3 + $0x40] sm:$0xff] %v963
      %996 = vst [vmem:[#allocation3 + $0x88] sm:$0xff] %v964
      %997 = vst [vmem:[#allocation3 + $0xd0] sm:$0xff] %v965
      %998 = vst [vmem:[#allocation3 + $0x118] sm:$0xff] %v966
      %999 = vst [vmem:[#allocation3 + $0x160] sm:$0xff] %v967
      %1000 = vst [vmem:[#allocation3 + $0x1a8] sm:$0xff] %v968
      %1001 = vst [vmem:[#allocation3 + $0x1f0] sm:$0xff] %v969
      %1002 = vst [vmem:[#allocation3 + $0x238] sm:$0xff] %v970
      %1003 = vst [vmem:[#allocation3 + $0x280] sm:$0xff] %v971
      %1004 = vst [vmem:[#allocation3 + $0x2c8] sm:$0xff] %v972
      %1005 = vst [vmem:[#allocation3 + $0x310] sm:$0xff] %v973
      %1006 = vst [vmem:[#allocation3 + $0x358] sm:$0xff] %v974
      %1007 = vst [vmem:[#allocation3 + $0x3a0] sm:$0xff] %v975
      %1008 = vst [vmem:[#allocation3 + $0x3e8] sm:$0xff] %v976
      %1009 = vst [vmem:[#allocation3 + $0x430] sm:$0xff] %v977
      %1010 = vst [vmem:[#allocation3 + $0x478] sm:$0xff] %v978
      %1011 = vst [vmem:[#allocation3 + $0x4c0] sm:$0xff] %v979
      %1012 = vst [vmem:[#allocation3 + $0x508] sm:$0xff] %v980
      %1013 = vst [vmem:[#allocation3 + $0x550] sm:$0xff] %v981
      %1014 = vst [vmem:[#allocation3 + $0x598] sm:$0xff] %v982
      %1015 = vst [vmem:[#allocation3 + $0x5e0] sm:$0xff] %v983
      %1016 = vst [vmem:[#allocation3 + $0x628] sm:$0xff] %v984
      %1017 = vst [vmem:[#allocation3 + $0x670] sm:$0xff] %v985
      %1018 = vst [vmem:[#allocation3 + $0x6b8] sm:$0xff] %v986
      %1019 = vst [vmem:[#allocation3 + $0x700] sm:$0xff] %v987
      %1020 = vst [vmem:[#allocation3 + $0x748] sm:$0xff] %v988
      %1021 = vst [vmem:[#allocation3 + $0x790] sm:$0xff] %v989
      %1022 = vst [vmem:[#allocation3 + $0x7d8] sm:$0xff] %v990
      %1023 = vst [vmem:[#allocation3 + $0x820] sm:$0xff] %v991
      %1024 = vst [vmem:[#allocation3 + $0x868] sm:$0xff] %v992
      %1025 = vst [vmem:[#allocation3 + $0x8b0] sm:$0xff] %v993
      %1026 = vst [vmem:[#allocation3 + $0x8f8] sm:$0xff] %v994
      %v1027 = vld [vmem:[#allocation3] sm:$0xff]
      %v1028 = vld [vmem:[#allocation3 + $0x8] sm:$0xff]
      %v1029 = vld [vmem:[#allocation3 + $0x10] sm:$0xff]
      %v1030 = vld [vmem:[#allocation3 + $0x18] sm:$0xff]
      %v1031 = vld [vmem:[#allocation3 + $0x20] sm:$0xff]
      %v1032 = vld [vmem:[#allocation3 + $0x28] sm:$0xff]
      %v1033 = vld [vmem:[#allocation3 + $0x30] sm:$0xff]
      %v1034 = vld [vmem:[#allocation3 + $0x38] sm:$0xff]
      %v1035 = vld [vmem:[#allocation3 + $0x40] sm:$0xff]
      %v1036 = vld [vmem:[#allocation3 + $0x48] sm:$0xff]
      %v1037 = vld [vmem:[#allocation3 + $0x50] sm:$0xff]
      %v1038 = vld [vmem:[#allocation3 + $0x58] sm:$0xff]
      %v1039 = vld [vmem:[#allocation3 + $0x60] sm:$0xff]
      %v1040 = vld [vmem:[#allocation3 + $0x68] sm:$0xff]
      %v1041 = vld [vmem:[#allocation3 + $0x70] sm:$0xff]
      %v1042 = vld [vmem:[#allocation3 + $0x78] sm:$0xff]
      %v1043 = vld [vmem:[#allocation3 + $0x80] sm:$0xff]
      %v1044 = vld [vmem:[#allocation3 + $0x88] sm:$0xff]
      %v1045 = vld [vmem:[#allocation3 + $0x90] sm:$0xff]
      %v1046 = vld [vmem:[#allocation3 + $0x98] sm:$0xff]
      %v1047 = vld [vmem:[#allocation3 + $0xa0] sm:$0xff]
      %v1048 = vld [vmem:[#allocation3 + $0xa8] sm:$0xff]
      %v1049 = vld [vmem:[#allocation3 + $0xb0] sm:$0xff]
      %v1050 = vld [vmem:[#allocation3 + $0xb8] sm:$0xff]
      %v1051 = vld [vmem:[#allocation3 + $0xc0] sm:$0xff]
      %v1052 = vld [vmem:[#allocation3 + $0xc8] sm:$0xff]
      %v1053 = vld [vmem:[#allocation3 + $0xd0] sm:$0xff]
      %v1054 = vld [vmem:[#allocation3 + $0xd8] sm:$0xff]
      %v1055 = vld [vmem:[#allocation3 + $0xe0] sm:$0xff]
      %v1056 = vld [vmem:[#allocation3 + $0xe8] sm:$0xff]
      %v1057 = vld [vmem:[#allocation3 + $0xf0] sm:$0xff]
      %v1058 = vld [vmem:[#allocation3 + $0xf8] sm:$0xff]
      %v1059 = vld [vmem:[#allocation3 + $0x100] sm:$0xff]
      %v1060 = vld [vmem:[#allocation3 + $0x108] sm:$0xff]
      %v1061 = vld [vmem:[#allocation3 + $0x110] sm:$0xff]
      %v1062 = vld [vmem:[#allocation3 + $0x118] sm:$0xff]
      %v1063 = vld [vmem:[#allocation3 + $0x120] sm:$0xff]
      %v1064 = vld [vmem:[#allocation3 + $0x128] sm:$0xff]
      %v1065 = vld [vmem:[#allocation3 + $0x130] sm:$0xff]
      %v1066 = vld [vmem:[#allocation3 + $0x138] sm:$0xff]
      %v1067 = vld [vmem:[#allocation3 + $0x140] sm:$0xff]
      %v1068 = vld [vmem:[#allocation3 + $0x148] sm:$0xff]
      %v1069 = vld [vmem:[#allocation3 + $0x150] sm:$0xff]
      %v1070 = vld [vmem:[#allocation3 + $0x158] sm:$0xff]
      %v1071 = vld [vmem:[#allocation3 + $0x160] sm:$0xff]
      %v1072 = vld [vmem:[#allocation3 + $0x168] sm:$0xff]
      %v1073 = vld [vmem:[#allocation3 + $0x170] sm:$0xff]
      %v1074 = vld [vmem:[#allocation3 + $0x178] sm:$0xff]
      %v1075 = vld [vmem:[#allocation3 + $0x180] sm:$0xff]
      %v1076 = vld [vmem:[#allocation3 + $0x188] sm:$0xff]
      %v1077 = vld [vmem:[#allocation3 + $0x190] sm:$0xff]
      %v1078 = vld [vmem:[#allocation3 + $0x198] sm:$0xff]
      %v1079 = vld [vmem:[#allocation3 + $0x1a0] sm:$0xff]
      %v1080 = vld [vmem:[#allocation3 + $0x1a8] sm:$0xff]
      %v1081 = vld [vmem:[#allocation3 + $0x1b0] sm:$0xff]
      %v1082 = vld [vmem:[#allocation3 + $0x1b8] sm:$0xff]
      %v1083 = vld [vmem:[#allocation3 + $0x1c0] sm:$0xff]
      %v1084 = vld [vmem:[#allocation3 + $0x1c8] sm:$0xff]
      %v1085 = vld [vmem:[#allocation3 + $0x1d0] sm:$0xff]
      %v1086 = vld [vmem:[#allocation3 + $0x1d8] sm:$0xff]
      %v1087 = vld [vmem:[#allocation3 + $0x1e0] sm:$0xff]
      %v1088 = vld [vmem:[#allocation3 + $0x1e8] sm:$0xff]
      %v1089 = vld [vmem:[#allocation3 + $0x1f0] sm:$0xff]
      %v1090 = vld [vmem:[#allocation3 + $0x1f8] sm:$0xff]
      %v1091 = vld [vmem:[#allocation3 + $0x200] sm:$0xff]
      %v1092 = vld [vmem:[#allocation3 + $0x208] sm:$0xff]
      %v1093 = vld [vmem:[#allocation3 + $0x210] sm:$0xff]
      %v1094 = vld [vmem:[#allocation3 + $0x218] sm:$0xff]
      %v1095 = vld [vmem:[#allocation3 + $0x220] sm:$0xff]
      %v1096 = vld [vmem:[#allocation3 + $0x228] sm:$0xff]
      %v1097 = vld [vmem:[#allocation3 + $0x230] sm:$0xff]
      %v1098 = vld [vmem:[#allocation3 + $0x238] sm:$0xff]
      %v1099 = vld [vmem:[#allocation3 + $0x240] sm:$0xff]
      %v1100 = vld [vmem:[#allocation3 + $0x248] sm:$0xff]
      %v1101 = vld [vmem:[#allocation3 + $0x250] sm:$0xff]
      %v1102 = vld [vmem:[#allocation3 + $0x258] sm:$0xff]
      %v1103 = vld [vmem:[#allocation3 + $0x260] sm:$0xff]
      %v1104 = vld [vmem:[#allocation3 + $0x268] sm:$0xff]
      %v1105 = vld [vmem:[#allocation3 + $0x270] sm:$0xff]
      %v1106 = vld [vmem:[#allocation3 + $0x278] sm:$0xff]
      %v1107 = vld [vmem:[#allocation3 + $0x280] sm:$0xff]
      %v1108 = vld [vmem:[#allocation3 + $0x288] sm:$0xff]
      %v1109 = vld [vmem:[#allocation3 + $0x290] sm:$0xff]
      %v1110 = vld [vmem:[#allocation3 + $0x298] sm:$0xff]
      %v1111 = vld [vmem:[#allocation3 + $0x2a0] sm:$0xff]
      %v1112 = vld [vmem:[#allocation3 + $0x2a8] sm:$0xff]
      %v1113 = vld [vmem:[#allocation3 + $0x2b0] sm:$0xff]
      %v1114 = vld [vmem:[#allocation3 + $0x2b8] sm:$0xff]
      %v1115 = vld [vmem:[#allocation3 + $0x2c0] sm:$0xff]
      %v1116 = vld [vmem:[#allocation3 + $0x2c8] sm:$0xff]
      %v1117 = vld [vmem:[#allocation3 + $0x2d0] sm:$0xff]
      %v1118 = vld [vmem:[#allocation3 + $0x2d8] sm:$0xff]
      %v1119 = vld [vmem:[#allocation3 + $0x2e0] sm:$0xff]
      %v1120 = vld [vmem:[#allocation3 + $0x2e8] sm:$0xff]
      %v1121 = vld [vmem:[#allocation3 + $0x2f0] sm:$0xff]
      %v1122 = vld [vmem:[#allocation3 + $0x2f8] sm:$0xff]
      %v1123 = vld [vmem:[#allocation3 + $0x300] sm:$0xff]
      %v1124 = vld [vmem:[#allocation3 + $0x308] sm:$0xff]
      %v1125 = vld [vmem:[#allocation3 + $0x310] sm:$0xff]
      %v1126 = vld [vmem:[#allocation3 + $0x318] sm:$0xff]
      %v1127 = vld [vmem:[#allocation3 + $0x320] sm:$0xff]
      %v1128 = vld [vmem:[#allocation3 + $0x328] sm:$0xff]
      %v1129 = vld [vmem:[#allocation3 + $0x330] sm:$0xff]
      %v1130 = vld [vmem:[#allocation3 + $0x338] sm:$0xff]
      %v1131 = vld [vmem:[#allocation3 + $0x340] sm:$0xff]
      %v1132 = vld [vmem:[#allocation3 + $0x348] sm:$0xff]
      %v1133 = vld [vmem:[#allocation3 + $0x350] sm:$0xff]
      %v1134 = vld [vmem:[#allocation3 + $0x358] sm:$0xff]
      %v1135 = vld [vmem:[#allocation3 + $0x360] sm:$0xff]
      %v1136 = vld [vmem:[#allocation3 + $0x368] sm:$0xff]
      %v1137 = vld [vmem:[#allocation3 + $0x370] sm:$0xff]
      %v1138 = vld [vmem:[#allocation3 + $0x378] sm:$0xff]
      %v1139 = vld [vmem:[#allocation3 + $0x380] sm:$0xff]
      %v1140 = vld [vmem:[#allocation3 + $0x388] sm:$0xff]
      %v1141 = vld [vmem:[#allocation3 + $0x390] sm:$0xff]
      %v1142 = vld [vmem:[#allocation3 + $0x398] sm:$0xff]
      %v1143 = vld [vmem:[#allocation3 + $0x3a0] sm:$0xff]
      %v1144 = vld [vmem:[#allocation3 + $0x3a8] sm:$0xff]
      %v1145 = vld [vmem:[#allocation3 + $0x3b0] sm:$0xff]
      %v1146 = vld [vmem:[#allocation3 + $0x3b8] sm:$0xff]
      %v1147 = vld [vmem:[#allocation3 + $0x3c0] sm:$0xff]
      %v1148 = vld [vmem:[#allocation3 + $0x3c8] sm:$0xff]
      %v1149 = vld [vmem:[#allocation3 + $0x3d0] sm:$0xff]
      %v1150 = vld [vmem:[#allocation3 + $0x3d8] sm:$0xff]
      %v1151 = vld [vmem:[#allocation3 + $0x3e0] sm:$0xff]
      %v1152 = vld [vmem:[#allocation3 + $0x3e8] sm:$0xff]
      %v1153 = vld [vmem:[#allocation3 + $0x3f0] sm:$0xff]
      %v1154 = vld [vmem:[#allocation3 + $0x3f8] sm:$0xff]
      %v1155 = vld [vmem:[#allocation3 + $0x400] sm:$0xff]
      %v1156 = vld [vmem:[#allocation3 + $0x408] sm:$0xff]
      %v1157 = vld [vmem:[#allocation3 + $0x410] sm:$0xff]
      %v1158 = vld [vmem:[#allocation3 + $0x418] sm:$0xff]
      %v1159 = vld [vmem:[#allocation3 + $0x420] sm:$0xff]
      %v1160 = vld [vmem:[#allocation3 + $0x428] sm:$0xff]
      %v1161 = vld [vmem:[#allocation3 + $0x430] sm:$0xff]
      %v1162 = vld [vmem:[#allocation3 + $0x438] sm:$0xff]
      %v1163 = vld [vmem:[#allocation3 + $0x440] sm:$0xff]
      %v1164 = vld [vmem:[#allocation3 + $0x448] sm:$0xff]
      %v1165 = vld [vmem:[#allocation3 + $0x450] sm:$0xff]
      %v1166 = vld [vmem:[#allocation3 + $0x458] sm:$0xff]
      %v1167 = vld [vmem:[#allocation3 + $0x460] sm:$0xff]
      %v1168 = vld [vmem:[#allocation3 + $0x468] sm:$0xff]
      %v1169 = vld [vmem:[#allocation3 + $0x470] sm:$0xff]
      %v1170 = vld [vmem:[#allocation3 + $0x478] sm:$0xff]
      %v1171 = vld [vmem:[#allocation3 + $0x480] sm:$0xff]
      %v1172 = vld [vmem:[#allocation3 + $0x488] sm:$0xff]
      %v1173 = vld [vmem:[#allocation3 + $0x490] sm:$0xff]
      %v1174 = vld [vmem:[#allocation3 + $0x498] sm:$0xff]
      %v1175 = vld [vmem:[#allocation3 + $0x4a0] sm:$0xff]
      %v1176 = vld [vmem:[#allocation3 + $0x4a8] sm:$0xff]
      %v1177 = vld [vmem:[#allocation3 + $0x4b0] sm:$0xff]
      %v1178 = vld [vmem:[#allocation3 + $0x4b8] sm:$0xff]
      %v1179 = vld [vmem:[#allocation3 + $0x4c0] sm:$0xff]
      %v1180 = vld [vmem:[#allocation3 + $0x4c8] sm:$0xff]
      %v1181 = vld [vmem:[#allocation3 + $0x4d0] sm:$0xff]
      %v1182 = vld [vmem:[#allocation3 + $0x4d8] sm:$0xff]
      %v1183 = vld [vmem:[#allocation3 + $0x4e0] sm:$0xff]
      %v1184 = vld [vmem:[#allocation3 + $0x4e8] sm:$0xff]
      %v1185 = vld [vmem:[#allocation3 + $0x4f0] sm:$0xff]
      %v1186 = vld [vmem:[#allocation3 + $0x4f8] sm:$0xff]
      %v1187 = vld [vmem:[#allocation3 + $0x500] sm:$0xff]
      %v1188 = vld [vmem:[#allocation3 + $0x508] sm:$0xff]
      %v1189 = vld [vmem:[#allocation3 + $0x510] sm:$0xff]
      %v1190 = vld [vmem:[#allocation3 + $0x518] sm:$0xff]
      %v1191 = vld [vmem:[#allocation3 + $0x520] sm:$0xff]
      %v1192 = vld [vmem:[#allocation3 + $0x528] sm:$0xff]
      %v1193 = vld [vmem:[#allocation3 + $0x530] sm:$0xff]
      %v1194 = vld [vmem:[#allocation3 + $0x538] sm:$0xff]
      %v1195 = vld [vmem:[#allocation3 + $0x540] sm:$0xff]
      %v1196 = vld [vmem:[#allocation3 + $0x548] sm:$0xff]
      %v1197 = vld [vmem:[#allocation3 + $0x550] sm:$0xff]
      %v1198 = vld [vmem:[#allocation3 + $0x558] sm:$0xff]
      %v1199 = vld [vmem:[#allocation3 + $0x560] sm:$0xff]
      %v1200 = vld [vmem:[#allocation3 + $0x568] sm:$0xff]
      %v1201 = vld [vmem:[#allocation3 + $0x570] sm:$0xff]
      %v1202 = vld [vmem:[#allocation3 + $0x578] sm:$0xff]
      %v1203 = vld [vmem:[#allocation3 + $0x580] sm:$0xff]
      %v1204 = vld [vmem:[#allocation3 + $0x588] sm:$0xff]
      %v1205 = vld [vmem:[#allocation3 + $0x590] sm:$0xff]
      %v1206 = vld [vmem:[#allocation3 + $0x598] sm:$0xff]
      %v1207 = vld [vmem:[#allocation3 + $0x5a0] sm:$0xff]
      %v1208 = vld [vmem:[#allocation3 + $0x5a8] sm:$0xff]
      %v1209 = vld [vmem:[#allocation3 + $0x5b0] sm:$0xff]
      %v1210 = vld [vmem:[#allocation3 + $0x5b8] sm:$0xff]
      %v1211 = vld [vmem:[#allocation3 + $0x5c0] sm:$0xff]
      %v1212 = vld [vmem:[#allocation3 + $0x5c8] sm:$0xff]
      %v1213 = vld [vmem:[#allocation3 + $0x5d0] sm:$0xff]
      %v1214 = vld [vmem:[#allocation3 + $0x5d8] sm:$0xff]
      %v1215 = vld [vmem:[#allocation3 + $0x5e0] sm:$0xff]
      %v1216 = vld [vmem:[#allocation3 + $0x5e8] sm:$0xff]
      %v1217 = vld [vmem:[#allocation3 + $0x5f0] sm:$0xff]
      %v1218 = vld [vmem:[#allocation3 + $0x5f8] sm:$0xff]
      %v1219 = vld [vmem:[#allocation3 + $0x600] sm:$0xff]
      %v1220 = vld [vmem:[#allocation3 + $0x608] sm:$0xff]
      %v1221 = vld [vmem:[#allocation3 + $0x610] sm:$0xff]
      %v1222 = vld [vmem:[#allocation3 + $0x618] sm:$0xff]
      %v1223 = vld [vmem:[#allocation3 + $0x620] sm:$0xff]
      %v1224 = vld [vmem:[#allocation3 + $0x628] sm:$0xff]
      %v1225 = vld [vmem:[#allocation3 + $0x630] sm:$0xff]
      %v1226 = vld [vmem:[#allocation3 + $0x638] sm:$0xff]
      %v1227 = vld [vmem:[#allocation3 + $0x640] sm:$0xff]
      %v1228 = vld [vmem:[#allocation3 + $0x648] sm:$0xff]
      %v1229 = vld [vmem:[#allocation3 + $0x650] sm:$0xff]
      %v1230 = vld [vmem:[#allocation3 + $0x658] sm:$0xff]
      %v1231 = vld [vmem:[#allocation3 + $0x660] sm:$0xff]
      %v1232 = vld [vmem:[#allocation3 + $0x668] sm:$0xff]
      %v1233 = vld [vmem:[#allocation3 + $0x670] sm:$0xff]
      %v1234 = vld [vmem:[#allocation3 + $0x678] sm:$0xff]
      %v1235 = vld [vmem:[#allocation3 + $0x680] sm:$0xff]
      %v1236 = vld [vmem:[#allocation3 + $0x688] sm:$0xff]
      %v1237 = vld [vmem:[#allocation3 + $0x690] sm:$0xff]
      %v1238 = vld [vmem:[#allocation3 + $0x698] sm:$0xff]
      %v1239 = vld [vmem:[#allocation3 + $0x6a0] sm:$0xff]
      %v1240 = vld [vmem:[#allocation3 + $0x6a8] sm:$0xff]
      %v1241 = vld [vmem:[#allocation3 + $0x6b0] sm:$0xff]
      %v1242 = vld [vmem:[#allocation3 + $0x6b8] sm:$0xff]
      %v1243 = vld [vmem:[#allocation3 + $0x6c0] sm:$0xff]
      %v1244 = vld [vmem:[#allocation3 + $0x6c8] sm:$0xff]
      %v1245 = vld [vmem:[#allocation3 + $0x6d0] sm:$0xff]
      %v1246 = vld [vmem:[#allocation3 + $0x6d8] sm:$0xff]
      %v1247 = vld [vmem:[#allocation3 + $0x6e0] sm:$0xff]
      %v1248 = vld [vmem:[#allocation3 + $0x6e8] sm:$0xff]
      %v1249 = vld [vmem:[#allocation3 + $0x6f0] sm:$0xff]
      %v1250 = vld [vmem:[#allocation3 + $0x6f8] sm:$0xff]
      %v1251 = vld [vmem:[#allocation3 + $0x700] sm:$0xff]
      %v1252 = vld [vmem:[#allocation3 + $0x708] sm:$0xff]
      %v1253 = vld [vmem:[#allocation3 + $0x710] sm:$0xff]
      %v1254 = vld [vmem:[#allocation3 + $0x718] sm:$0xff]
      %v1255 = vld [vmem:[#allocation3 + $0x720] sm:$0xff]
      %v1256 = vld [vmem:[#allocation3 + $0x728] sm:$0xff]
      %v1257 = vld [vmem:[#allocation3 + $0x730] sm:$0xff]
      %v1258 = vld [vmem:[#allocation3 + $0x738] sm:$0xff]
      %v1259 = vld [vmem:[#allocation3 + $0x740] sm:$0xff]
      %v1260 = vld [vmem:[#allocation3 + $0x748] sm:$0xff]
      %v1261 = vld [vmem:[#allocation3 + $0x750] sm:$0xff]
      %v1262 = vld [vmem:[#allocation3 + $0x758] sm:$0xff]
      %v1263 = vld [vmem:[#allocation3 + $0x760] sm:$0xff]
      %v1264 = vld [vmem:[#allocation3 + $0x768] sm:$0xff]
      %v1265 = vld [vmem:[#allocation3 + $0x770] sm:$0xff]
      %v1266 = vld [vmem:[#allocation3 + $0x778] sm:$0xff]
      %v1267 = vld [vmem:[#allocation3 + $0x780] sm:$0xff]
      %v1268 = vld [vmem:[#allocation3 + $0x788] sm:$0xff]
      %v1269 = vld [vmem:[#allocation3 + $0x790] sm:$0xff]
      %v1270 = vld [vmem:[#allocation3 + $0x798] sm:$0xff]
      %v1271 = vld [vmem:[#allocation3 + $0x7a0] sm:$0xff]
      %v1272 = vld [vmem:[#allocation3 + $0x7a8] sm:$0xff]
      %v1273 = vld [vmem:[#allocation3 + $0x7b0] sm:$0xff]
      %v1274 = vld [vmem:[#allocation3 + $0x7b8] sm:$0xff]
      %v1275 = vld [vmem:[#allocation3 + $0x7c0] sm:$0xff]
      %v1276 = vld [vmem:[#allocation3 + $0x7c8] sm:$0xff]
      %v1277 = vld [vmem:[#allocation3 + $0x7d0] sm:$0xff]
      %v1278 = vld [vmem:[#allocation3 + $0x7d8] sm:$0xff]
      %v1279 = vld [vmem:[#allocation3 + $0x7e0] sm:$0xff]
      %v1280 = vld [vmem:[#allocation3 + $0x7e8] sm:$0xff]
      %v1281 = vld [vmem:[#allocation3 + $0x7f0] sm:$0xff]
      %v1282 = vld [vmem:[#allocation3 + $0x7f8] sm:$0xff]
      %v1283 = vld [vmem:[#allocation3 + $0x800] sm:$0xff]
      %v1284 = vld [vmem:[#allocation3 + $0x808] sm:$0xff]
      %v1285 = vld [vmem:[#allocation3 + $0x810] sm:$0xff]
      %v1286 = vld [vmem:[#allocation3 + $0x818] sm:$0xff]
      %v1287 = vld [vmem:[#allocation3 + $0x820] sm:$0xff]
      %v1288 = vld [vmem:[#allocation3 + $0x828] sm:$0xff]
      %v1289 = vld [vmem:[#allocation3 + $0x830] sm:$0xff]
      %v1290 = vld [vmem:[#allocation3 + $0x838] sm:$0xff]
      %v1291 = vld [vmem:[#allocation3 + $0x840] sm:$0xff]
      %v1292 = vld [vmem:[#allocation3 + $0x848] sm:$0xff]
      %v1293 = vld [vmem:[#allocation3 + $0x850] sm:$0xff]
      %v1294 = vld [vmem:[#allocation3 + $0x858] sm:$0xff]
      %v1295 = vld [vmem:[#allocation3 + $0x860] sm:$0xff]
      %v1296 = vld [vmem:[#allocation3 + $0x868] sm:$0xff]
      %v1297 = vld [vmem:[#allocation3 + $0x870] sm:$0xff]
      %v1298 = vld [vmem:[#allocation3 + $0x878] sm:$0xff]
      %v1299 = vld [vmem:[#allocation3 + $0x880] sm:$0xff]
      %v1300 = vld [vmem:[#allocation3 + $0x888] sm:$0xff]
      %v1301 = vld [vmem:[#allocation3 + $0x890] sm:$0xff]
      %v1302 = vld [vmem:[#allocation3 + $0x898] sm:$0xff]
      %v1303 = vld [vmem:[#allocation3 + $0x8a0] sm:$0xff]
      %v1304 = vld [vmem:[#allocation3 + $0x8a8] sm:$0xff]
      %v1305 = vld [vmem:[#allocation3 + $0x8b0] sm:$0xff]
      %v1306 = vld [vmem:[#allocation3 + $0x8b8] sm:$0xff]
      %v1307 = vld [vmem:[#allocation3 + $0x8c0] sm:$0xff]
      %v1308 = vld [vmem:[#allocation3 + $0x8c8] sm:$0xff]
      %v1309 = vld [vmem:[#allocation3 + $0x8d0] sm:$0xff]
      %v1310 = vld [vmem:[#allocation3 + $0x8d8] sm:$0xff]
      %v1311 = vld [vmem:[#allocation3 + $0x8e0] sm:$0xff]
      %v1312 = vld [vmem:[#allocation3 + $0x8e8] sm:$0xff]
      %v1313 = vld [vmem:[#allocation3 + $0x8f0] sm:$0xff]
      %v1314 = vld [vmem:[#allocation3 + $0x8f8] sm:$0xff]
      %v1315 = vld [vmem:[%s3] sm:$0xff]
      %v1316 = vld [vmem:[%s3 + $0x8] sm:$0xff]
      %v1317 = vld [vmem:[%s3 + $0x10] sm:$0xff]
      %v1318 = vld [vmem:[%s3 + $0x18] sm:$0xff]
      %v1319 = vld [vmem:[%s3 + $0x20] sm:$0xff]
      %v1320 = vld [vmem:[%s3 + $0x28] sm:$0xff]
      %v1321 = vld [vmem:[%s3 + $0x30] sm:$0xff]
      %v1322 = vld [vmem:[%s3 + $0x38] sm:$0xff]
      %v1323 = vld [vmem:[%s3 + $0x40] sm:$0xff]
      %v1324 = vld [vmem:[%s3 + $0x48] sm:$0xff]
      %v1325 = vld [vmem:[%s3 + $0x50] sm:$0xff]
      %v1326 = vld [vmem:[%s3 + $0x58] sm:$0xff]
      %v1327 = vld [vmem:[%s3 + $0x60] sm:$0xff]
      %v1328 = vld [vmem:[%s3 + $0x68] sm:$0xff]
      %v1329 = vld [vmem:[%s3 + $0x70] sm:$0xff]
      %v1330 = vld [vmem:[%s3 + $0x78] sm:$0xff]
      %v1331 = vld [vmem:[%s3 + $0x80] sm:$0xff]
      %v1332 = vld [vmem:[%s3 + $0x88] sm:$0xff]
      %v1333 = vld [vmem:[%s3 + $0x90] sm:$0xff]
      %v1334 = vld [vmem:[%s3 + $0x98] sm:$0xff]
      %v1335 = vld [vmem:[%s3 + $0xa0] sm:$0xff]
      %v1336 = vld [vmem:[%s3 + $0xa8] sm:$0xff]
      %v1337 = vld [vmem:[%s3 + $0xb0] sm:$0xff]
      %v1338 = vld [vmem:[%s3 + $0xb8] sm:$0xff]
      %v1339 = vld [vmem:[%s3 + $0xc0] sm:$0xff]
      %v1340 = vld [vmem:[%s3 + $0xc8] sm:$0xff]
      %v1341 = vld [vmem:[%s3 + $0xd0] sm:$0xff]
      %v1342 = vld [vmem:[%s3 + $0xd8] sm:$0xff]
      %v1343 = vld [vmem:[%s3 + $0xe0] sm:$0xff]
      %v1344 = vld [vmem:[%s3 + $0xe8] sm:$0xff]
      %v1345 = vld [vmem:[%s3 + $0xf0] sm:$0xff]
      %v1346 = vld [vmem:[%s3 + $0xf8] sm:$0xff]
      %v1347 = vld [vmem:[%s3 + $0x100] sm:$0xff]
      %v1348 = vld [vmem:[%s3 + $0x108] sm:$0xff]
      %v1349 = vld [vmem:[%s3 + $0x110] sm:$0xff]
      %v1350 = vld [vmem:[%s3 + $0x118] sm:$0xff]
      %v1351 = vld [vmem:[%s3 + $0x120] sm:$0xff]
      %v1352 = vld [vmem:[%s3 + $0x128] sm:$0xff]
      %v1353 = vld [vmem:[%s3 + $0x130] sm:$0xff]
      %v1354 = vld [vmem:[%s3 + $0x138] sm:$0xff]
      %v1355 = vld [vmem:[%s3 + $0x140] sm:$0xff]
      %v1356 = vld [vmem:[%s3 + $0x148] sm:$0xff]
      %v1357 = vld [vmem:[%s3 + $0x150] sm:$0xff]
      %v1358 = vld [vmem:[%s3 + $0x158] sm:$0xff]
      %v1359 = vld [vmem:[%s3 + $0x160] sm:$0xff]
      %v1360 = vld [vmem:[%s3 + $0x168] sm:$0xff]
      %v1361 = vld [vmem:[%s3 + $0x170] sm:$0xff]
      %v1362 = vld [vmem:[%s3 + $0x178] sm:$0xff]
      %v1363 = vld [vmem:[%s3 + $0x180] sm:$0xff]
      %v1364 = vld [vmem:[%s3 + $0x188] sm:$0xff]
      %v1365 = vld [vmem:[%s3 + $0x190] sm:$0xff]
      %v1366 = vld [vmem:[%s3 + $0x198] sm:$0xff]
      %v1367 = vld [vmem:[%s3 + $0x1a0] sm:$0xff]
      %v1368 = vld [vmem:[%s3 + $0x1a8] sm:$0xff]
      %v1369 = vld [vmem:[%s3 + $0x1b0] sm:$0xff]
      %v1370 = vld [vmem:[%s3 + $0x1b8] sm:$0xff]
      %v1371 = vld [vmem:[%s3 + $0x1c0] sm:$0xff]
      %v1372 = vld [vmem:[%s3 + $0x1c8] sm:$0xff]
      %v1373 = vld [vmem:[%s3 + $0x1d0] sm:$0xff]
      %v1374 = vld [vmem:[%s3 + $0x1d8] sm:$0xff]
      %v1375 = vld [vmem:[%s3 + $0x1e0] sm:$0xff]
      %v1376 = vld [vmem:[%s3 + $0x1e8] sm:$0xff]
      %v1377 = vld [vmem:[%s3 + $0x1f0] sm:$0xff]
      %v1378 = vld [vmem:[%s3 + $0x1f8] sm:$0xff]
      %v1379 = vld [vmem:[%s3 + $0x200] sm:$0xff]
      %v1380 = vld [vmem:[%s3 + $0x208] sm:$0xff]
      %v1381 = vld [vmem:[%s3 + $0x210] sm:$0xff]
      %v1382 = vld [vmem:[%s3 + $0x218] sm:$0xff]
      %v1383 = vld [vmem:[%s3 + $0x220] sm:$0xff]
      %v1384 = vld [vmem:[%s3 + $0x228] sm:$0xff]
      %v1385 = vld [vmem:[%s3 + $0x230] sm:$0xff]
      %v1386 = vld [vmem:[%s3 + $0x238] sm:$0xff]
      %v1387 = vld [vmem:[%s3 + $0x240] sm:$0xff]
      %v1388 = vld [vmem:[%s3 + $0x248] sm:$0xff]
      %v1389 = vld [vmem:[%s3 + $0x250] sm:$0xff]
      %v1390 = vld [vmem:[%s3 + $0x258] sm:$0xff]
      %v1391 = vld [vmem:[%s3 + $0x260] sm:$0xff]
      %v1392 = vld [vmem:[%s3 + $0x268] sm:$0xff]
      %v1393 = vld [vmem:[%s3 + $0x270] sm:$0xff]
      %v1394 = vld [vmem:[%s3 + $0x278] sm:$0xff]
      %v1395 = vld [vmem:[%s3 + $0x280] sm:$0xff]
      %v1396 = vld [vmem:[%s3 + $0x288] sm:$0xff]
      %v1397 = vld [vmem:[%s3 + $0x290] sm:$0xff]
      %v1398 = vld [vmem:[%s3 + $0x298] sm:$0xff]
      %v1399 = vld [vmem:[%s3 + $0x2a0] sm:$0xff]
      %v1400 = vld [vmem:[%s3 + $0x2a8] sm:$0xff]
      %v1401 = vld [vmem:[%s3 + $0x2b0] sm:$0xff]
      %v1402 = vld [vmem:[%s3 + $0x2b8] sm:$0xff]
      %v1403 = vld [vmem:[%s3 + $0x2c0] sm:$0xff]
      %v1404 = vld [vmem:[%s3 + $0x2c8] sm:$0xff]
      %v1405 = vld [vmem:[%s3 + $0x2d0] sm:$0xff]
      %v1406 = vld [vmem:[%s3 + $0x2d8] sm:$0xff]
      %v1407 = vld [vmem:[%s3 + $0x2e0] sm:$0xff]
      %v1408 = vld [vmem:[%s3 + $0x2e8] sm:$0xff]
      %v1409 = vld [vmem:[%s3 + $0x2f0] sm:$0xff]
      %v1410 = vld [vmem:[%s3 + $0x2f8] sm:$0xff]
      %v1411 = vld [vmem:[%s3 + $0x300] sm:$0xff]
      %v1412 = vld [vmem:[%s3 + $0x308] sm:$0xff]
      %v1413 = vld [vmem:[%s3 + $0x310] sm:$0xff]
      %v1414 = vld [vmem:[%s3 + $0x318] sm:$0xff]
      %v1415 = vld [vmem:[%s3 + $0x320] sm:$0xff]
      %v1416 = vld [vmem:[%s3 + $0x328] sm:$0xff]
      %v1417 = vld [vmem:[%s3 + $0x330] sm:$0xff]
      %v1418 = vld [vmem:[%s3 + $0x338] sm:$0xff]
      %v1419 = vld [vmem:[%s3 + $0x340] sm:$0xff]
      %v1420 = vld [vmem:[%s3 + $0x348] sm:$0xff]
      %v1421 = vld [vmem:[%s3 + $0x350] sm:$0xff]
      %v1422 = vld [vmem:[%s3 + $0x358] sm:$0xff]
      %v1423 = vld [vmem:[%s3 + $0x360] sm:$0xff]
      %v1424 = vld [vmem:[%s3 + $0x368] sm:$0xff]
      %v1425 = vld [vmem:[%s3 + $0x370] sm:$0xff]
      %v1426 = vld [vmem:[%s3 + $0x378] sm:$0xff]
      %v1427 = vld [vmem:[%s3 + $0x380] sm:$0xff]
      %v1428 = vld [vmem:[%s3 + $0x388] sm:$0xff]
      %v1429 = vld [vmem:[%s3 + $0x390] sm:$0xff]
      %v1430 = vld [vmem:[%s3 + $0x398] sm:$0xff]
      %v1431 = vld [vmem:[%s3 + $0x3a0] sm:$0xff]
      %v1432 = vld [vmem:[%s3 + $0x3a8] sm:$0xff]
      %v1433 = vld [vmem:[%s3 + $0x3b0] sm:$0xff]
      %v1434 = vld [vmem:[%s3 + $0x3b8] sm:$0xff]
      %v1435 = vld [vmem:[%s3 + $0x3c0] sm:$0xff]
      %v1436 = vld [vmem:[%s3 + $0x3c8] sm:$0xff]
      %v1437 = vld [vmem:[%s3 + $0x3d0] sm:$0xff]
      %v1438 = vld [vmem:[%s3 + $0x3d8] sm:$0xff]
      %v1439 = vld [vmem:[%s3 + $0x3e0] sm:$0xff]
      %v1440 = vld [vmem:[%s3 + $0x3e8] sm:$0xff]
      %v1441 = vld [vmem:[%s3 + $0x3f0] sm:$0xff]
      %v1442 = vld [vmem:[%s3 + $0x3f8] sm:$0xff]
      %v1443 = vld [vmem:[%s3 + $0x400] sm:$0xff]
      %v1444 = vld [vmem:[%s3 + $0x408] sm:$0xff]
      %v1445 = vld [vmem:[%s3 + $0x410] sm:$0xff]
      %v1446 = vld [vmem:[%s3 + $0x418] sm:$0xff]
      %v1447 = vld [vmem:[%s3 + $0x420] sm:$0xff]
      %v1448 = vld [vmem:[%s3 + $0x428] sm:$0xff]
      %v1449 = vld [vmem:[%s3 + $0x430] sm:$0xff]
      %v1450 = vld [vmem:[%s3 + $0x438] sm:$0xff]
      %v1451 = vld [vmem:[%s3 + $0x440] sm:$0xff]
      %v1452 = vld [vmem:[%s3 + $0x448] sm:$0xff]
      %v1453 = vld [vmem:[%s3 + $0x450] sm:$0xff]
      %v1454 = vld [vmem:[%s3 + $0x458] sm:$0xff]
      %v1455 = vld [vmem:[%s3 + $0x460] sm:$0xff]
      %v1456 = vld [vmem:[%s3 + $0x468] sm:$0xff]
      %v1457 = vld [vmem:[%s3 + $0x470] sm:$0xff]
      %v1458 = vld [vmem:[%s3 + $0x478] sm:$0xff]
      %1459 = vmatprep.subr.mxu0 0.0
      %1460 = vmatpush1.msra.mxu0 %v1315
      %1461 = vmatprep.subr.mxu0 0.0
      %1462 = vmatpush1.msra.mxu0 %v1316
      %1463 = vmatprep.subr.mxu0 0.0
      %1464 = vmatpush1.msra.mxu0 %v1317
      %1465 = vmatprep.subr.mxu0 0.0
      %1466 = vmatpush1.msra.mxu0 %v1318
      %1467 = vmatprep.subr.mxu0 0.0
      %1468 = vmatpush1.msra.mxu0 %v1319
      %1469 = vmatprep.subr.mxu0 0.0
      %1470 = vmatpush1.msra.mxu0 %v1320
      %1471 = vmatprep.subr.mxu0 0.0
      %1472 = vmatpush1.msra.mxu0 %v1321
      %1473 = vmatprep.subr.mxu0 0.0
      %1474 = vmatpush1.msra.mxu0 %v1322
      %1475 = vmatprep.subr.mxu0 0.0
      %1476 = vmatpush1.msra.mxu0 %v1323
      %1477 = vmatprep.subr.mxu0 0.0
      %1478 = vmatpush1.msra.mxu0 %v1324
      %1479 = vmatprep.subr.mxu0 0.0
      %1480 = vmatpush1.msra.mxu0 %v1325
      %1481 = vmatprep.subr.mxu0 0.0
      %1482 = vmatpush1.msra.mxu0 %v1326
      %1483 = vmatprep.subr.mxu0 0.0
      %1484 = vmatpush1.msra.mxu0 %v1327
      %1485 = vmatprep.subr.mxu0 0.0
      %1486 = vmatpush1.msra.mxu0 %v1328
      %1487 = vmatprep.subr.mxu0 0.0
      %1488 = vmatpush1.msra.mxu0 %v1329
      %1489 = vmatprep.subr.mxu0 0.0
      %1490 = vmatpush1.msra.mxu0 %v1330
      %1491 = vmatprep.subr.mxu0 0.0
      %1492 = vmatpush1.msra.mxu0 %v1331
      %1493 = vmatprep.subr.mxu0 0.0
      %1494 = vmatpush1.msra.mxu0 %v1332
      %1495 = vmatprep.subr.mxu0 0.0
      %1496 = vmatpush1.msra.mxu0 %v1333
      %1497 = vmatprep.subr.mxu0 0.0
      %1498 = vmatpush1.msra.mxu0 %v1334
      %1499 = vmatprep.subr.mxu0 0.0
      %1500 = vmatpush1.msra.mxu0 %v1335
      %1501 = vmatprep.subr.mxu0 0.0
      %1502 = vmatpush1.msra.mxu0 %v1336
      %1503 = vmatprep.subr.mxu0 0.0
      %1504 = vmatpush1.msra.mxu0 %v1337
      %1505 = vmatprep.subr.mxu0 0.0
      %1506 = vmatpush1.msra.mxu0 %v1338
      %1507 = vmatprep.subr.mxu0 0.0
      %1508 = vmatpush1.msra.mxu0 %v1339
      %1509 = vmatprep.subr.mxu0 0.0
      %1510 = vmatpush1.msra.mxu0 %v1340
      %1511 = vmatprep.subr.mxu0 0.0
      %1512 = vmatpush1.msra.mxu0 %v1341
      %1513 = vmatprep.subr.mxu0 0.0
      %1514 = vmatpush1.msra.mxu0 %v1342
      %1515 = vmatprep.subr.mxu0 0.0
      %1516 = vmatpush1.msra.mxu0 %v1343
      %1517 = vmatprep.subr.mxu0 0.0
      %1518 = vmatpush1.msra.mxu0 %v1344
      %1519 = vmatprep.subr.mxu0 0.0
      %1520 = vmatpush1.msra.mxu0 %v1345
      %1521 = vmatprep.subr.mxu0 0.0
      %1522 = vmatpush1.msra.mxu0 %v1346
      %1523 = vmatprep.mubr.f32.mxu0 %v1028
      %1524 = vmatmul.mubr.f32.gmra.mrb[0].mxu0 %v1027
      %v1525 = vpop.f32.mrb[0].mxu0
      %v1526 = vadd.f32 0.0, %v1525
      %v1527 = vpop.f32.mrb[0].mxu0
      %1528 = vmatprep.mubr.f32.mxu0 %v1037
      %1529 = vmatmul.mubr.f32.gmra.mrb[0].mxu0 %v1036
      %v1530 = vpop.f32.mrb[0].mxu0
      %v1531 = vadd.f32 0.0, %v1530
      %v1532 = vpop.f32.mrb[0].mxu0
      %1533 = vmatprep.mubr.f32.mxu0 %v1046
      %1534 = vmatmul.mubr.f32.gmra.mrb[0].mxu0 %v1045
      %v1535 = vpop.f32.mrb[0].mxu0
      %v1536 = vadd.f32 0.0, %v1535
      %v1537 = vpop.f32.mrb[0].mxu0
      %1538 = vmatprep.mubr.f32.mxu0 %v1055
      %1539 = vmatmul.mubr.f32.gmra.mrb[0].mxu0 %v1054
      %v1540 = vpop.f32.mrb[0].mxu0
      %v1541 = vadd.f32 0.0, %v1540
      %v1542 = vpop.f32.mrb[0].mxu0
      %1543 = vmatprep.mubr.f32.mxu0 %v1064
      %1544 = vmatmul.mubr.f32.gmra.mrb[0].mxu0 %v1063
      %v1545 = vpop.f32.mrb[0].mxu0
      %v1546 = vadd.f32 0.0, %v1545
      %v1547 = vpop.f32.mrb[0].mxu0
      %1548 = vmatprep.mubr.f32.mxu0 %v1073
      %1549 = vmatmul.mubr.f32.gmra.mrb[0].mxu0 %v1072
      %v1550 = vpop.f32.mrb[0].mxu0
      %v1551 = vadd.f32 0.0, %v1550
      %v1552 = vpop.f32.mrb[0].mxu0
      %1553 = vmatprep.mubr.f32.mxu0 %v1082
      %1554 = vmatmul.mubr.f32.gmra.mrb[0].mxu0 %v1081
      %v1555 = vpop.f32.mrb[0].mxu0
      %v1556 = vadd.f32 0.0, %v1555
      %v1557 = vpop.f32.mrb[0].mxu0
      %1558 = vmatprep.mubr.f32.mxu0 %v1091
      %1559 = vmatmul.mubr.f32.gmra.mrb[0].mxu0 %v1090
      %v1560 = vpop.f32.mrb[0].mxu0
      %v1561 = vadd.f32 0.0, %v1560
      %v1562 = vpop.f32.mrb[0].mxu0
      %1563 = vmatprep.mubr.f32.mxu0 %v1100
      %1564 = vmatmul.mubr.f32.gmra.mrb[0].mxu0 %v1099
      %v1565 = vpop.f32.mrb[0].mxu0
      %v1566 = vadd.f32 0.0, %v1565
      %v1567 = vpop.f32.mrb[0].mxu0
      %1568 = vmatprep.mubr.f32.mxu0 %v1109
      %1569 = vmatmul.mubr.f32.gmra.mrb[0].mxu0 %v1108
      %v1570 = vpop.f32.mrb[0].mxu0
      %v1571 = vadd.f32 0.0, %v1570
      %v1572 = vpop.f32.mrb[0].mxu0
      %1573 = vmatprep.mubr.f32.mxu0 %v1118
      %1574 = vmatmul.mubr.f32.gmra.mrb[0].mxu0 %v1117
      %v1575 = vpop.f32.mrb[0].mxu0
      %v1576 = vadd.f32 0.0, %v1575
      %v1577 = vpop.f32.mrb[0].mxu0
      %1578 = vmatprep.mubr.f32.mxu0 %v1127
      %1579 = vmatmul.mubr.f32.gmra.mrb[0].mxu0 %v1126
      %v1580 = vpop.f32.mrb[0].mxu0
      %v1581 = vadd.f32 0.0, %v1580
      %v1582 = vpop.f32.mrb[0].mxu0
      %1583 = vmatprep.mubr.f32.mxu0 %v1136
      %1584 = vmatmul.mubr.f32.gmra.mrb[0].mxu0 %v1135
      %v1585 = vpop.f32.mrb[0].mxu0
      %v1586 = vadd.f32 0.0, %v1585
      %v1587 = vpop.f32.mrb[0].mxu0
      %1588 = vmatprep.mubr.f32.mxu0 %v1145
      %1589 = vmatmul.mubr.f32.gmra.mrb[0].mxu0 %v1144
      %v1590 = vpop.f32.mrb[0].mxu0
      %v1591 = vadd.f32 0.0, %v1590
      %v1592 = vpop.f32.mrb[0].mxu0
      %1593 = vmatprep.mubr.f32.mxu0 %v1154
      %1594 = vmatmul.mubr.f32.gmra.mrb[0].mxu0 %v1153
      %v1595 = vpop.f32.mrb[0].mxu0
      %v1596 = vadd.f32 0.0, %v1595
      %v1597 = vpop.f32.mrb[0].mxu0
      %1598 = vmatprep.mubr.f32.mxu0 %v1163
      %1599 = vmatmul.mubr.f32.gmra.mrb[0].mxu0 %v1162
      %v1600 = vpop.f32.mrb[0].mxu0
      %v1601 = vadd.f32 0.0, %v1600
      %v1602 = vpop.f32.mrb[0].mxu0
      %1603 = vmatprep.mubr.f32.mxu0 %v1172
      %1604 = vmatmul.mubr.f32.gmra.mrb[0].mxu0 %v1171
      %v1605 = vpop.f32.mrb[0].mxu0
      %v1606 = vadd.f32 0.0, %v1605
      %v1607 = vpop.f32.mrb[0].mxu0
      %1608 = vmatprep.mubr.f32.mxu0 %v1181
      %1609 = vmatmul.mubr.f32.gmra.mrb[0].mxu0 %v1180
      %v1610 = vpop.f32.mrb[0].mxu0
      %v1611 = vadd.f32 0.0, %v1610
      %v1612 = vpop.f32.mrb[0].mxu0
      %1613 = vmatprep.mubr.f32.mxu0 %v1190
      %1614 = vmatmul.mubr.f32.gmra.mrb[0].mxu0 %v1189
      %v1615 = vpop.f32.mrb[0].mxu0
      %v1616 = vadd.f32 0.0, %v1615
      %v1617 = vpop.f32.mrb[0].mxu0
      %1618 = vmatprep.mubr.f32.mxu0 %v1199
      %1619 = vmatmul.mubr.f32.gmra.mrb[0].mxu0 %v1198
      %v1620 = vpop.f32.mrb[0].mxu0
      %v1621 = vadd.f32 0.0, %v1620
      %v1622 = vpop.f32.mrb[0].mxu0
      %1623 = vmatprep.mubr.f32.mxu0 %v1208
      %1624 = vmatmul.mubr.f32.gmra.mrb[0].mxu0 %v1207
      %v1625 = vpop.f32.mrb[0].mxu0
      %v1626 = vadd.f32 0.0, %v1625
      %v1627 = vpop.f32.mrb[0].mxu0
      %1628 = vmatprep.mubr.f32.mxu0 %v1217
      %1629 = vmatmul.mubr.f32.gmra.mrb[0].mxu0 %v1216
      %v1630 = vpop.f32.mrb[0].mxu0
      %v1631 = vadd.f32 0.0, %v1630
      %v1632 = vpop.f32.mrb[0].mxu0
      %1633 = vmatprep.mubr.f32.mxu0 %v1226
      %1634 = vmatmul.mubr.f32.gmra.mrb[0].mxu0 %v1225
      %v1635 = vpop.f32.mrb[0].mxu0
      %v1636 = vadd.f32 0.0, %v1635
      %v1637 = vpop.f32.mrb[0].mxu0
      %1638 = vmatprep.mubr.f32.mxu0 %v1235
      %1639 = vmatmul.mubr.f32.gmra.mrb[0].mxu0 %v1234
      %v1640 = vpop.f32.mrb[0].mxu0
      %v1641 = vadd.f32 0.0, %v1640
      %v1642 = vpop.f32.mrb[0].mxu0
      %1643 = vmatprep.mubr.f32.mxu0 %v1244
      %1644 = vmatmul.mubr.f32.gmra.mrb[0].mxu0 %v1243
      %v1645 = vpop.f32.mrb[0].mxu0
      %v1646 = vadd.f32 0.0, %v1645
      %v1647 = vpop.f32.mrb[0].mxu0
      %1648 = vmatprep.mubr.f32.mxu0 %v1253
      %1649 = vmatmul.mubr.f32.gmra.mrb[0].mxu0 %v1252
      %v1650 = vpop.f32.mrb[0].mxu0
      %v1651 = vadd.f32 0.0, %v1650
      %v1652 = vpop.f32.mrb[0].mxu0
      %1653 = vmatprep.mubr.f32.mxu0 %v1262
      %1654 = vmatmul.mubr.f32.gmra.mrb[0].mxu0 %v1261
      %v1655 = vpop.f32.mrb[0].mxu0
      %v1656 = vadd.f32 0.0, %v1655
      %v1657 = vpop.f32.mrb[0].mxu0
      %1658 = vmatprep.mubr.f32.mxu0 %v1271
      %1659 = vmatmul.mubr.f32.gmra.mrb[0].mxu0 %v1270
      %v1660 = vpop.f32.mrb[0].mxu0
      %v1661 = vadd.f32 0.0, %v1660
      %v1662 = vpop.f32.mrb[0].mxu0
      %1663 = vmatprep.mubr.f32.mxu0 %v1280
      %1664 = vmatmul.mubr.f32.gmra.mrb[0].mxu0 %v1279
      %v1665 = vpop.f32.mrb[0].mxu0
      %v1666 = vadd.f32 0.0, %v1665
      %v1667 = vpop.f32.mrb[0].mxu0
      %1668 = vmatprep.mubr.f32.mxu0 %v1289
      %1669 = vmatmul.mubr.f32.gmra.mrb[0].mxu0 %v1288
      %v1670 = vpop.f32.mrb[0].mxu0
      %v1671 = vadd.f32 0.0, %v1670
      %v1672 = vpop.f32.mrb[0].mxu0
      %1673 = vmatprep.mubr.f32.mxu0 %v1298
      %1674 = vmatmul.mubr.f32.gmra.mrb[0].mxu0 %v1297
      %v1675 = vpop.f32.mrb[0].mxu0
      %v1676 = vadd.f32 0.0, %v1675
      %v1677 = vpop.f32.mrb[0].mxu0
      %1678 = vmatprep.mubr.f32.mxu0 %v1307
      %1679 = vmatmul.mubr.f32.gmra.mrb[0].mxu0 %v1306
      %v1680 = vpop.f32.mrb[0].mxu0
      %v1681 = vadd.f32 0.0, %v1680
      %v1682 = vpop.f32.mrb[0].mxu0
      %1683 = vdwg.mxu0
      %1684 = vmatprep.subr.mxu0 0.0
      %1685 = vmatpush1.msra.mxu0 %v1347
      %1686 = vmatprep.subr.mxu0 0.0
      %1687 = vmatpush1.msra.mxu0 %v1348
      %1688 = vmatprep.subr.mxu0 0.0
      %1689 = vmatpush1.msra.mxu0 %v1349
      %1690 = vmatprep.subr.mxu0 0.0
      %1691 = vmatpush1.msra.mxu0 %v1350
      %1692 = vmatprep.subr.mxu0 0.0
      %1693 = vmatpush1.msra.mxu0 %v1351
      %1694 = vmatprep.subr.mxu0 0.0
      %1695 = vmatpush1.msra.mxu0 %v1352
      %1696 = vmatprep.subr.mxu0 0.0
      %1697 = vmatpush1.msra.mxu0 %v1353
      %1698 = vmatprep.subr.mxu0 0.0
      %1699 = vmatpush1.msra.mxu0 %v1354
      %1700 = vmatprep.subr.mxu0 0.0
      %1701 = vmatpush1.msra.mxu0 %v1355
      %1702 = vmatprep.subr.mxu0 0.0
      %1703 = vmatpush1.msra.mxu0 %v1356
      %1704 = vmatprep.subr.mxu0 0.0
      %1705 = vmatpush1.msra.mxu0 %v1357
      %1706 = vmatprep.subr.mxu0 0.0
      %1707 = vmatpush1.msra.mxu0 %v1358
      %1708 = vmatprep.subr.mxu0 0.0
      %1709 = vmatpush1.msra.mxu0 %v1359
      %1710 = vmatprep.subr.mxu0 0.0
      %1711 = vmatpush1.msra.mxu0 %v1360
      %1712 = vmatprep.subr.mxu0 0.0
      %1713 = vmatpush1.msra.mxu0 %v1361
      %1714 = vmatprep.subr.mxu0 0.0
      %1715 = vmatpush1.msra.mxu0 %v1362
      %1716 = vmatprep.subr.mxu0 0.0
      %1717 = vmatpush1.msra.mxu0 %v1363
      %1718 = vmatprep.subr.mxu0 0.0
      %1719 = vmatpush1.msra.mxu0 %v1364
      %1720 = vmatprep.subr.mxu0 0.0
      %1721 = vmatpush1.msra.mxu0 %v1365
      %1722 = vmatprep.subr.mxu0 0.0
      %1723 = vmatpush1.msra.mxu0 %v1366
      %1724 = vmatprep.subr.mxu0 0.0
      %1725 = vmatpush1.msra.mxu0 %v1367
      %1726 = vmatprep.subr.mxu0 0.0
      %1727 = vmatpush1.msra.mxu0 %v1368
      %1728 = vmatprep.subr.mxu0 0.0
      %1729 = vmatpush1.msra.mxu0 %v1369
      %1730 = vmatprep.subr.mxu0 0.0
      %1731 = vmatpush1.msra.mxu0 %v1370
      %1732 = vmatprep.subr.mxu0 0.0
      %1733 = vmatpush1.msra.mxu0 %v1371
      %1734 = vmatprep.subr.mxu0 0.0
      %1735 = vmatpush1.msra.mxu0 %v1372
      %1736 = vmatprep.subr.mxu0 0.0
      %1737 = vmatpush1.msra.mxu0 %v1373
      %1738 = vmatprep.subr.mxu0 0.0
      %1739 = vmatpush1.msra.mxu0 %v1374
      %1740 = vmatprep.subr.mxu0 0.0
      %1741 = vmatpush1.msra.mxu0 %v1375
      %1742 = vmatprep.subr.mxu0 0.0
      %1743 = vmatpush1.msra.mxu0 %v1376
      %1744 = vmatprep.subr.mxu0 0.0
      %1745 = vmatpush1.msra.mxu0 %v1377
      %1746 = vmatprep.subr.mxu0 0.0
      %1747 = vmatpush1.msra.mxu0 %v1378
      %1748 = vmatprep.mubr.f32.mxu0 %v1030
      %1749 = vmatmul.mubr.f32.gmra.mrb[0].mxu0 %v1029
      %v1750 = vpop.f32.mrb[0].mxu0
      %v1751 = vadd.f32 %v1526, %v1750
      %v1752 = vpop.f32.mrb[0].mxu0
      %1753 = vmatprep.mubr.f32.mxu0 %v1039
      %1754 = vmatmul.mubr.f32.gmra.mrb[0].mxu0 %v1038
      %v1755 = vpop.f32.mrb[0].mxu0
      %v1756 = vadd.f32 %v1531, %v1755
      %v1757 = vpop.f32.mrb[0].mxu0
      %1758 = vmatprep.mubr.f32.mxu0 %v1048
      %1759 = vmatmul.mubr.f32.gmra.mrb[0].mxu0 %v1047
      %v1760 = vpop.f32.mrb[0].mxu0
      %v1761 = vadd.f32 %v1536, %v1760
      %v1762 = vpop.f32.mrb[0].mxu0
      %1763 = vmatprep.mubr.f32.mxu0 %v1057
      %1764 = vmatmul.mubr.f32.gmra.mrb[0].mxu0 %v1056
      %v1765 = vpop.f32.mrb[0].mxu0
      %v1766 = vadd.f32 %v1541, %v1765
      %v1767 = vpop.f32.mrb[0].mxu0
      %1768 = vmatprep.mubr.f32.mxu0 %v1066
      %1769 = vmatmul.mubr.f32.gmra.mrb[0].mxu0 %v1065
      %v1770 = vpop.f32.mrb[0].mxu0
      %v1771 = vadd.f32 %v1546, %v1770
      %v1772 = vpop.f32.mrb[0].mxu0
      %1773 = vmatprep.mubr.f32.mxu0 %v1075
      %1774 = vmatmul.mubr.f32.gmra.mrb[0].mxu0 %v1074
      %v1775 = vpop.f32.mrb[0].mxu0
      %v1776 = vadd.f32 %v1551, %v1775
      %v1777 = vpop.f32.mrb[0].mxu0
      %1778 = vmatprep.mubr.f32.mxu0 %v1084
      %1779 = vmatmul.mubr.f32.gmra.mrb[0].mxu0 %v1083
      %v1780 = vpop.f32.mrb[0].mxu0
      %v1781 = vadd.f32 %v1556, %v1780
      %v1782 = vpop.f32.mrb[0].mxu0
      %1783 = vmatprep.mubr.f32.mxu0 %v1093
      %1784 = vmatmul.mubr.f32.gmra.mrb[0].mxu0 %v1092
      %v1785 = vpop.f32.mrb[0].mxu0
      %v1786 = vadd.f32 %v1561, %v1785
      %v1787 = vpop.f32.mrb[0].mxu0
      %1788 = vmatprep.mubr.f32.mxu0 %v1102
      %1789 = vmatmul.mubr.f32.gmra.mrb[0].mxu0 %v1101
      %v1790 = vpop.f32.mrb[0].mxu0
      %v1791 = vadd.f32 %v1566, %v1790
      %v1792 = vpop.f32.mrb[0].mxu0
      %1793 = vmatprep.mubr.f32.mxu0 %v1111
      %1794 = vmatmul.mubr.f32.gmra.mrb[0].mxu0 %v1110
      %v1795 = vpop.f32.mrb[0].mxu0
      %v1796 = vadd.f32 %v1571, %v1795
      %v1797 = vpop.f32.mrb[0].mxu0
      %1798 = vmatprep.mubr.f32.mxu0 %v1120
      %1799 = vmatmul.mubr.f32.gmra.mrb[0].mxu0 %v1119
      %v1800 = vpop.f32.mrb[0].mxu0
      %v1801 = vadd.f32 %v1576, %v1800
      %v1802 = vpop.f32.mrb[0].mxu0
      %1803 = vmatprep.mubr.f32.mxu0 %v1129
      %1804 = vmatmul.mubr.f32.gmra.mrb[0].mxu0 %v1128
      %v1805 = vpop.f32.mrb[0].mxu0
      %v1806 = vadd.f32 %v1581, %v1805
      %v1807 = vpop.f32.mrb[0].mxu0
      %1808 = vmatprep.mubr.f32.mxu0 %v1138
      %1809 = vmatmul.mubr.f32.gmra.mrb[0].mxu0 %v1137
      %v1810 = vpop.f32.mrb[0].mxu0
      %v1811 = vadd.f32 %v1586, %v1810
      %v1812 = vpop.f32.mrb[0].mxu0
      %1813 = vmatprep.mubr.f32.mxu0 %v1147
      %1814 = vmatmul.mubr.f32.gmra.mrb[0].mxu0 %v1146
      %v1815 = vpop.f32.mrb[0].mxu0
      %v1816 = vadd.f32 %v1591, %v1815
      %v1817 = vpop.f32.mrb[0].mxu0
      %1818 = vmatprep.mubr.f32.mxu0 %v1156
      %1819 = vmatmul.mubr.f32.gmra.mrb[0].mxu0 %v1155
      %v1820 = vpop.f32.mrb[0].mxu0
      %v1821 = vadd.f32 %v1596, %v1820
      %v1822 = vpop.f32.mrb[0].mxu0
      %1823 = vmatprep.mubr.f32.mxu0 %v1165
      %1824 = vmatmul.mubr.f32.gmra.mrb[0].mxu0 %v1164
      %v1825 = vpop.f32.mrb[0].mxu0
      %v1826 = vadd.f32 %v1601, %v1825
      %v1827 = vpop.f32.mrb[0].mxu0
      %1828 = vmatprep.mubr.f32.mxu0 %v1174
      %1829 = vmatmul.mubr.f32.gmra.mrb[0].mxu0 %v1173
      %v1830 = vpop.f32.mrb[0].mxu0
      %v1831 = vadd.f32 %v1606, %v1830
      %v1832 = vpop.f32.mrb[0].mxu0
      %1833 = vmatprep.mubr.f32.mxu0 %v1183
      %1834 = vmatmul.mubr.f32.gmra.mrb[0].mxu0 %v1182
      %v1835 = vpop.f32.mrb[0].mxu0
      %v1836 = vadd.f32 %v1611, %v1835
      %v1837 = vpop.f32.mrb[0].mxu0
      %1838 = vmatprep.mubr.f32.mxu0 %v1192
      %1839 = vmatmul.mubr.f32.gmra.mrb[0].mxu0 %v1191
      %v1840 = vpop.f32.mrb[0].mxu0
      %v1841 = vadd.f32 %v1616, %v1840
      %v1842 = vpop.f32.mrb[0].mxu0
      %1843 = vmatprep.mubr.f32.mxu0 %v1201
      %1844 = vmatmul.mubr.f32.gmra.mrb[0].mxu0 %v1200
      %v1845 = vpop.f32.mrb[0].mxu0
      %v1846 = vadd.f32 %v1621, %v1845
      %v1847 = vpop.f32.mrb[0].mxu0
      %1848 = vmatprep.mubr.f32.mxu0 %v1210
      %1849 = vmatmul.mubr.f32.gmra.mrb[0].mxu0 %v1209
      %v1850 = vpop.f32.mrb[0].mxu0
      %v1851 = vadd.f32 %v1626, %v1850
      %v1852 = vpop.f32.mrb[0].mxu0
      %1853 = vmatprep.mubr.f32.mxu0 %v1219
      %1854 = vmatmul.mubr.f32.gmra.mrb[0].mxu0 %v1218
      %v1855 = vpop.f32.mrb[0].mxu0
      %v1856 = vadd.f32 %v1631, %v1855
      %v1857 = vpop.f32.mrb[0].mxu0
      %1858 = vmatprep.mubr.f32.mxu0 %v1228
      %1859 = vmatmul.mubr.f32.gmra.mrb[0].mxu0 %v1227
      %v1860 = vpop.f32.mrb[0].mxu0
      %v1861 = vadd.f32 %v1636, %v1860
      %v1862 = vpop.f32.mrb[0].mxu0
      %1863 = vmatprep.mubr.f32.mxu0 %v1237
      %1864 = vmatmul.mubr.f32.gmra.mrb[0].mxu0 %v1236
      %v1865 = vpop.f32.mrb[0].mxu0
      %v1866 = vadd.f32 %v1641, %v1865
      %v1867 = vpop.f32.mrb[0].mxu0
      %1868 = vmatprep.mubr.f32.mxu0 %v1246
      %1869 = vmatmul.mubr.f32.gmra.mrb[0].mxu0 %v1245
      %v1870 = vpop.f32.mrb[0].mxu0
      %v1871 = vadd.f32 %v1646, %v1870
      %v1872 = vpop.f32.mrb[0].mxu0
      %1873 = vmatprep.mubr.f32.mxu0 %v1255
      %1874 = vmatmul.mubr.f32.gmra.mrb[0].mxu0 %v1254
      %v1875 = vpop.f32.mrb[0].mxu0
      %v1876 = vadd.f32 %v1651, %v1875
      %v1877 = vpop.f32.mrb[0].mxu0
      %1878 = vmatprep.mubr.f32.mxu0 %v1264
      %1879 = vmatmul.mubr.f32.gmra.mrb[0].mxu0 %v1263
      %v1880 = vpop.f32.mrb[0].mxu0
      %v1881 = vadd.f32 %v1656, %v1880
      %v1882 = vpop.f32.mrb[0].mxu0
      %1883 = vmatprep.mubr.f32.mxu0 %v1273
      %1884 = vmatmul.mubr.f32.gmra.mrb[0].mxu0 %v1272
      %v1885 = vpop.f32.mrb[0].mxu0
      %v1886 = vadd.f32 %v1661, %v1885
      %v1887 = vpop.f32.mrb[0].mxu0
      %1888 = vmatprep.mubr.f32.mxu0 %v1282
      %1889 = vmatmul.mubr.f32.gmra.mrb[0].mxu0 %v1281
      %v1890 = vpop.f32.mrb[0].mxu0
      %v1891 = vadd.f32 %v1666, %v1890
      %v1892 = vpop.f32.mrb[0].mxu0
      %1893 = vmatprep.mubr.f32.mxu0 %v1291
      %1894 = vmatmul.mubr.f32.gmra.mrb[0].mxu0 %v1290
      %v1895 = vpop.f32.mrb[0].mxu0
      %v1896 = vadd.f32 %v1671, %v1895
      %v1897 = vpop.f32.mrb[0].mxu0
      %1898 = vmatprep.mubr.f32.mxu0 %v1300
      %1899 = vmatmul.mubr.f32.gmra.mrb[0].mxu0 %v1299
      %v1900 = vpop.f32.mrb[0].mxu0
      %v1901 = vadd.f32 %v1676, %v1900
      %v1902 = vpop.f32.mrb[0].mxu0
      %1903 = vmatprep.mubr.f32.mxu0 %v1309
      %1904 = vmatmul.mubr.f32.gmra.mrb[0].mxu0 %v1308
      %v1905 = vpop.f32.mrb[0].mxu0
      %v1906 = vadd.f32 %v1681, %v1905
      %v1907 = vpop.f32.mrb[0].mxu0
      %1908 = vdwg.mxu0
      %1909 = vmatprep.subr.mxu0 0.0
      %1910 = vmatpush1.msra.mxu0 %v1379
      %1911 = vmatprep.subr.mxu0 0.0
      %1912 = vmatpush1.msra.mxu0 %v1380
      %1913 = vmatprep.subr.mxu0 0.0
      %1914 = vmatpush1.msra.mxu0 %v1381
      %1915 = vmatprep.subr.mxu0 0.0
      %1916 = vmatpush1.msra.mxu0 %v1382
      %1917 = vmatprep.subr.mxu0 0.0
      %1918 = vmatpush1.msra.mxu0 %v1383
      %1919 = vmatprep.subr.mxu0 0.0
      %1920 = vmatpush1.msra.mxu0 %v1384
      %1921 = vmatprep.subr.mxu0 0.0
      %1922 = vmatpush1.msra.mxu0 %v1385
      %1923 = vmatprep.subr.mxu0 0.0
      %1924 = vmatpush1.msra.mxu0 %v1386
      %1925 = vmatprep.subr.mxu0 0.0
      %1926 = vmatpush1.msra.mxu0 %v1387
      %1927 = vmatprep.subr.mxu0 0.0
      %1928 = vmatpush1.msra.mxu0 %v1388
      %1929 = vmatprep.subr.mxu0 0.0
      %1930 = vmatpush1.msra.mxu0 %v1389
      %1931 = vmatprep.subr.mxu0 0.0
      %1932 = vmatpush1.msra.mxu0 %v1390
      %1933 = vmatprep.subr.mxu0 0.0
      %1934 = vmatpush1.msra.mxu0 %v1391
      %1935 = vmatprep.subr.mxu0 0.0
      %1936 = vmatpush1.msra.mxu0 %v1392
      %1937 = vmatprep.subr.mxu0 0.0
      %1938 = vmatpush1.msra.mxu0 %v1393
      %1939 = vmatprep.subr.mxu0 0.0
      %1940 = vmatpush1.msra.mxu0 %v1394
      %1941 = vmatprep.subr.mxu0 0.0
      %1942 = vmatpush1.msra.mxu0 %v1395
      %1943 = vmatprep.subr.mxu0 0.0
      %1944 = vmatpush1.msra.mxu0 %v1396
      %1945 = vmatprep.subr.mxu0 0.0
      %1946 = vmatpush1.msra.mxu0 %v1397
      %1947 = vmatprep.subr.mxu0 0.0
      %1948 = vmatpush1.msra.mxu0 %v1398
      %1949 = vmatprep.subr.mxu0 0.0
      %1950 = vmatpush1.msra.mxu0 %v1399
      %1951 = vmatprep.subr.mxu0 0.0
      %1952 = vmatpush1.msra.mxu0 %v1400
      %1953 = vmatprep.subr.mxu0 0.0
      %1954 = vmatpush1.msra.mxu0 %v1401
      %1955 = vmatprep.subr.mxu0 0.0
      %1956 = vmatpush1.msra.mxu0 %v1402
      %1957 = vmatprep.subr.mxu0 0.0
      %1958 = vmatpush1.msra.mxu0 %v1403
      %1959 = vmatprep.subr.mxu0 0.0
      %1960 = vmatpush1.msra.mxu0 %v1404
      %1961 = vmatprep.subr.mxu0 0.0
      %1962 = vmatpush1.msra.mxu0 %v1405
      %1963 = vmatprep.subr.mxu0 0.0
      %1964 = vmatpush1.msra.mxu0 %v1406
      %1965 = vmatprep.subr.mxu0 0.0
      %1966 = vmatpush1.msra.mxu0 %v1407
      %1967 = vmatprep.subr.mxu0 0.0
      %1968 = vmatpush1.msra.mxu0 %v1408
      %1969 = vmatprep.subr.mxu0 0.0
      %1970 = vmatpush1.msra.mxu0 %v1409
      %1971 = vmatprep.subr.mxu0 0.0
      %1972 = vmatpush1.msra.mxu0 %v1410
      %1973 = vmatprep.mubr.f32.mxu0 %v1032
      %1974 = vmatmul.mubr.f32.gmra.mrb[0].mxu0 %v1031
      %v1975 = vpop.f32.mrb[0].mxu0
      %v1976 = vadd.f32 %v1751, %v1975
      %v1977 = vpop.f32.mrb[0].mxu0
      %1978 = vmatprep.mubr.f32.mxu0 %v1041
      %1979 = vmatmul.mubr.f32.gmra.mrb[0].mxu0 %v1040
      %v1980 = vpop.f32.mrb[0].mxu0
      %v1981 = vadd.f32 %v1756, %v1980
      %v1982 = vpop.f32.mrb[0].mxu0
      %1983 = vmatprep.mubr.f32.mxu0 %v1050
      %1984 = vmatmul.mubr.f32.gmra.mrb[0].mxu0 %v1049
      %v1985 = vpop.f32.mrb[0].mxu0
      %v1986 = vadd.f32 %v1761, %v1985
      %v1987 = vpop.f32.mrb[0].mxu0
      %1988 = vmatprep.mubr.f32.mxu0 %v1059
      %1989 = vmatmul.mubr.f32.gmra.mrb[0].mxu0 %v1058
      %v1990 = vpop.f32.mrb[0].mxu0
      %v1991 = vadd.f32 %v1766, %v1990
      %v1992 = vpop.f32.mrb[0].mxu0
      %1993 = vmatprep.mubr.f32.mxu0 %v1068
      %1994 = vmatmul.mubr.f32.gmra.mrb[0].mxu0 %v1067
      %v1995 = vpop.f32.mrb[0].mxu0
      %v1996 = vadd.f32 %v1771, %v1995
      %v1997 = vpop.f32.mrb[0].mxu0
      %1998 = vmatprep.mubr.f32.mxu0 %v1077
      %1999 = vmatmul.mubr.f32.gmra.mrb[0].mxu0 %v1076
      %v2000 = vpop.f32.mrb[0].mxu0
      %v2001 = vadd.f32 %v1776, %v2000
      %v2002 = vpop.f32.mrb[0].mxu0
      %2003 = vmatprep.mubr.f32.mxu0 %v1086
      %2004 = vmatmul.mubr.f32.gmra.mrb[0].mxu0 %v1085
      %v2005 = vpop.f32.mrb[0].mxu0
      %v2006 = vadd.f32 %v1781, %v2005
      %v2007 = vpop.f32.mrb[0].mxu0
      %2008 = vmatprep.mubr.f32.mxu0 %v1095
      %2009 = vmatmul.mubr.f32.gmra.mrb[0].mxu0 %v1094
      %v2010 = vpop.f32.mrb[0].mxu0
      %v2011 = vadd.f32 %v1786, %v2010
      %v2012 = vpop.f32.mrb[0].mxu0
      %2013 = vmatprep.mubr.f32.mxu0 %v1104
      %2014 = vmatmul.mubr.f32.gmra.mrb[0].mxu0 %v1103
      %v2015 = vpop.f32.mrb[0].mxu0
      %v2016 = vadd.f32 %v1791, %v2015
      %v2017 = vpop.f32.mrb[0].mxu0
      %2018 = vmatprep.mubr.f32.mxu0 %v1113
      %2019 = vmatmul.mubr.f32.gmra.mrb[0].mxu0 %v1112
      %v2020 = vpop.f32.mrb[0].mxu0
      %v2021 = vadd.f32 %v1796, %v2020
      %v2022 = vpop.f32.mrb[0].mxu0
      %2023 = vmatprep.mubr.f32.mxu0 %v1122
      %2024 = vmatmul.mubr.f32.gmra.mrb[0].mxu0 %v1121
      %v2025 = vpop.f32.mrb[0].mxu0
      %v2026 = vadd.f32 %v1801, %v2025
      %v2027 = vpop.f32.mrb[0].mxu0
      %2028 = vmatprep.mubr.f32.mxu0 %v1131
      %2029 = vmatmul.mubr.f32.gmra.mrb[0].mxu0 %v1130
      %v2030 = vpop.f32.mrb[0].mxu0
      %v2031 = vadd.f32 %v1806, %v2030
      %v2032 = vpop.f32.mrb[0].mxu0
      %2033 = vmatprep.mubr.f32.mxu0 %v1140
      %2034 = vmatmul.mubr.f32.gmra.mrb[0].mxu0 %v1139
      %v2035 = vpop.f32.mrb[0].mxu0
      %v2036 = vadd.f32 %v1811, %v2035
      %v2037 = vpop.f32.mrb[0].mxu0
      %2038 = vmatprep.mubr.f32.mxu0 %v1149
      %2039 = vmatmul.mubr.f32.gmra.mrb[0].mxu0 %v1148
      %v2040 = vpop.f32.mrb[0].mxu0
      %v2041 = vadd.f32 %v1816, %v2040
      %v2042 = vpop.f32.mrb[0].mxu0
      %2043 = vmatprep.mubr.f32.mxu0 %v1158
      %2044 = vmatmul.mubr.f32.gmra.mrb[0].mxu0 %v1157
      %v2045 = vpop.f32.mrb[0].mxu0
      %v2046 = vadd.f32 %v1821, %v2045
      %v2047 = vpop.f32.mrb[0].mxu0
      %2048 = vmatprep.mubr.f32.mxu0 %v1167
      %2049 = vmatmul.mubr.f32.gmra.mrb[0].mxu0 %v1166
      %v2050 = vpop.f32.mrb[0].mxu0
      %v2051 = vadd.f32 %v1826, %v2050
      %v2052 = vpop.f32.mrb[0].mxu0
      %2053 = vmatprep.mubr.f32.mxu0 %v1176
      %2054 = vmatmul.mubr.f32.gmra.mrb[0].mxu0 %v1175
      %v2055 = vpop.f32.mrb[0].mxu0
      %v2056 = vadd.f32 %v1831, %v2055
      %v2057 = vpop.f32.mrb[0].mxu0
      %2058 = vmatprep.mubr.f32.mxu0 %v1185
      %2059 = vmatmul.mubr.f32.gmra.mrb[0].mxu0 %v1184
      %v2060 = vpop.f32.mrb[0].mxu0
      %v2061 = vadd.f32 %v1836, %v2060
      %v2062 = vpop.f32.mrb[0].mxu0
      %2063 = vmatprep.mubr.f32.mxu0 %v1194
      %2064 = vmatmul.mubr.f32.gmra.mrb[0].mxu0 %v1193
      %v2065 = vpop.f32.mrb[0].mxu0
      %v2066 = vadd.f32 %v1841, %v2065
      %v2067 = vpop.f32.mrb[0].mxu0
      %2068 = vmatprep.mubr.f32.mxu0 %v1203
      %2069 = vmatmul.mubr.f32.gmra.mrb[0].mxu0 %v1202
      %v2070 = vpop.f32.mrb[0].mxu0
      %v2071 = vadd.f32 %v1846, %v2070
      %v2072 = vpop.f32.mrb[0].mxu0
      %2073 = vmatprep.mubr.f32.mxu0 %v1212
      %2074 = vmatmul.mubr.f32.gmra.mrb[0].mxu0 %v1211
      %v2075 = vpop.f32.mrb[0].mxu0
      %v2076 = vadd.f32 %v1851, %v2075
      %v2077 = vpop.f32.mrb[0].mxu0
      %2078 = vmatprep.mubr.f32.mxu0 %v1221
      %2079 = vmatmul.mubr.f32.gmra.mrb[0].mxu0 %v1220
      %v2080 = vpop.f32.mrb[0].mxu0
      %v2081 = vadd.f32 %v1856, %v2080
      %v2082 = vpop.f32.mrb[0].mxu0
      %2083 = vmatprep.mubr.f32.mxu0 %v1230
      %2084 = vmatmul.mubr.f32.gmra.mrb[0].mxu0 %v1229
      %v2085 = vpop.f32.mrb[0].mxu0
      %v2086 = vadd.f32 %v1861, %v2085
      %v2087 = vpop.f32.mrb[0].mxu0
      %2088 = vmatprep.mubr.f32.mxu0 %v1239
      %2089 = vmatmul.mubr.f32.gmra.mrb[0].mxu0 %v1238
      %v2090 = vpop.f32.mrb[0].mxu0
      %v2091 = vadd.f32 %v1866, %v2090
      %v2092 = vpop.f32.mrb[0].mxu0
      %2093 = vmatprep.mubr.f32.mxu0 %v1248
      %2094 = vmatmul.mubr.f32.gmra.mrb[0].mxu0 %v1247
      %v2095 = vpop.f32.mrb[0].mxu0
      %v2096 = vadd.f32 %v1871, %v2095
      %v2097 = vpop.f32.mrb[0].mxu0
      %2098 = vmatprep.mubr.f32.mxu0 %v1257
      %2099 = vmatmul.mubr.f32.gmra.mrb[0].mxu0 %v1256
      %v2100 = vpop.f32.mrb[0].mxu0
      %v2101 = vadd.f32 %v1876, %v2100
      %v2102 = vpop.f32.mrb[0].mxu0
      %2103 = vmatprep.mubr.f32.mxu0 %v1266
      %2104 = vmatmul.mubr.f32.gmra.mrb[0].mxu0 %v1265
      %v2105 = vpop.f32.mrb[0].mxu0
      %v2106 = vadd.f32 %v1881, %v2105
      %v2107 = vpop.f32.mrb[0].mxu0
      %2108 = vmatprep.mubr.f32.mxu0 %v1275
      %2109 = vmatmul.mubr.f32.gmra.mrb[0].mxu0 %v1274
      %v2110 = vpop.f32.mrb[0].mxu0
      %v2111 = vadd.f32 %v1886, %v2110
      %v2112 = vpop.f32.mrb[0].mxu0
      %2113 = vmatprep.mubr.f32.mxu0 %v1284
      %2114 = vmatmul.mubr.f32.gmra.mrb[0].mxu0 %v1283
      %v2115 = vpop.f32.mrb[0].mxu0
      %v2116 = vadd.f32 %v1891, %v2115
      %v2117 = vpop.f32.mrb[0].mxu0
      %2118 = vmatprep.mubr.f32.mxu0 %v1293
      %2119 = vmatmul.mubr.f32.gmra.mrb[0].mxu0 %v1292
      %v2120 = vpop.f32.mrb[0].mxu0
      %v2121 = vadd.f32 %v1896, %v2120
      %v2122 = vpop.f32.mrb[0].mxu0
      %2123 = vmatprep.mubr.f32.mxu0 %v1302
      %2124 = vmatmul.mubr.f32.gmra.mrb[0].mxu0 %v1301
      %v2125 = vpop.f32.mrb[0].mxu0
      %v2126 = vadd.f32 %v1901, %v2125
      %v2127 = vpop.f32.mrb[0].mxu0
      %2128 = vmatprep.mubr.f32.mxu0 %v1311
      %2129 = vmatmul.mubr.f32.gmra.mrb[0].mxu0 %v1310
      %v2130 = vpop.f32.mrb[0].mxu0
      %v2131 = vadd.f32 %v1906, %v2130
      %v2132 = vpop.f32.mrb[0].mxu0
      %2133 = vdwg.mxu0
      %2134 = vmatprep.subr.mxu0 0.0
      %2135 = vmatpush1.msra.mxu0 %v1411
      %2136 = vmatprep.subr.mxu0 0.0
      %2137 = vmatpush1.msra.mxu0 %v1412
      %2138 = vmatprep.subr.mxu0 0.0
      %2139 = vmatpush1.msra.mxu0 %v1413
      %2140 = vmatprep.subr.mxu0 0.0
      %2141 = vmatpush1.msra.mxu0 %v1414
      %2142 = vmatprep.subr.mxu0 0.0
      %2143 = vmatpush1.msra.mxu0 %v1415
      %2144 = vmatprep.subr.mxu0 0.0
      %2145 = vmatpush1.msra.mxu0 %v1416
      %2146 = vmatprep.subr.mxu0 0.0
      %2147 = vmatpush1.msra.mxu0 %v1417
      %2148 = vmatprep.subr.mxu0 0.0
      %2149 = vmatpush1.msra.mxu0 %v1418
      %2150 = vmatprep.subr.mxu0 0.0
      %2151 = vmatpush1.msra.mxu0 %v1419
      %2152 = vmatprep.subr.mxu0 0.0
      %2153 = vmatpush1.msra.mxu0 %v1420
      %2154 = vmatprep.subr.mxu0 0.0
      %2155 = vmatpush1.msra.mxu0 %v1421
      %2156 = vmatprep.subr.mxu0 0.0
      %2157 = vmatpush1.msra.mxu0 %v1422
      %2158 = vmatprep.subr.mxu0 0.0
      %2159 = vmatpush1.msra.mxu0 %v1423
      %2160 = vmatprep.subr.mxu0 0.0
      %2161 = vmatpush1.msra.mxu0 %v1424
      %2162 = vmatprep.subr.mxu0 0.0
      %2163 = vmatpush1.msra.mxu0 %v1425
      %2164 = vmatprep.subr.mxu0 0.0
      %2165 = vmatpush1.msra.mxu0 %v1426
      %2166 = vmatprep.subr.mxu0 0.0
      %2167 = vmatpush1.msra.mxu0 %v1427
      %2168 = vmatprep.subr.mxu0 0.0
      %2169 = vmatpush1.msra.mxu0 %v1428
      %2170 = vmatprep.subr.mxu0 0.0
      %2171 = vmatpush1.msra.mxu0 %v1429
      %2172 = vmatprep.subr.mxu0 0.0
      %2173 = vmatpush1.msra.mxu0 %v1430
      %2174 = vmatprep.subr.mxu0 0.0
      %2175 = vmatpush1.msra.mxu0 %v1431
      %2176 = vmatprep.subr.mxu0 0.0
      %2177 = vmatpush1.msra.mxu0 %v1432
      %2178 = vmatprep.subr.mxu0 0.0
      %2179 = vmatpush1.msra.mxu0 %v1433
      %2180 = vmatprep.subr.mxu0 0.0
      %2181 = vmatpush1.msra.mxu0 %v1434
      %2182 = vmatprep.subr.mxu0 0.0
      %2183 = vmatpush1.msra.mxu0 %v1435
      %2184 = vmatprep.subr.mxu0 0.0
      %2185 = vmatpush1.msra.mxu0 %v1436
      %2186 = vmatprep.subr.mxu0 0.0
      %2187 = vmatpush1.msra.mxu0 %v1437
      %2188 = vmatprep.subr.mxu0 0.0
      %2189 = vmatpush1.msra.mxu0 %v1438
      %2190 = vmatprep.subr.mxu0 0.0
      %2191 = vmatpush1.msra.mxu0 %v1439
      %2192 = vmatprep.subr.mxu0 0.0
      %2193 = vmatpush1.msra.mxu0 %v1440
      %2194 = vmatprep.subr.mxu0 0.0
      %2195 = vmatpush1.msra.mxu0 %v1441
      %2196 = vmatprep.subr.mxu0 0.0
      %2197 = vmatpush1.msra.mxu0 %v1442
      %2198 = vmatprep.mubr.f32.mxu0 %v1034
      %2199 = vmatmul.mubr.f32.gmra.mrb[0].mxu0 %v1033
      %v2200 = vpop.f32.mrb[0].mxu0
      %v2201 = vadd.f32 %v1976, %v2200
      %v2202 = vpop.f32.mrb[0].mxu0
      %2203 = vmatprep.mubr.f32.mxu0 %v1043
      %2204 = vmatmul.mubr.f32.gmra.mrb[0].mxu0 %v1042
      %v2205 = vpop.f32.mrb[0].mxu0
      %v2206 = vadd.f32 %v1981, %v2205
      %v2207 = vpop.f32.mrb[0].mxu0
      %2208 = vmatprep.mubr.f32.mxu0 %v1052
      %2209 = vmatmul.mubr.f32.gmra.mrb[0].mxu0 %v1051
      %v2210 = vpop.f32.mrb[0].mxu0
      %v2211 = vadd.f32 %v1986, %v2210
      %v2212 = vpop.f32.mrb[0].mxu0
      %2213 = vmatprep.mubr.f32.mxu0 %v1061
      %2214 = vmatmul.mubr.f32.gmra.mrb[0].mxu0 %v1060
      %v2215 = vpop.f32.mrb[0].mxu0
      %v2216 = vadd.f32 %v1991, %v2215
      %v2217 = vpop.f32.mrb[0].mxu0
      %2218 = vmatprep.mubr.f32.mxu0 %v1070
      %2219 = vmatmul.mubr.f32.gmra.mrb[0].mxu0 %v1069
      %v2220 = vpop.f32.mrb[0].mxu0
      %v2221 = vadd.f32 %v1996, %v2220
      %v2222 = vpop.f32.mrb[0].mxu0
      %2223 = vmatprep.mubr.f32.mxu0 %v1079
      %2224 = vmatmul.mubr.f32.gmra.mrb[0].mxu0 %v1078
      %v2225 = vpop.f32.mrb[0].mxu0
      %v2226 = vadd.f32 %v2001, %v2225
      %v2227 = vpop.f32.mrb[0].mxu0
      %2228 = vmatprep.mubr.f32.mxu0 %v1088
      %2229 = vmatmul.mubr.f32.gmra.mrb[0].mxu0 %v1087
      %v2230 = vpop.f32.mrb[0].mxu0
      %v2231 = vadd.f32 %v2006, %v2230
      %v2232 = vpop.f32.mrb[0].mxu0
      %2233 = vmatprep.mubr.f32.mxu0 %v1097
      %2234 = vmatmul.mubr.f32.gmra.mrb[0].mxu0 %v1096
      %v2235 = vpop.f32.mrb[0].mxu0
      %v2236 = vadd.f32 %v2011, %v2235
      %v2237 = vpop.f32.mrb[0].mxu0
      %2238 = vmatprep.mubr.f32.mxu0 %v1106
      %2239 = vmatmul.mubr.f32.gmra.mrb[0].mxu0 %v1105
      %v2240 = vpop.f32.mrb[0].mxu0
      %v2241 = vadd.f32 %v2016, %v2240
      %v2242 = vpop.f32.mrb[0].mxu0
      %2243 = vmatprep.mubr.f32.mxu0 %v1115
      %2244 = vmatmul.mubr.f32.gmra.mrb[0].mxu0 %v1114
      %v2245 = vpop.f32.mrb[0].mxu0
      %v2246 = vadd.f32 %v2021, %v2245
      %v2247 = vpop.f32.mrb[0].mxu0
      %2248 = vmatprep.mubr.f32.mxu0 %v1124
      %2249 = vmatmul.mubr.f32.gmra.mrb[0].mxu0 %v1123
      %v2250 = vpop.f32.mrb[0].mxu0
      %v2251 = vadd.f32 %v2026, %v2250
      %v2252 = vpop.f32.mrb[0].mxu0
      %2253 = vmatprep.mubr.f32.mxu0 %v1133
      %2254 = vmatmul.mubr.f32.gmra.mrb[0].mxu0 %v1132
      %v2255 = vpop.f32.mrb[0].mxu0
      %v2256 = vadd.f32 %v2031, %v2255
      %v2257 = vpop.f32.mrb[0].mxu0
      %2258 = vmatprep.mubr.f32.mxu0 %v1142
      %2259 = vmatmul.mubr.f32.gmra.mrb[0].mxu0 %v1141
      %v2260 = vpop.f32.mrb[0].mxu0
      %v2261 = vadd.f32 %v2036, %v2260
      %v2262 = vpop.f32.mrb[0].mxu0
      %2263 = vmatprep.mubr.f32.mxu0 %v1151
      %2264 = vmatmul.mubr.f32.gmra.mrb[0].mxu0 %v1150
      %v2265 = vpop.f32.mrb[0].mxu0
      %v2266 = vadd.f32 %v2041, %v2265
      %v2267 = vpop.f32.mrb[0].mxu0
      %2268 = vmatprep.mubr.f32.mxu0 %v1160
      %2269 = vmatmul.mubr.f32.gmra.mrb[0].mxu0 %v1159
      %v2270 = vpop.f32.mrb[0].mxu0
      %v2271 = vadd.f32 %v2046, %v2270
      %v2272 = vpop.f32.mrb[0].mxu0
      %2273 = vmatprep.mubr.f32.mxu0 %v1169
      %2274 = vmatmul.mubr.f32.gmra.mrb[0].mxu0 %v1168
      %v2275 = vpop.f32.mrb[0].mxu0
      %v2276 = vadd.f32 %v2051, %v2275
      %v2277 = vpop.f32.mrb[0].mxu0
      %2278 = vmatprep.mubr.f32.mxu0 %v1178
      %2279 = vmatmul.mubr.f32.gmra.mrb[0].mxu0 %v1177
      %v2280 = vpop.f32.mrb[0].mxu0
      %v2281 = vadd.f32 %v2056, %v2280
      %v2282 = vpop.f32.mrb[0].mxu0
      %2283 = vmatprep.mubr.f32.mxu0 %v1187
      %2284 = vmatmul.mubr.f32.gmra.mrb[0].mxu0 %v1186
      %v2285 = vpop.f32.mrb[0].mxu0
      %v2286 = vadd.f32 %v2061, %v2285
      %v2287 = vpop.f32.mrb[0].mxu0
      %2288 = vmatprep.mubr.f32.mxu0 %v1196
      %2289 = vmatmul.mubr.f32.gmra.mrb[0].mxu0 %v1195
      %v2290 = vpop.f32.mrb[0].mxu0
      %v2291 = vadd.f32 %v2066, %v2290
      %v2292 = vpop.f32.mrb[0].mxu0
      %2293 = vmatprep.mubr.f32.mxu0 %v1205
      %2294 = vmatmul.mubr.f32.gmra.mrb[0].mxu0 %v1204
      %v2295 = vpop.f32.mrb[0].mxu0
      %v2296 = vadd.f32 %v2071, %v2295
      %v2297 = vpop.f32.mrb[0].mxu0
      %2298 = vmatprep.mubr.f32.mxu0 %v1214
      %2299 = vmatmul.mubr.f32.gmra.mrb[0].mxu0 %v1213
      %v2300 = vpop.f32.mrb[0].mxu0
      %v2301 = vadd.f32 %v2076, %v2300
      %v2302 = vpop.f32.mrb[0].mxu0
      %2303 = vmatprep.mubr.f32.mxu0 %v1223
      %2304 = vmatmul.mubr.f32.gmra.mrb[0].mxu0 %v1222
      %v2305 = vpop.f32.mrb[0].mxu0
      %v2306 = vadd.f32 %v2081, %v2305
      %v2307 = vpop.f32.mrb[0].mxu0
      %2308 = vmatprep.mubr.f32.mxu0 %v1232
      %2309 = vmatmul.mubr.f32.gmra.mrb[0].mxu0 %v1231
      %v2310 = vpop.f32.mrb[0].mxu0
      %v2311 = vadd.f32 %v2086, %v2310
      %v2312 = vpop.f32.mrb[0].mxu0
      %2313 = vmatprep.mubr.f32.mxu0 %v1241
      %2314 = vmatmul.mubr.f32.gmra.mrb[0].mxu0 %v1240
      %v2315 = vpop.f32.mrb[0].mxu0
      %v2316 = vadd.f32 %v2091, %v2315
      %v2317 = vpop.f32.mrb[0].mxu0
      %2318 = vmatprep.mubr.f32.mxu0 %v1250
      %2319 = vmatmul.mubr.f32.gmra.mrb[0].mxu0 %v1249
      %v2320 = vpop.f32.mrb[0].mxu0
      %v2321 = vadd.f32 %v2096, %v2320
      %v2322 = vpop.f32.mrb[0].mxu0
      %2323 = vmatprep.mubr.f32.mxu0 %v1259
      %2324 = vmatmul.mubr.f32.gmra.mrb[0].mxu0 %v1258
      %v2325 = vpop.f32.mrb[0].mxu0
      %v2326 = vadd.f32 %v2101, %v2325
      %v2327 = vpop.f32.mrb[0].mxu0
      %2328 = vmatprep.mubr.f32.mxu0 %v1268
      %2329 = vmatmul.mubr.f32.gmra.mrb[0].mxu0 %v1267
      %v2330 = vpop.f32.mrb[0].mxu0
      %v2331 = vadd.f32 %v2106, %v2330
      %v2332 = vpop.f32.mrb[0].mxu0
      %2333 = vmatprep.mubr.f32.mxu0 %v1277
      %2334 = vmatmul.mubr.f32.gmra.mrb[0].mxu0 %v1276
      %v2335 = vpop.f32.mrb[0].mxu0
      %v2336 = vadd.f32 %v2111, %v2335
      %v2337 = vpop.f32.mrb[0].mxu0
      %2338 = vmatprep.mubr.f32.mxu0 %v1286
      %2339 = vmatmul.mubr.f32.gmra.mrb[0].mxu0 %v1285
      %v2340 = vpop.f32.mrb[0].mxu0
      %v2341 = vadd.f32 %v2116, %v2340
      %v2342 = vpop.f32.mrb[0].mxu0
      %2343 = vmatprep.mubr.f32.mxu0 %v1295
      %2344 = vmatmul.mubr.f32.gmra.mrb[0].mxu0 %v1294
      %v2345 = vpop.f32.mrb[0].mxu0
      %v2346 = vadd.f32 %v2121, %v2345
      %v2347 = vpop.f32.mrb[0].mxu0
      %2348 = vmatprep.mubr.f32.mxu0 %v1304
      %2349 = vmatmul.mubr.f32.gmra.mrb[0].mxu0 %v1303
      %v2350 = vpop.f32.mrb[0].mxu0
      %v2351 = vadd.f32 %v2126, %v2350
      %v2352 = vpop.f32.mrb[0].mxu0
      %2353 = vmatprep.mubr.f32.mxu0 %v1313
      %2354 = vmatmul.mubr.f32.gmra.mrb[0].mxu0 %v1312
      %v2355 = vpop.f32.mrb[0].mxu0
      %v2356 = vadd.f32 %v2131, %v2355
      %v2357 = vpop.f32.mrb[0].mxu0
      %2358 = vdwg.mxu0
      %2359 = vmatprep.subr.mxu0 0.0
      %2360 = vmatpush1.msra.mxu0 %v1443
      %2361 = vmatprep.subr.mxu0 0.0
      %2362 = vmatpush1.msra.mxu0 %v1444
      %2363 = vmatprep.subr.mxu0 0.0
      %2364 = vmatpush1.msra.mxu0 %v1445
      %2365 = vmatprep.subr.mxu0 0.0
      %2366 = vmatpush1.msra.mxu0 %v1446
      %2367 = vmatprep.subr.mxu0 0.0
      %2368 = vmatpush1.msra.mxu0 %v1447
      %2369 = vmatprep.subr.mxu0 0.0
      %2370 = vmatpush1.msra.mxu0 %v1448
      %2371 = vmatprep.subr.mxu0 0.0
      %2372 = vmatpush1.msra.mxu0 %v1449
      %2373 = vmatprep.subr.mxu0 0.0
      %2374 = vmatpush1.msra.mxu0 %v1450
      %2375 = vmatprep.subr.mxu0 0.0
      %2376 = vmatpush1.msra.mxu0 %v1451
      %2377 = vmatprep.subr.mxu0 0.0
      %2378 = vmatpush1.msra.mxu0 %v1452
      %2379 = vmatprep.subr.mxu0 0.0
      %2380 = vmatpush1.msra.mxu0 %v1453
      %2381 = vmatprep.subr.mxu0 0.0
      %2382 = vmatpush1.msra.mxu0 %v1454
      %2383 = vmatprep.subr.mxu0 0.0
      %2384 = vmatpush1.msra.mxu0 %v1455
      %2385 = vmatprep.subr.mxu0 0.0
      %2386 = vmatpush1.msra.mxu0 %v1456
      %2387 = vmatprep.subr.mxu0 0.0
      %2388 = vmatpush1.msra.mxu0 %v1457
      %2389 = vmatprep.subr.mxu0 0.0
      %2390 = vmatpush1.msra.mxu0 %v1458
      %2391 = vmatprep.subr.mxu0 0.0
      %2392 = vmatpush1.msra.mxu0 0.0
      %2393 = vmatprep.subr.mxu0 0.0
      %2394 = vmatpush1.msra.mxu0 0.0
      %2395 = vmatprep.subr.mxu0 0.0
      %2396 = vmatpush1.msra.mxu0 0.0
      %2397 = vmatprep.subr.mxu0 0.0
      %2398 = vmatpush1.msra.mxu0 0.0
      %2399 = vmatprep.subr.mxu0 0.0
      %2400 = vmatpush1.msra.mxu0 0.0
      %2401 = vmatprep.subr.mxu0 0.0
      %2402 = vmatpush1.msra.mxu0 0.0
      %2403 = vmatprep.subr.mxu0 0.0
      %2404 = vmatpush1.msra.mxu0 0.0
      %2405 = vmatprep.subr.mxu0 0.0
      %2406 = vmatpush1.msra.mxu0 0.0
      %2407 = vmatprep.subr.mxu0 0.0
      %2408 = vmatpush1.msra.mxu0 0.0
      %2409 = vmatprep.subr.mxu0 0.0
      %2410 = vmatpush1.msra.mxu0 0.0
      %2411 = vmatprep.subr.mxu0 0.0
      %2412 = vmatpush1.msra.mxu0 0.0
      %2413 = vmatprep.subr.mxu0 0.0
      %2414 = vmatpush1.msra.mxu0 0.0
      %2415 = vmatprep.subr.mxu0 0.0
      %2416 = vmatpush1.msra.mxu0 0.0
      %2417 = vmatprep.subr.mxu0 0.0
      %2418 = vmatpush1.msra.mxu0 0.0
      %2419 = vmatprep.subr.mxu0 0.0
      %2420 = vmatpush1.msra.mxu0 0.0
      %2421 = vmatprep.subr.mxu0 0.0
      %2422 = vmatpush1.msra.mxu0 0.0
      %2423 = vmatprep.mubr.f32.mxu0 0.0
      %2424 = vmatmul.mubr.f32.gmra.mrb[0].mxu0 %v1035
      %v2425 = vpop.f32.mrb[0].mxu0
      %v2426 = vadd.f32 %v2201, %v2425
      %v2427 = vpop.f32.mrb[0].mxu0
      %2428 = vmatprep.mubr.f32.mxu0 0.0
      %2429 = vmatmul.mubr.f32.gmra.mrb[0].mxu0 %v1044
      %v2430 = vpop.f32.mrb[0].mxu0
      %v2431 = vadd.f32 %v2206, %v2430
      %v2432 = vpop.f32.mrb[0].mxu0
      %2433 = vmatprep.mubr.f32.mxu0 0.0
      %2434 = vmatmul.mubr.f32.gmra.mrb[0].mxu0 %v1053
      %v2435 = vpop.f32.mrb[0].mxu0
      %v2436 = vadd.f32 %v2211, %v2435
      %v2437 = vpop.f32.mrb[0].mxu0
      %2438 = vmatprep.mubr.f32.mxu0 0.0
      %2439 = vmatmul.mubr.f32.gmra.mrb[0].mxu0 %v1062
      %v2440 = vpop.f32.mrb[0].mxu0
      %v2441 = vadd.f32 %v2216, %v2440
      %v2442 = vpop.f32.mrb[0].mxu0
      %2443 = vmatprep.mubr.f32.mxu0 0.0
      %2444 = vmatmul.mubr.f32.gmra.mrb[0].mxu0 %v1071
      %v2445 = vpop.f32.mrb[0].mxu0
      %v2446 = vadd.f32 %v2221, %v2445
      %v2447 = vpop.f32.mrb[0].mxu0
      %2448 = vmatprep.mubr.f32.mxu0 0.0
      %2449 = vmatmul.mubr.f32.gmra.mrb[0].mxu0 %v1080
      %v2450 = vpop.f32.mrb[0].mxu0
      %v2451 = vadd.f32 %v2226, %v2450
      %v2452 = vpop.f32.mrb[0].mxu0
      %2453 = vmatprep.mubr.f32.mxu0 0.0
      %2454 = vmatmul.mubr.f32.gmra.mrb[0].mxu0 %v1089
      %v2455 = vpop.f32.mrb[0].mxu0
      %v2456 = vadd.f32 %v2231, %v2455
      %v2457 = vpop.f32.mrb[0].mxu0
      %2458 = vmatprep.mubr.f32.mxu0 0.0
      %2459 = vmatmul.mubr.f32.gmra.mrb[0].mxu0 %v1098
      %v2460 = vpop.f32.mrb[0].mxu0
      %v2461 = vadd.f32 %v2236, %v2460
      %v2462 = vpop.f32.mrb[0].mxu0
      %2463 = vmatprep.mubr.f32.mxu0 0.0
      %2464 = vmatmul.mubr.f32.gmra.mrb[0].mxu0 %v1107
      %v2465 = vpop.f32.mrb[0].mxu0
      %v2466 = vadd.f32 %v2241, %v2465
      %v2467 = vpop.f32.mrb[0].mxu0
      %2468 = vmatprep.mubr.f32.mxu0 0.0
      %2469 = vmatmul.mubr.f32.gmra.mrb[0].mxu0 %v1116
      %v2470 = vpop.f32.mrb[0].mxu0
      %v2471 = vadd.f32 %v2246, %v2470
      %v2472 = vpop.f32.mrb[0].mxu0
      %2473 = vmatprep.mubr.f32.mxu0 0.0
      %2474 = vmatmul.mubr.f32.gmra.mrb[0].mxu0 %v1125
      %v2475 = vpop.f32.mrb[0].mxu0
      %v2476 = vadd.f32 %v2251, %v2475
      %v2477 = vpop.f32.mrb[0].mxu0
      %2478 = vmatprep.mubr.f32.mxu0 0.0
      %2479 = vmatmul.mubr.f32.gmra.mrb[0].mxu0 %v1134
      %v2480 = vpop.f32.mrb[0].mxu0
      %v2481 = vadd.f32 %v2256, %v2480
      %v2482 = vpop.f32.mrb[0].mxu0
      %2483 = vmatprep.mubr.f32.mxu0 0.0
      %2484 = vmatmul.mubr.f32.gmra.mrb[0].mxu0 %v1143
      %v2485 = vpop.f32.mrb[0].mxu0
      %v2486 = vadd.f32 %v2261, %v2485
      %v2487 = vpop.f32.mrb[0].mxu0
      %2488 = vmatprep.mubr.f32.mxu0 0.0
      %2489 = vmatmul.mubr.f32.gmra.mrb[0].mxu0 %v1152
      %v2490 = vpop.f32.mrb[0].mxu0
      %v2491 = vadd.f32 %v2266, %v2490
      %v2492 = vpop.f32.mrb[0].mxu0
      %2493 = vmatprep.mubr.f32.mxu0 0.0
      %2494 = vmatmul.mubr.f32.gmra.mrb[0].mxu0 %v1161
      %v2495 = vpop.f32.mrb[0].mxu0
      %v2496 = vadd.f32 %v2271, %v2495
      %v2497 = vpop.f32.mrb[0].mxu0
      %2498 = vmatprep.mubr.f32.mxu0 0.0
      %2499 = vmatmul.mubr.f32.gmra.mrb[0].mxu0 %v1170
      %v2500 = vpop.f32.mrb[0].mxu0
      %v2501 = vadd.f32 %v2276, %v2500
      %v2502 = vpop.f32.mrb[0].mxu0
      %2503 = vmatprep.mubr.f32.mxu0 0.0
      %2504 = vmatmul.mubr.f32.gmra.mrb[0].mxu0 %v1179
      %v2505 = vpop.f32.mrb[0].mxu0
      %v2506 = vadd.f32 %v2281, %v2505
      %v2507 = vpop.f32.mrb[0].mxu0
      %2508 = vmatprep.mubr.f32.mxu0 0.0
      %2509 = vmatmul.mubr.f32.gmra.mrb[0].mxu0 %v1188
      %v2510 = vpop.f32.mrb[0].mxu0
      %v2511 = vadd.f32 %v2286, %v2510
      %v2512 = vpop.f32.mrb[0].mxu0
      %2513 = vmatprep.mubr.f32.mxu0 0.0
      %2514 = vmatmul.mubr.f32.gmra.mrb[0].mxu0 %v1197
      %v2515 = vpop.f32.mrb[0].mxu0
      %v2516 = vadd.f32 %v2291, %v2515
      %v2517 = vpop.f32.mrb[0].mxu0
      %2518 = vmatprep.mubr.f32.mxu0 0.0
      %2519 = vmatmul.mubr.f32.gmra.mrb[0].mxu0 %v1206
      %v2520 = vpop.f32.mrb[0].mxu0
      %v2521 = vadd.f32 %v2296, %v2520
      %v2522 = vpop.f32.mrb[0].mxu0
      %2523 = vmatprep.mubr.f32.mxu0 0.0
      %2524 = vmatmul.mubr.f32.gmra.mrb[0].mxu0 %v1215
      %v2525 = vpop.f32.mrb[0].mxu0
      %v2526 = vadd.f32 %v2301, %v2525
      %v2527 = vpop.f32.mrb[0].mxu0
      %2528 = vmatprep.mubr.f32.mxu0 0.0
      %2529 = vmatmul.mubr.f32.gmra.mrb[0].mxu0 %v1224
      %v2530 = vpop.f32.mrb[0].mxu0
      %v2531 = vadd.f32 %v2306, %v2530
      %v2532 = vpop.f32.mrb[0].mxu0
      %2533 = vmatprep.mubr.f32.mxu0 0.0
      %2534 = vmatmul.mubr.f32.gmra.mrb[0].mxu0 %v1233
      %v2535 = vpop.f32.mrb[0].mxu0
      %v2536 = vadd.f32 %v2311, %v2535
      %v2537 = vpop.f32.mrb[0].mxu0
      %2538 = vmatprep.mubr.f32.mxu0 0.0
      %2539 = vmatmul.mubr.f32.gmra.mrb[0].mxu0 %v1242
      %v2540 = vpop.f32.mrb[0].mxu0
      %v2541 = vadd.f32 %v2316, %v2540
      %v2542 = vpop.f32.mrb[0].mxu0
      %2543 = vmatprep.mubr.f32.mxu0 0.0
      %2544 = vmatmul.mubr.f32.gmra.mrb[0].mxu0 %v1251
      %v2545 = vpop.f32.mrb[0].mxu0
      %v2546 = vadd.f32 %v2321, %v2545
      %v2547 = vpop.f32.mrb[0].mxu0
      %2548 = vmatprep.mubr.f32.mxu0 0.0
      %2549 = vmatmul.mubr.f32.gmra.mrb[0].mxu0 %v1260
      %v2550 = vpop.f32.mrb[0].mxu0
      %v2551 = vadd.f32 %v2326, %v2550
      %v2552 = vpop.f32.mrb[0].mxu0
      %2553 = vmatprep.mubr.f32.mxu0 0.0
      %2554 = vmatmul.mubr.f32.gmra.mrb[0].mxu0 %v1269
      %v2555 = vpop.f32.mrb[0].mxu0
      %v2556 = vadd.f32 %v2331, %v2555
      %v2557 = vpop.f32.mrb[0].mxu0
      %2558 = vmatprep.mubr.f32.mxu0 0.0
      %2559 = vmatmul.mubr.f32.gmra.mrb[0].mxu0 %v1278
      %v2560 = vpop.f32.mrb[0].mxu0
      %v2561 = vadd.f32 %v2336, %v2560
      %v2562 = vpop.f32.mrb[0].mxu0
      %2563 = vmatprep.mubr.f32.mxu0 0.0
      %2564 = vmatmul.mubr.f32.gmra.mrb[0].mxu0 %v1287
      %v2565 = vpop.f32.mrb[0].mxu0
      %v2566 = vadd.f32 %v2341, %v2565
      %v2567 = vpop.f32.mrb[0].mxu0
      %2568 = vmatprep.mubr.f32.mxu0 0.0
      %2569 = vmatmul.mubr.f32.gmra.mrb[0].mxu0 %v1296
      %v2570 = vpop.f32.mrb[0].mxu0
      %v2571 = vadd.f32 %v2346, %v2570
      %v2572 = vpop.f32.mrb[0].mxu0
      %2573 = vmatprep.mubr.f32.mxu0 0.0
      %2574 = vmatmul.mubr.f32.gmra.mrb[0].mxu0 %v1305
      %v2575 = vpop.f32.mrb[0].mxu0
      %v2576 = vadd.f32 %v2351, %v2575
      %v2577 = vpop.f32.mrb[0].mxu0
      %2578 = vmatprep.mubr.f32.mxu0 0.0
      %2579 = vmatmul.mubr.f32.gmra.mrb[0].mxu0 %v1314
      %v2580 = vpop.f32.mrb[0].mxu0
      %v2581 = vadd.f32 %v2356, %v2580
      %v2582 = vpop.f32.mrb[0].mxu0
      %2583 = vdwg.mxu0
      %2584 = vst [vmem:[%s231] sm:$0xff] %v2426
      %2585 = vst [vmem:[%s231 + $0x8] sm:$0xff] %v2431
      %2586 = vst [vmem:[%s231 + $0x10] sm:$0xff] %v2436
      %2587 = vst [vmem:[%s231 + $0x18] sm:$0xff] %v2441
      %2588 = vst [vmem:[%s231 + $0x20] sm:$0xff] %v2446
      %2589 = vst [vmem:[%s231 + $0x28] sm:$0xff] %v2451
      %2590 = vst [vmem:[%s231 + $0x30] sm:$0xff] %v2456
      %2591 = vst [vmem:[%s231 + $0x38] sm:$0xff] %v2461
      %2592 = vst [vmem:[%s231 + $0x40] sm:$0xff] %v2466
      %2593 = vst [vmem:[%s231 + $0x48] sm:$0xff] %v2471
      %2594 = vst [vmem:[%s231 + $0x50] sm:$0xff] %v2476
      %2595 = vst [vmem:[%s231 + $0x58] sm:$0xff] %v2481
      %2596 = vst [vmem:[%s231 + $0x60] sm:$0xff] %v2486
      %2597 = vst [vmem:[%s231 + $0x68] sm:$0xff] %v2491
      %2598 = vst [vmem:[%s231 + $0x70] sm:$0xff] %v2496
      %2599 = vst [vmem:[%s231 + $0x78] sm:$0xff] %v2501
      %2600 = vst [vmem:[%s231 + $0x80] sm:$0xff] %v2506
      %2601 = vst [vmem:[%s231 + $0x88] sm:$0xff] %v2511
      %2602 = vst [vmem:[%s231 + $0x90] sm:$0xff] %v2516
      %2603 = vst [vmem:[%s231 + $0x98] sm:$0xff] %v2521
      %2604 = vst [vmem:[%s231 + $0xa0] sm:$0xff] %v2526
      %2605 = vst [vmem:[%s231 + $0xa8] sm:$0xff] %v2531
      %2606 = vst [vmem:[%s231 + $0xb0] sm:$0xff] %v2536
      %2607 = vst [vmem:[%s231 + $0xb8] sm:$0xff] %v2541
      %2608 = vst [vmem:[%s231 + $0xc0] sm:$0xff] %v2546
      %2609 = vst [vmem:[%s231 + $0xc8] sm:$0xff] %v2551
      %2610 = vst [vmem:[%s231 + $0xd0] sm:$0xff] %v2556
      %2611 = vst [vmem:[%s231 + $0xd8] sm:$0xff] %v2561
      %2612 = vst [vmem:[%s231 + $0xe0] sm:$0xff] %v2566
      %2613 = vst [vmem:[%s231 + $0xe8] sm:$0xff] %v2571
      %2614 = vst [vmem:[%s231 + $0xf0] sm:$0xff] %v2576
      %2615 = vst [vmem:[%s231 + $0xf8] sm:$0xff] %v2581
      %v2616 = vadd.f32 %v2426, %v2431
      %v2617 = vadd.f32 %v2616, %v2436
      %v2618 = vadd.f32 %v2617, %v2441
      %v2619 = vadd.f32 %v2618, %v2446
      %v2620 = vadd.f32 %v2619, %v2451
      %v2621 = vadd.f32 %v2620, %v2456
      %v2622 = vadd.f32 %v2621, %v2461
      %v2623 = vadd.f32 %v2622, %v2466
      %v2624 = vadd.f32 %v2623, %v2471
      %v2625 = vadd.f32 %v2624, %v2476
      %v2626 = vadd.f32 %v2625, %v2481
      %v2627 = vadd.f32 %v2626, %v2486
      %v2628 = vadd.f32 %v2627, %v2491
      %v2629 = vadd.f32 %v2628, %v2496
      %v2630 = vadd.f32 %v2629, %v2501
      %v2631 = vadd.f32 %v2630, %v2506
      %v2632 = vadd.f32 %v2631, %v2511
      %v2633 = vadd.f32 %v2632, %v2516
      %v2634 = vadd.f32 %v2633, %v2521
      %v2635 = vadd.f32 %v2634, %v2526
      %v2636 = vadd.f32 %v2635, %v2531
      %v2637 = vadd.f32 %v2636, %v2536
      %v2638 = vadd.f32 %v2637, %v2541
      %v2639 = vadd.f32 %v2638, %v2546
      %v2640 = vadd.f32 %v2639, %v2551
      %v2641 = vadd.f32 %v2640, %v2556
      %v2642 = vadd.f32 %v2641, %v2561
      %v2643 = vadd.f32 %v2642, %v2566
      %v2644 = vadd.f32 %v2643, %v2571
      %v2645 = vadd.f32 %v2644, %v2576
      %v2646 = vadd.f32 %v2645, %v2581
      %v2647 = vrot.slane %v2646, 4
      %v2648 = vadd.f32 %v2646, %v2647
      %v2649 = vrot.slane %v2648, 2
      %v2650 = vadd.f32 %v2648, %v2649
      %v2651 = vrot.slane %v2650, 1
      %v2652 = vadd.f32 %v2650, %v2651
      %v2653 = vmul.f32 %v2426, %v2426
      %v2654 = vmul.f32 %v2431, %v2431
      %v2655 = vmul.f32 %v2436, %v2436
      %v2656 = vmul.f32 %v2441, %v2441
      %v2657 = vmul.f32 %v2446, %v2446
      %v2658 = vmul.f32 %v2451, %v2451
      %v2659 = vmul.f32 %v2456, %v2456
      %v2660 = vmul.f32 %v2461, %v2461
      %v2661 = vmul.f32 %v2466, %v2466
      %v2662 = vmul.f32 %v2471, %v2471
      %v2663 = vmul.f32 %v2476, %v2476
      %v2664 = vmul.f32 %v2481, %v2481
      %v2665 = vmul.f32 %v2486, %v2486
      %v2666 = vmul.f32 %v2491, %v2491
      %v2667 = vmul.f32 %v2496, %v2496
      %v2668 = vmul.f32 %v2501, %v2501
      %v2669 = vmul.f32 %v2506, %v2506
      %v2670 = vmul.f32 %v2511, %v2511
      %v2671 = vmul.f32 %v2516, %v2516
      %v2672 = vmul.f32 %v2521, %v2521
      %v2673 = vmul.f32 %v2526, %v2526
      %v2674 = vmul.f32 %v2531, %v2531
      %v2675 = vmul.f32 %v2536, %v2536
      %v2676 = vmul.f32 %v2541, %v2541
      %v2677 = vmul.f32 %v2546, %v2546
      %v2678 = vmul.f32 %v2551, %v2551
      %v2679 = vmul.f32 %v2556, %v2556
      %v2680 = vmul.f32 %v2561, %v2561
      %v2681 = vmul.f32 %v2566, %v2566
      %v2682 = vmul.f32 %v2571, %v2571
      %v2683 = vmul.f32 %v2576, %v2576
      %v2684 = vmul.f32 %v2581, %v2581
      %v2685 = vadd.f32 %v2653, %v2654
      %v2686 = vadd.f32 %v2685, %v2655
      %v2687 = vadd.f32 %v2686, %v2656
      %v2688 = vadd.f32 %v2687, %v2657
      %v2689 = vadd.f32 %v2688, %v2658
      %v2690 = vadd.f32 %v2689, %v2659
      %v2691 = vadd.f32 %v2690, %v2660
      %v2692 = vadd.f32 %v2691, %v2661
      %v2693 = vadd.f32 %v2692, %v2662
      %v2694 = vadd.f32 %v2693, %v2663
      %v2695 = vadd.f32 %v2694, %v2664
      %v2696 = vadd.f32 %v2695, %v2665
      %v2697 = vadd.f32 %v2696, %v2666
      %v2698 = vadd.f32 %v2697, %v2667
      %v2699 = vadd.f32 %v2698, %v2668
      %v2700 = vadd.f32 %v2699, %v2669
      %v2701 = vadd.f32 %v2700, %v2670
      %v2702 = vadd.f32 %v2701, %v2671
      %v2703 = vadd.f32 %v2702, %v2672
      %v2704 = vadd.f32 %v2703, %v2673
      %v2705 = vadd.f32 %v2704, %v2674
      %v2706 = vadd.f32 %v2705, %v2675
      %v2707 = vadd.f32 %v2706, %v2676
      %v2708 = vadd.f32 %v2707, %v2677
      %v2709 = vadd.f32 %v2708, %v2678
      %v2710 = vadd.f32 %v2709, %v2679
      %v2711 = vadd.f32 %v2710, %v2680
      %v2712 = vadd.f32 %v2711, %v2681
      %v2713 = vadd.f32 %v2712, %v2682
      %v2714 = vadd.f32 %v2713, %v2683
      %v2715 = vadd.f32 %v2714, %v2684
      %v2716 = vrot.slane %v2715, 4
      %v2717 = vadd.f32 %v2715, %v2716
      %v2718 = vrot.slane %v2717, 2
      %v2719 = vadd.f32 %v2717, %v2718
      %v2720 = vrot.slane %v2719, 1
      %v2721 = vadd.f32 %v2719, %v2720
      %vm2722 = vcmask 1040384
      %v2723 = vsel %vm2722, %v2652, %v2721
      %2724 = vst [vmem:[%s235] sm:$0x3] %v2723
      %p2725 = scmp.lt.s32.totalorder %s17, 1
      %s2726 = scalar_select %p2725, %s17, 1
      %s2727 = smul.addr %s2726, 32
      %s2728 = smul.addr %s2727, 8
      %s2729 = scalar_lea.vmem %s4, %s2728
      %p2730 = scmp.lt.s32.totalorder %s17, 1
      %s2731 = scalar_select %p2730, %s17, 1
      %s2732 = smul.addr %s2731, 2
      %s2733 = scalar_lea.vmem %s5, %s2732
      // Predicated region
      $region37: #{bottleneck_forward.5} parent=35 // pred_check
        %p2734 = pneg %p124
      $region38: #{bottleneck_forward.5} parent=35 // pred_check_branch
        %2736 = sbr.rel (%p2734) target = $region40
      $region39: #{bottleneck_forward.5} parent=35 // pred_region
        _
      $region40: #{bottleneck_forward.5} parent=35 // pred_fallthru
        _
      // Predicated region
      $region41: #{bottleneck_forward.5} parent=35 // pred_check
        %p2737 = pneg %p150
      $region42: #{bottleneck_forward.5} parent=35 // pred_check_branch
        %2739 = sbr.rel (%p2737) target = $region44
      $region43: #{bottleneck_forward.5} parent=35 // pred_region
        _
      $region44: #{bottleneck_forward.5} parent=35 // pred_fallthru
        _
    $region36: #{bottleneck_forward.5} parent=5 // pred_fallthru
      _
    %p2740 = scmp.le.s32.totalorder 2, %s12
    // Predicated region
    $region45: #{bottleneck_forward.5} parent=5 // pred_check
      %p2741 = pneg %p2740
    $region46: #{bottleneck_forward.5} parent=5 // pred_check_branch
      %2743 = sbr.rel (%p2741) target = $region48
    $region47: #{bottleneck_forward.5} parent=5 // pred_region
      %s2744 = ssub.s32 %s12, 2
      // Predicated region
      $region49: #{bottleneck_forward.5} parent=47 // pred_check
        %p2745 = pneg %p130
      $region50: #{bottleneck_forward.5} parent=47 // pred_check_branch
        %2747 = sbr.rel (%p2745) target = $region52
      $region51: #{bottleneck_forward.5} parent=47 // pred_region
        %p2748 = scmp.lt.s32.totalorder %s18, 1
        %s2749 = scalar_select %p2748, %s18, 1
        %s2750 = smul.addr %s2749, 32
        %s2751 = smul.addr %s2750, 8
        %s2752 = scalar_lea.vmem %s4, %s2751
      $region52: #{bottleneck_forward.5} parent=47 // pred_fallthru
        _
      // Predicated region
      $region53: #{bottleneck_forward.5} parent=47 // pred_check
        %p2753 = pneg %p156
      $region54: #{bottleneck_forward.5} parent=47 // pred_check_branch
        %2755 = sbr.rel (%p2753) target = $region56
      $region55: #{bottleneck_forward.5} parent=47 // pred_region
        %p2756 = scmp.lt.s32.totalorder %s18, 1
        %s2757 = scalar_select %p2756, %s18, 1
        %s2758 = smul.addr %s2757, 2
        %s2759 = scalar_lea.vmem %s5, %s2758
      $region56: #{bottleneck_forward.5} parent=47 // pred_fallthru
        _
    $region48: #{bottleneck_forward.5} parent=5 // pred_fallthru
      _
  $region6: #{bottleneck_forward.5} parent=0 // loop_footer
    %s16 = sadd.s32 1, %s12
  $region7: #{bottleneck_forward.5} parent=0 // loop_footer_branch
    %11 = sbr.rel target = $region3
  $region8: #{bottleneck_forward.5} parent=0 // loop_exit
    _

</llo_original>
